<compile_context>
chip_gen: v7x
topology: tpu7x:2x2x1
jax: 0.10.0
libtpu: 0.0.40
codegen_flags: <defaults>
</compile_context>

<pallas_src>
import math

import jax
import jax.numpy as jnp
from jax import lax
from jax.experimental import pallas as pl
from jax.experimental.pallas import tpu as pltpu


# ----------------------------------------------------------------------------
# Fused encoder-stack kernel: one batch-block per grid point, all layers inside.
# ----------------------------------------------------------------------------
def _encoder_stack_kernel(x_ref, expand_ref, collapse_ref, hmask_ref, smask_ref,
                          wq_ref, wk_ref, wv_ref, wo_ref, bo_ref,
                          g1_ref, be1_ref, w1_ref, b1_ref, w2_ref, b2_ref,
                          g2_ref, be2_ref, o_ref):
    f32, bf16 = jnp.float32, jnp.bfloat16
    Bblk, S, E = x_ref.shape
    M = Bblk * S
    n_layers = wq_ref.shape[0]

    # Constant head-structure matrices (VMEM resident, fetched once).
    expand = expand_ref[...]        # (H*M, M) bf16: expand[h*M+i, i] = 1
    collapse = collapse_ref[...]    # (M, H*M) bf16: collapse[i, h*M+i] = 1
    hmask = hmask_ref[...]          # (H*M, E) bf16: 1 where feature e belongs to head row//M
    smask = smask_ref[...]          # (H*M, M) f32 : 0 same sequence, -1e30 cross-sequence

    # Fold the batch block into the matmul M dimension.
    h = x_ref[...].reshape(M, E).astype(f32)

    # Short, static layer loop: all per-layer weights already live in VMEM.
    for li in range(n_layers):
        xb = h.astype(bf16)

        # ---------------- multi-head self attention (lane dense) ----------------
        # Per-head (Dh,Dh) torch linears (shared across heads, bias=False) expanded
        # to block-diagonal (E,E) bf16 weights; 1/sqrt(Dh) folded into wq.
        q = jnp.dot(xb, wq_ref[li], preferred_element_type=f32)          # (M, E)
        k = jnp.dot(xb, wk_ref[li], preferred_element_type=f32)          # (M, E)
        v = jnp.dot(xb, wv_ref[li], preferred_element_type=f32)          # (M, E)

        # q_exp[(h,i), e] = q[i, e] if feature e belongs to head h else 0.
        q_exp = jnp.dot(expand, q.astype(bf16), preferred_element_type=f32)
        q_exp = q_exp.astype(bf16) * hmask                                # (H*M, E)

        # scores[(h,i), j] = <q_h[i], k_h[j]> ; cross-sequence pairs masked to -inf.
        scores = lax.dot_general(
            q_exp, k.astype(bf16),
            dimension_numbers=(((1,), (1,)), ((), ())),
            preferred_element_type=f32)                                   # (H*M, M)
        scores = scores + smask

        m = jnp.max(scores, axis=-1, keepdims=True)
        p = jnp.exp(scores - m)
        p = p * pl.reciprocal(jnp.sum(p, axis=-1, keepdims=True), approx=True)

        # ctx[(h,i), e] = sum_j p[(h,i), j] * v[j, e], masked to head h's features.
        ctx = jnp.dot(p.astype(bf16), v.astype(bf16), preferred_element_type=f32)
        ctx = ctx.astype(bf16) * hmask                                    # (H*M, E)
        # attn[i, e] = ctx[(head(e), i), e]  ->  concat-of-heads, lane dense (M, E).
        attn = jnp.dot(collapse, ctx, preferred_element_type=f32)

        # Output projection + residual + LayerNorm1 (eps=1e-5, biased variance).
        attn = (jnp.dot(attn.astype(bf16), wo_ref[li], preferred_element_type=f32)
                + bo_ref[li])
        res1 = attn + h
        mu1 = jnp.mean(res1, axis=-1, keepdims=True)
        var1 = jnp.mean((res1 - mu1) ** 2, axis=-1, keepdims=True)
        n1 = (res1 - mu1) * lax.rsqrt(var1 + 1e-5) * g1_ref[li] + be1_ref[li]
        # TODO(synk): nn.Dropout(0.2) is identity in eval mode; training-mode RNG dropout not implemented.

        # Feed forward (E -> 4E -> E, ReLU) + residual + LayerNorm2.
        hid = (jnp.dot(n1.astype(bf16), w1_ref[li], preferred_element_type=f32)
               + b1_ref[li])
        hid = jnp.maximum(hid, 0.0)
        ff = (jnp.dot(hid.astype(bf16), w2_ref[li], preferred_element_type=f32)
              + b2_ref[li])
        res2 = ff + n1
        mu2 = jnp.mean(res2, axis=-1, keepdims=True)
        var2 = jnp.mean((res2 - mu2) ** 2, axis=-1, keepdims=True)
        h = (res2 - mu2) * lax.rsqrt(var2 + 1e-5) * g2_ref[li] + be2_ref[li]

    o_ref[...] = h.reshape(Bblk, S, E).astype(o_ref.dtype)


# ----------------------------------------------------------------------------
# Wrapper: one pallas_call for the whole stack of TransformerBlocks.
# ----------------------------------------------------------------------------
def transformer_encoder_stack(x, params, *, n_heads, batch_block=None):
    B, S, E = x.shape
    L, _, FF = params["w1"].shape
    assert E % n_heads == 0
    head_dim = E // n_heads

    # Pick a batch block so the folded M dimension approaches ~128 MXU rows.
    if batch_block is None:
        batch_block = max(1, min(B, 128 // S if S < 128 else 1))
    while B % batch_block:
        batch_block -= 1
    Bblk = batch_block
    M = Bblk * S
    HM = n_heads * M

    # Constant head-structure / sequence-mask matrices (tiny, fetched once).
    row = jnp.arange(HM)
    col = jnp.arange(M)
    expand = (row[:, None] % M == col[None, :]).astype(jnp.bfloat16)            # (HM, M)
    collapse = expand.T                                                           # (M, HM)
    hmask = (row[:, None] // M ==
             jnp.arange(E)[None, :] // head_dim).astype(jnp.bfloat16)            # (HM, E)
    q_seq = (row % M) // S
    k_seq = col // S
    smask = jnp.where(q_seq[:, None] == k_seq[None, :],
                      0.0, -1e30).astype(jnp.float32)                            # (HM, M)

    def const(shape):
        nd = len(shape)
        return pl.BlockSpec(shape, lambda b, _nd=nd: (0,) * _nd)

    return pl.pallas_call(
        _encoder_stack_kernel,
        out_shape=jax.ShapeDtypeStruct((B, S, E), jnp.float32),
        grid_spec=pltpu.PrefetchScalarGridSpec(
            num_scalar_prefetch=0,
            grid=(B // Bblk,),
            in_specs=[
                pl.BlockSpec((Bblk, S, E), lambda b: (b, 0, 0)),   # embedded input
                const((HM, M)), const((M, HM)),                    # expand, collapse
                const((HM, E)), const((HM, M)),                    # head mask, seq mask
                const((L, E, E)), const((L, E, E)), const((L, E, E)),   # wq, wk, wv
                const((L, E, E)), const((L, 1, E)),                      # wo, bo
                const((L, 1, E)), const((L, 1, E)),                      # ln1 gamma, beta
                const((L, E, FF)), const((L, 1, FF)),                    # w1, b1
                const((L, FF, E)), const((L, 1, E)),                     # w2, b2
                const((L, 1, E)), const((L, 1, E)),                      # ln2 gamma, beta
            ],
            out_specs=pl.BlockSpec((Bblk, S, E), lambda b: (b, 0, 0)),
        ),
        compiler_params=pltpu.CompilerParams(
            dimension_semantics=("parallel",),
            vmem_limit_bytes=32 * 1024 * 1024,
        ),
    )(x, expand, collapse, hmask, smask,
      params["wq"], params["wk"], params["wv"], params["wo"], params["bo"],
      params["g1"], params["be1"], params["w1"], params["b1"],
      params["w2"], params["b2"], params["g2"], params["be2"])


# ----------------------------------------------------------------------------
# Parameter init (deterministic, synthetic) + embedding glue.
# ----------------------------------------------------------------------------
def sinusoidal_pe(seq_len, embed_dim):
    pos = jnp.arange(seq_len, dtype=jnp.float32)[:, None]
    dims = jnp.arange(0, embed_dim, 2, dtype=jnp.float32)
    inv = jnp.power(10000.0, -dims / embed_dim)[None, :]
    ang = pos * inv
    pe = jnp.zeros((seq_len, embed_dim), jnp.float32)
    pe = pe.at[:, 0::2].set(jnp.sin(ang))
    pe = pe.at[:, 1::2].set(jnp.cos(ang))
    return pe


def init_params(key, vocab_size, seq_len, embed_dim, num_layers,
                expansion_factor, n_heads):
    head_dim = embed_dim // n_heads
    ff = expansion_factor * embed_dim
    keys = jax.random.split(key, 1 + num_layers)
    tok_emb = jax.random.normal(keys[0], (vocab_size, embed_dim), jnp.float32) * 0.02

    def blockdiag_proj(k, fold_scale=1.0):
        # torch: nn.Linear(head_dim, head_dim, bias=False) shared across all heads.
        w = jax.random.normal(k, (head_dim, head_dim), jnp.float32) / math.sqrt(head_dim)
        return jax.scipy.linalg.block_diag(*([w.T] * n_heads)) * fold_scale  # (E, E)

    names = ("wq", "wk", "wv", "wo", "bo", "g1", "be1",
             "w1", "b1", "w2", "b2", "g2", "be2")
    per = {n: [] for n in names}
    attn_scale = 1.0 / math.sqrt(head_dim)      # folded into wq
    for li in range(num_layers):
        ks = jax.random.split(keys[1 + li], 8)
        per["wq"].append(blockdiag_proj(ks[0], attn_scale))
        per["wk"].append(blockdiag_proj(ks[1]))
        per["wv"].append(blockdiag_proj(ks[2]))
        per["wo"].append(jax.random.normal(ks[3], (embed_dim, embed_dim), jnp.float32)
                         / math.sqrt(embed_dim))
        per["bo"].append(jax.random.normal(ks[4], (1, embed_dim), jnp.float32) * 0.01)
        per["g1"].append(jnp.ones((1, embed_dim), jnp.float32))
        per["be1"].append(jnp.zeros((1, embed_dim), jnp.float32))
        per["w1"].append(jax.random.normal(ks[5], (embed_dim, ff), jnp.float32)
                         / math.sqrt(embed_dim))
        per["b1"].append(jax.random.normal(ks[6], (1, ff), jnp.float32) * 0.01)
        per["w2"].append(jax.random.normal(ks[7], (ff, embed_dim), jnp.float32)
                         / math.sqrt(ff))
        per["b2"].append(jnp.zeros((1, embed_dim), jnp.float32))
        per["g2"].append(jnp.ones((1, embed_dim), jnp.float32))
        per["be2"].append(jnp.zeros((1, embed_dim), jnp.float32))

    params = {n: jnp.stack(v) for n, v in per.items()}
    # MXU operands in bf16 (halves weight VMEM footprint); biases & LN params stay f32.
    for n in ("wq", "wk", "wv", "wo", "w1", "w2"):
        params[n] = params[n].astype(jnp.bfloat16)
    pe = sinusoidal_pe(seq_len, embed_dim)
    return tok_emb, pe, params


def transformer_encoder(tokens, tok_emb, pe, params, *, n_heads):
    # TransformerEmbedding: token embedding * sqrt(E) + sinusoidal PE (plain-JAX glue).
    E = tok_emb.shape[1]
    out = tok_emb[tokens] * math.sqrt(E) + pe[None, :tokens.shape[1], :]
    out = out.astype(jnp.float32)
    # Entire stack of TransformerBlocks runs in one fused Pallas kernel.
    return transformer_encoder_stack(out, params, n_heads=n_heads)


# ----------------------------------------------------------------------------
if __name__ == "__main__":
    B, SEQ_LEN, VOCAB, EMBED = 2, 8, 32, 128
    NUM_LAYERS, EXPANSION, N_HEADS = 2, 4, 8

    key = jax.random.PRNGKey(0)
    k_par, k_tok = jax.random.split(key)
    tok_emb, pe, params = init_params(k_par, VOCAB, SEQ_LEN, EMBED,
                                      NUM_LAYERS, EXPANSION, N_HEADS)
    tokens = jax.random.randint(k_tok, (B, SEQ_LEN), 0, VOCAB, dtype=jnp.int32)

    out = transformer_encoder(tokens, tok_emb, pe, params, n_heads=N_HEADS)
    out = jax.block_until_ready(out)
    assert out.shape == (B, SEQ_LEN, EMBED) and bool(jnp.all(jnp.isfinite(out)))
    print("KERNEL_OK")
</pallas_src>

<mosaic_0001>
module attributes {stable_mosaic.version = 11 : i64} {
  func.func @_encoder_stack_kernel(%arg0: i32, %arg1: memref<2x8x128xf32, #tpu.memory_space<vmem>>, %arg2: memref<128x16xbf16, #tpu.memory_space<vmem>>, %arg3: memref<16x128xbf16, #tpu.memory_space<vmem>>, %arg4: memref<128x128xbf16, #tpu.memory_space<vmem>>, %arg5: memref<128x16xf32, #tpu.memory_space<vmem>>, %arg6: memref<2x128x128xbf16, #tpu.memory_space<vmem>>, %arg7: memref<2x128x128xbf16, #tpu.memory_space<vmem>>, %arg8: memref<2x128x128xbf16, #tpu.memory_space<vmem>>, %arg9: memref<2x128x128xbf16, #tpu.memory_space<vmem>>, %arg10: memref<2x1x128xf32, #tpu.memory_space<vmem>>, %arg11: memref<2x1x128xf32, #tpu.memory_space<vmem>>, %arg12: memref<2x1x128xf32, #tpu.memory_space<vmem>>, %arg13: memref<2x128x512xbf16, #tpu.memory_space<vmem>>, %arg14: memref<2x1x512xf32, #tpu.memory_space<vmem>>, %arg15: memref<2x512x128xbf16, #tpu.memory_space<vmem>>, %arg16: memref<2x1x128xf32, #tpu.memory_space<vmem>>, %arg17: memref<2x1x128xf32, #tpu.memory_space<vmem>>, %arg18: memref<2x1x128xf32, #tpu.memory_space<vmem>>, %arg19: memref<2x8x128xf32, #tpu.memory_space<vmem>>) attributes {dimension_semantics = [#tpu.dimension_semantics<parallel>], iteration_bounds = array<i64: 1>, scalar_prefetch = 0 : i64, scratch_operands = 0 : i64, tpu.core_type = #tpu.core_type<tc>, window_params = [{transform_indices = @transform_0, window_bounds = array<i64: 2, 8, 128>}, {pipeline_mode = #tpu.pipeline_mode<synchronous>, transform_indices = @transform_1, window_bounds = array<i64: 128, 16>}, {pipeline_mode = #tpu.pipeline_mode<synchronous>, transform_indices = @transform_2, window_bounds = array<i64: 16, 128>}, {pipeline_mode = #tpu.pipeline_mode<synchronous>, transform_indices = @transform_3, window_bounds = array<i64: 128, 128>}, {pipeline_mode = #tpu.pipeline_mode<synchronous>, transform_indices = @transform_4, window_bounds = array<i64: 128, 16>}, {pipeline_mode = #tpu.pipeline_mode<synchronous>, transform_indices = @transform_5, window_bounds = array<i64: 2, 128, 128>}, {pipeline_mode = #tpu.pipeline_mode<synchronous>, transform_indices = @transform_6, window_bounds = array<i64: 2, 128, 128>}, {pipeline_mode = #tpu.pipeline_mode<synchronous>, transform_indices = @transform_7, window_bounds = array<i64: 2, 128, 128>}, {pipeline_mode = #tpu.pipeline_mode<synchronous>, transform_indices = @transform_8, window_bounds = array<i64: 2, 128, 128>}, {pipeline_mode = #tpu.pipeline_mode<synchronous>, transform_indices = @transform_9, window_bounds = array<i64: 2, 1, 128>}, {pipeline_mode = #tpu.pipeline_mode<synchronous>, transform_indices = @transform_10, window_bounds = array<i64: 2, 1, 128>}, {pipeline_mode = #tpu.pipeline_mode<synchronous>, transform_indices = @transform_11, window_bounds = array<i64: 2, 1, 128>}, {pipeline_mode = #tpu.pipeline_mode<synchronous>, transform_indices = @transform_12, window_bounds = array<i64: 2, 128, 512>}, {pipeline_mode = #tpu.pipeline_mode<synchronous>, transform_indices = @transform_13, window_bounds = array<i64: 2, 1, 512>}, {pipeline_mode = #tpu.pipeline_mode<synchronous>, transform_indices = @transform_14, window_bounds = array<i64: 2, 512, 128>}, {pipeline_mode = #tpu.pipeline_mode<synchronous>, transform_indices = @transform_15, window_bounds = array<i64: 2, 1, 128>}, {pipeline_mode = #tpu.pipeline_mode<synchronous>, transform_indices = @transform_16, window_bounds = array<i64: 2, 1, 128>}, {pipeline_mode = #tpu.pipeline_mode<synchronous>, transform_indices = @transform_17, window_bounds = array<i64: 2, 1, 128>}, {transform_indices = @transform_18, window_bounds = array<i64: 2, 8, 128>}]} {
    %c0 = arith.constant 0 : index
    %c0_0 = arith.constant 0 : index
    %0 = vector.load %arg2[%c0, %c0_0] : memref<128x16xbf16, #tpu.memory_space<vmem>>, vector<128x16xbf16>
    %c0_1 = arith.constant 0 : index
    %c0_2 = arith.constant 0 : index
    %1 = vector.load %arg3[%c0_1, %c0_2] : memref<16x128xbf16, #tpu.memory_space<vmem>>, vector<16x128xbf16>
    %c0_3 = arith.constant 0 : index
    %c0_4 = arith.constant 0 : index
    %2 = vector.load %arg4[%c0_3, %c0_4] : memref<128x128xbf16, #tpu.memory_space<vmem>>, vector<128x128xbf16>
    %c0_5 = arith.constant 0 : index
    %c0_6 = arith.constant 0 : index
    %3 = vector.load %arg5[%c0_5, %c0_6] : memref<128x16xf32, #tpu.memory_space<vmem>>, vector<128x16xf32>
    %c0_7 = arith.constant 0 : index
    %c0_8 = arith.constant 0 : index
    %c0_9 = arith.constant 0 : index
    %4 = vector.load %arg1[%c0_7, %c0_8, %c0_9] : memref<2x8x128xf32, #tpu.memory_space<vmem>>, vector<2x8x128xf32>
    %5 = vector.shape_cast %4 : vector<2x8x128xf32> to vector<16x128xf32>
    %6 = arith.truncf %5 : vector<16x128xf32> to vector<16x128xbf16>
    %c0_10 = arith.constant 0 : index
    %c0_11 = arith.constant 0 : index
    %c0_12 = arith.constant 0 : index
    %7 = vector.load %arg6[%c0_10, %c0_11, %c0_12] : memref<2x128x128xbf16, #tpu.memory_space<vmem>>, vector<1x128x128xbf16>
    %8 = vector.shape_cast %7 : vector<1x128x128xbf16> to vector<128x128xbf16>
    %cst = arith.constant dense<0.000000e+00> : vector<16x128xf32>
    %9 = tpu.matmul %6, %8, %cst {dimension_numbers = #tpu.dot_dimension_numbers<[1], [0], [0], [1], [0, 0, 1, 1], [], []>} : vector<16x128xbf16>, vector<128x128xbf16>, vector<16x128xf32> -> vector<16x128xf32>
    %c0_13 = arith.constant 0 : index
    %c0_14 = arith.constant 0 : index
    %c0_15 = arith.constant 0 : index
    %10 = vector.load %arg7[%c0_13, %c0_14, %c0_15] : memref<2x128x128xbf16, #tpu.memory_space<vmem>>, vector<1x128x128xbf16>
    %11 = vector.shape_cast %10 : vector<1x128x128xbf16> to vector<128x128xbf16>
    %cst_16 = arith.constant dense<0.000000e+00> : vector<16x128xf32>
    %12 = tpu.matmul %6, %11, %cst_16 {dimension_numbers = #tpu.dot_dimension_numbers<[1], [0], [0], [1], [0, 0, 1, 1], [], []>} : vector<16x128xbf16>, vector<128x128xbf16>, vector<16x128xf32> -> vector<16x128xf32>
    %c0_17 = arith.constant 0 : index
    %c0_18 = arith.constant 0 : index
    %c0_19 = arith.constant 0 : index
    %13 = vector.load %arg8[%c0_17, %c0_18, %c0_19] : memref<2x128x128xbf16, #tpu.memory_space<vmem>>, vector<1x128x128xbf16>
    %14 = vector.shape_cast %13 : vector<1x128x128xbf16> to vector<128x128xbf16>
    %cst_20 = arith.constant dense<0.000000e+00> : vector<16x128xf32>
    %15 = tpu.matmul %6, %14, %cst_20 {dimension_numbers = #tpu.dot_dimension_numbers<[1], [0], [0], [1], [0, 0, 1, 1], [], []>} : vector<16x128xbf16>, vector<128x128xbf16>, vector<16x128xf32> -> vector<16x128xf32>
    %16 = arith.truncf %9 : vector<16x128xf32> to vector<16x128xbf16>
    %cst_21 = arith.constant dense<0.000000e+00> : vector<128x128xf32>
    %17 = tpu.matmul %0, %16, %cst_21 {dimension_numbers = #tpu.dot_dimension_numbers<[1], [0], [0], [1], [0, 0, 1, 1], [], []>} : vector<128x16xbf16>, vector<16x128xbf16>, vector<128x128xf32> -> vector<128x128xf32>
    %18 = arith.truncf %17 : vector<128x128xf32> to vector<128x128xbf16>
    %19 = arith.mulf %18, %2 : vector<128x128xbf16>
    %20 = arith.truncf %12 : vector<16x128xf32> to vector<16x128xbf16>
    %cst_22 = arith.constant dense<0.000000e+00> : vector<128x16xf32>
    %21 = tpu.matmul %19, %20, %cst_22 {dimension_numbers = #tpu.dot_dimension_numbers<[1], [1], [0], [0], [0, 0, 1, 0], [], []>} : vector<128x128xbf16>, vector<16x128xbf16>, vector<128x16xf32> -> vector<128x16xf32>
    %22 = arith.addf %21, %3 : vector<128x16xf32>
    %cst_23 = arith.constant dense<0xFF800000> : vector<128xf32>
    %23 = vector.multi_reduction <maximumf>, %22, %cst_23 [1] : vector<128x16xf32> to vector<128xf32>
    %24 = vector.shape_cast %23 : vector<128xf32> to vector<128x1xf32>
    %25 = vector.broadcast %24 : vector<128x1xf32> to vector<128x16xf32>
    %26 = arith.subf %22, %25 : vector<128x16xf32>
    %27 = math.exp %26 : vector<128x16xf32>
    %cst_24 = arith.constant dense<0.000000e+00> : vector<128xf32>
    %28 = vector.multi_reduction <add>, %27, %cst_24 [1] : vector<128x16xf32> to vector<128xf32>
    %29 = vector.shape_cast %28 : vector<128xf32> to vector<128x1xf32>
    %30 = tpu.reciprocal %29 {approx = true} : vector<128x1xf32> -> vector<128x1xf32>
    %31 = vector.broadcast %30 : vector<128x1xf32> to vector<128x16xf32>
    %32 = arith.mulf %27, %31 : vector<128x16xf32>
    %33 = arith.truncf %32 : vector<128x16xf32> to vector<128x16xbf16>
    %34 = arith.truncf %15 : vector<16x128xf32> to vector<16x128xbf16>
    %cst_25 = arith.constant dense<0.000000e+00> : vector<128x128xf32>
    %35 = tpu.matmul %33, %34, %cst_25 {dimension_numbers = #tpu.dot_dimension_numbers<[1], [0], [0], [1], [0, 0, 1, 1], [], []>} : vector<128x16xbf16>, vector<16x128xbf16>, vector<128x128xf32> -> vector<128x128xf32>
    %36 = arith.truncf %35 : vector<128x128xf32> to vector<128x128xbf16>
    %37 = arith.mulf %36, %2 : vector<128x128xbf16>
    %cst_26 = arith.constant dense<0.000000e+00> : vector<16x128xf32>
    %38 = tpu.matmul %1, %37, %cst_26 {dimension_numbers = #tpu.dot_dimension_numbers<[1], [0], [0], [1], [0, 0, 1, 1], [], []>} : vector<16x128xbf16>, vector<128x128xbf16>, vector<16x128xf32> -> vector<16x128xf32>
    %39 = arith.truncf %38 : vector<16x128xf32> to vector<16x128xbf16>
    %c0_27 = arith.constant 0 : index
    %c0_28 = arith.constant 0 : index
    %c0_29 = arith.constant 0 : index
    %40 = vector.load %arg9[%c0_27, %c0_28, %c0_29] : memref<2x128x128xbf16, #tpu.memory_space<vmem>>, vector<1x128x128xbf16>
    %41 = vector.shape_cast %40 : vector<1x128x128xbf16> to vector<128x128xbf16>
    %cst_30 = arith.constant dense<0.000000e+00> : vector<16x128xf32>
    %42 = tpu.matmul %39, %41, %cst_30 {dimension_numbers = #tpu.dot_dimension_numbers<[1], [0], [0], [1], [0, 0, 1, 1], [], []>} : vector<16x128xbf16>, vector<128x128xbf16>, vector<16x128xf32> -> vector<16x128xf32>
    %c0_31 = arith.constant 0 : index
    %c0_32 = arith.constant 0 : index
    %c0_33 = arith.constant 0 : index
    %43 = vector.load %arg10[%c0_31, %c0_32, %c0_33] : memref<2x1x128xf32, #tpu.memory_space<vmem>>, vector<1x1x128xf32>
    %44 = vector.shape_cast %43 : vector<1x1x128xf32> to vector<1x128xf32>
    %45 = vector.broadcast %44 : vector<1x128xf32> to vector<16x128xf32>
    %46 = arith.addf %42, %45 : vector<16x128xf32>
    %47 = arith.addf %46, %5 : vector<16x128xf32>
    %cst_34 = arith.constant dense<0.000000e+00> : vector<16xf32>
    %48 = vector.multi_reduction <add>, %47, %cst_34 [1] : vector<16x128xf32> to vector<16xf32>
    %49 = vector.shape_cast %48 : vector<16xf32> to vector<16x1xf32>
    %cst_35 = arith.constant 1.280000e+02 : f32
    %50 = vector.broadcast %cst_35 : f32 to vector<16x1xf32>
    %51 = arith.divf %49, %50 : vector<16x1xf32>
    %52 = vector.broadcast %51 : vector<16x1xf32> to vector<16x128xf32>
    %53 = arith.subf %47, %52 : vector<16x128xf32>
    %54 = arith.mulf %53, %53 : vector<16x128xf32>
    %cst_36 = arith.constant dense<0.000000e+00> : vector<16xf32>
    %55 = vector.multi_reduction <add>, %54, %cst_36 [1] : vector<16x128xf32> to vector<16xf32>
    %56 = vector.shape_cast %55 : vector<16xf32> to vector<16x1xf32>
    %cst_37 = arith.constant 1.280000e+02 : f32
    %57 = vector.broadcast %cst_37 : f32 to vector<16x1xf32>
    %58 = arith.divf %56, %57 : vector<16x1xf32>
    %59 = vector.broadcast %51 : vector<16x1xf32> to vector<16x128xf32>
    %60 = arith.subf %47, %59 : vector<16x128xf32>
    %cst_38 = arith.constant 9.99999974E-6 : f32
    %61 = vector.broadcast %cst_38 : f32 to vector<16x1xf32>
    %62 = arith.addf %58, %61 : vector<16x1xf32>
    %63 = math.rsqrt %62 : vector<16x1xf32>
    %64 = vector.broadcast %63 : vector<16x1xf32> to vector<16x128xf32>
    %65 = arith.mulf %60, %64 : vector<16x128xf32>
    %c0_39 = arith.constant 0 : index
    %c0_40 = arith.constant 0 : index
    %c0_41 = arith.constant 0 : index
    %66 = vector.load %arg11[%c0_39, %c0_40, %c0_41] : memref<2x1x128xf32, #tpu.memory_space<vmem>>, vector<1x1x128xf32>
    %67 = vector.shape_cast %66 : vector<1x1x128xf32> to vector<1x128xf32>
    %68 = vector.broadcast %67 : vector<1x128xf32> to vector<16x128xf32>
    %69 = arith.mulf %65, %68 : vector<16x128xf32>
    %c0_42 = arith.constant 0 : index
    %c0_43 = arith.constant 0 : index
    %c0_44 = arith.constant 0 : index
    %70 = vector.load %arg12[%c0_42, %c0_43, %c0_44] : memref<2x1x128xf32, #tpu.memory_space<vmem>>, vector<1x1x128xf32>
    %71 = vector.shape_cast %70 : vector<1x1x128xf32> to vector<1x128xf32>
    %72 = vector.broadcast %71 : vector<1x128xf32> to vector<16x128xf32>
    %73 = arith.addf %69, %72 : vector<16x128xf32>
    %74 = arith.truncf %73 : vector<16x128xf32> to vector<16x128xbf16>
    %c0_45 = arith.constant 0 : index
    %c0_46 = arith.constant 0 : index
    %c0_47 = arith.constant 0 : index
    %75 = vector.load %arg13[%c0_45, %c0_46, %c0_47] : memref<2x128x512xbf16, #tpu.memory_space<vmem>>, vector<1x128x512xbf16>
    %76 = vector.shape_cast %75 : vector<1x128x512xbf16> to vector<128x512xbf16>
    %cst_48 = arith.constant dense<0.000000e+00> : vector<16x512xf32>
    %77 = tpu.matmul %74, %76, %cst_48 {dimension_numbers = #tpu.dot_dimension_numbers<[1], [0], [0], [1], [0, 0, 1, 1], [], []>} : vector<16x128xbf16>, vector<128x512xbf16>, vector<16x512xf32> -> vector<16x512xf32>
    %c0_49 = arith.constant 0 : index
    %c0_50 = arith.constant 0 : index
    %c0_51 = arith.constant 0 : index
    %78 = vector.load %arg14[%c0_49, %c0_50, %c0_51] : memref<2x1x512xf32, #tpu.memory_space<vmem>>, vector<1x1x512xf32>
    %79 = vector.shape_cast %78 : vector<1x1x512xf32> to vector<1x512xf32>
    %80 = vector.broadcast %79 : vector<1x512xf32> to vector<16x512xf32>
    %81 = arith.addf %77, %80 : vector<16x512xf32>
    %cst_52 = arith.constant 0.000000e+00 : f32
    %82 = vector.broadcast %cst_52 : f32 to vector<16x512xf32>
    %83 = arith.maximumf %81, %82 : vector<16x512xf32>
    %84 = arith.truncf %83 : vector<16x512xf32> to vector<16x512xbf16>
    %c0_53 = arith.constant 0 : index
    %c0_54 = arith.constant 0 : index
    %c0_55 = arith.constant 0 : index
    %85 = vector.load %arg15[%c0_53, %c0_54, %c0_55] : memref<2x512x128xbf16, #tpu.memory_space<vmem>>, vector<1x512x128xbf16>
    %86 = vector.shape_cast %85 : vector<1x512x128xbf16> to vector<512x128xbf16>
    %cst_56 = arith.constant dense<0.000000e+00> : vector<16x128xf32>
    %87 = tpu.matmul %84, %86, %cst_56 {dimension_numbers = #tpu.dot_dimension_numbers<[1], [0], [0], [1], [0, 0, 1, 1], [], []>} : vector<16x512xbf16>, vector<512x128xbf16>, vector<16x128xf32> -> vector<16x128xf32>
    %c0_57 = arith.constant 0 : index
    %c0_58 = arith.constant 0 : index
    %c0_59 = arith.constant 0 : index
    %88 = vector.load %arg16[%c0_57, %c0_58, %c0_59] : memref<2x1x128xf32, #tpu.memory_space<vmem>>, vector<1x1x128xf32>
    %89 = vector.shape_cast %88 : vector<1x1x128xf32> to vector<1x128xf32>
    %90 = vector.broadcast %89 : vector<1x128xf32> to vector<16x128xf32>
    %91 = arith.addf %87, %90 : vector<16x128xf32>
    %92 = arith.addf %91, %73 : vector<16x128xf32>
    %cst_60 = arith.constant dense<0.000000e+00> : vector<16xf32>
    %93 = vector.multi_reduction <add>, %92, %cst_60 [1] : vector<16x128xf32> to vector<16xf32>
    %94 = vector.shape_cast %93 : vector<16xf32> to vector<16x1xf32>
    %cst_61 = arith.constant 1.280000e+02 : f32
    %95 = vector.broadcast %cst_61 : f32 to vector<16x1xf32>
    %96 = arith.divf %94, %95 : vector<16x1xf32>
    %97 = vector.broadcast %96 : vector<16x1xf32> to vector<16x128xf32>
    %98 = arith.subf %92, %97 : vector<16x128xf32>
    %99 = arith.mulf %98, %98 : vector<16x128xf32>
    %cst_62 = arith.constant dense<0.000000e+00> : vector<16xf32>
    %100 = vector.multi_reduction <add>, %99, %cst_62 [1] : vector<16x128xf32> to vector<16xf32>
    %101 = vector.shape_cast %100 : vector<16xf32> to vector<16x1xf32>
    %cst_63 = arith.constant 1.280000e+02 : f32
    %102 = vector.broadcast %cst_63 : f32 to vector<16x1xf32>
    %103 = arith.divf %101, %102 : vector<16x1xf32>
    %104 = vector.broadcast %96 : vector<16x1xf32> to vector<16x128xf32>
    %105 = arith.subf %92, %104 : vector<16x128xf32>
    %cst_64 = arith.constant 9.99999974E-6 : f32
    %106 = vector.broadcast %cst_64 : f32 to vector<16x1xf32>
    %107 = arith.addf %103, %106 : vector<16x1xf32>
    %108 = math.rsqrt %107 : vector<16x1xf32>
    %109 = vector.broadcast %108 : vector<16x1xf32> to vector<16x128xf32>
    %110 = arith.mulf %105, %109 : vector<16x128xf32>
    %c0_65 = arith.constant 0 : index
    %c0_66 = arith.constant 0 : index
    %c0_67 = arith.constant 0 : index
    %111 = vector.load %arg17[%c0_65, %c0_66, %c0_67] : memref<2x1x128xf32, #tpu.memory_space<vmem>>, vector<1x1x128xf32>
    %112 = vector.shape_cast %111 : vector<1x1x128xf32> to vector<1x128xf32>
    %113 = vector.broadcast %112 : vector<1x128xf32> to vector<16x128xf32>
    %114 = arith.mulf %110, %113 : vector<16x128xf32>
    %c0_68 = arith.constant 0 : index
    %c0_69 = arith.constant 0 : index
    %c0_70 = arith.constant 0 : index
    %115 = vector.load %arg18[%c0_68, %c0_69, %c0_70] : memref<2x1x128xf32, #tpu.memory_space<vmem>>, vector<1x1x128xf32>
    %116 = vector.shape_cast %115 : vector<1x1x128xf32> to vector<1x128xf32>
    %117 = vector.broadcast %116 : vector<1x128xf32> to vector<16x128xf32>
    %118 = arith.addf %114, %117 : vector<16x128xf32>
    %119 = arith.truncf %118 : vector<16x128xf32> to vector<16x128xbf16>
    %c1 = arith.constant 1 : index
    %c0_71 = arith.constant 0 : index
    %c0_72 = arith.constant 0 : index
    %120 = vector.load %arg6[%c1, %c0_71, %c0_72] : memref<2x128x128xbf16, #tpu.memory_space<vmem>>, vector<1x128x128xbf16>
    %121 = vector.shape_cast %120 : vector<1x128x128xbf16> to vector<128x128xbf16>
    %cst_73 = arith.constant dense<0.000000e+00> : vector<16x128xf32>
    %122 = tpu.matmul %119, %121, %cst_73 {dimension_numbers = #tpu.dot_dimension_numbers<[1], [0], [0], [1], [0, 0, 1, 1], [], []>} : vector<16x128xbf16>, vector<128x128xbf16>, vector<16x128xf32> -> vector<16x128xf32>
    %c1_74 = arith.constant 1 : index
    %c0_75 = arith.constant 0 : index
    %c0_76 = arith.constant 0 : index
    %123 = vector.load %arg7[%c1_74, %c0_75, %c0_76] : memref<2x128x128xbf16, #tpu.memory_space<vmem>>, vector<1x128x128xbf16>
    %124 = vector.shape_cast %123 : vector<1x128x128xbf16> to vector<128x128xbf16>
    %cst_77 = arith.constant dense<0.000000e+00> : vector<16x128xf32>
    %125 = tpu.matmul %119, %124, %cst_77 {dimension_numbers = #tpu.dot_dimension_numbers<[1], [0], [0], [1], [0, 0, 1, 1], [], []>} : vector<16x128xbf16>, vector<128x128xbf16>, vector<16x128xf32> -> vector<16x128xf32>
    %c1_78 = arith.constant 1 : index
    %c0_79 = arith.constant 0 : index
    %c0_80 = arith.constant 0 : index
    %126 = vector.load %arg8[%c1_78, %c0_79, %c0_80] : memref<2x128x128xbf16, #tpu.memory_space<vmem>>, vector<1x128x128xbf16>
    %127 = vector.shape_cast %126 : vector<1x128x128xbf16> to vector<128x128xbf16>
    %cst_81 = arith.constant dense<0.000000e+00> : vector<16x128xf32>
    %128 = tpu.matmul %119, %127, %cst_81 {dimension_numbers = #tpu.dot_dimension_numbers<[1], [0], [0], [1], [0, 0, 1, 1], [], []>} : vector<16x128xbf16>, vector<128x128xbf16>, vector<16x128xf32> -> vector<16x128xf32>
    %129 = arith.truncf %122 : vector<16x128xf32> to vector<16x128xbf16>
    %cst_82 = arith.constant dense<0.000000e+00> : vector<128x128xf32>
    %130 = tpu.matmul %0, %129, %cst_82 {dimension_numbers = #tpu.dot_dimension_numbers<[1], [0], [0], [1], [0, 0, 1, 1], [], []>} : vector<128x16xbf16>, vector<16x128xbf16>, vector<128x128xf32> -> vector<128x128xf32>
    %131 = arith.truncf %130 : vector<128x128xf32> to vector<128x128xbf16>
    %132 = arith.mulf %131, %2 : vector<128x128xbf16>
    %133 = arith.truncf %125 : vector<16x128xf32> to vector<16x128xbf16>
    %cst_83 = arith.constant dense<0.000000e+00> : vector<128x16xf32>
    %134 = tpu.matmul %132, %133, %cst_83 {dimension_numbers = #tpu.dot_dimension_numbers<[1], [1], [0], [0], [0, 0, 1, 0], [], []>} : vector<128x128xbf16>, vector<16x128xbf16>, vector<128x16xf32> -> vector<128x16xf32>
    %135 = arith.addf %134, %3 : vector<128x16xf32>
    %cst_84 = arith.constant dense<0xFF800000> : vector<128xf32>
    %136 = vector.multi_reduction <maximumf>, %135, %cst_84 [1] : vector<128x16xf32> to vector<128xf32>
    %137 = vector.shape_cast %136 : vector<128xf32> to vector<128x1xf32>
    %138 = vector.broadcast %137 : vector<128x1xf32> to vector<128x16xf32>
    %139 = arith.subf %135, %138 : vector<128x16xf32>
    %140 = math.exp %139 : vector<128x16xf32>
    %cst_85 = arith.constant dense<0.000000e+00> : vector<128xf32>
    %141 = vector.multi_reduction <add>, %140, %cst_85 [1] : vector<128x16xf32> to vector<128xf32>
    %142 = vector.shape_cast %141 : vector<128xf32> to vector<128x1xf32>
    %143 = tpu.reciprocal %142 {approx = true} : vector<128x1xf32> -> vector<128x1xf32>
    %144 = vector.broadcast %143 : vector<128x1xf32> to vector<128x16xf32>
    %145 = arith.mulf %140, %144 : vector<128x16xf32>
    %146 = arith.truncf %145 : vector<128x16xf32> to vector<128x16xbf16>
    %147 = arith.truncf %128 : vector<16x128xf32> to vector<16x128xbf16>
    %cst_86 = arith.constant dense<0.000000e+00> : vector<128x128xf32>
    %148 = tpu.matmul %146, %147, %cst_86 {dimension_numbers = #tpu.dot_dimension_numbers<[1], [0], [0], [1], [0, 0, 1, 1], [], []>} : vector<128x16xbf16>, vector<16x128xbf16>, vector<128x128xf32> -> vector<128x128xf32>
    %149 = arith.truncf %148 : vector<128x128xf32> to vector<128x128xbf16>
    %150 = arith.mulf %149, %2 : vector<128x128xbf16>
    %cst_87 = arith.constant dense<0.000000e+00> : vector<16x128xf32>
    %151 = tpu.matmul %1, %150, %cst_87 {dimension_numbers = #tpu.dot_dimension_numbers<[1], [0], [0], [1], [0, 0, 1, 1], [], []>} : vector<16x128xbf16>, vector<128x128xbf16>, vector<16x128xf32> -> vector<16x128xf32>
    %152 = arith.truncf %151 : vector<16x128xf32> to vector<16x128xbf16>
    %c1_88 = arith.constant 1 : index
    %c0_89 = arith.constant 0 : index
    %c0_90 = arith.constant 0 : index
    %153 = vector.load %arg9[%c1_88, %c0_89, %c0_90] : memref<2x128x128xbf16, #tpu.memory_space<vmem>>, vector<1x128x128xbf16>
    %154 = vector.shape_cast %153 : vector<1x128x128xbf16> to vector<128x128xbf16>
    %cst_91 = arith.constant dense<0.000000e+00> : vector<16x128xf32>
    %155 = tpu.matmul %152, %154, %cst_91 {dimension_numbers = #tpu.dot_dimension_numbers<[1], [0], [0], [1], [0, 0, 1, 1], [], []>} : vector<16x128xbf16>, vector<128x128xbf16>, vector<16x128xf32> -> vector<16x128xf32>
    %c1_92 = arith.constant 1 : index
    %c0_93 = arith.constant 0 : index
    %c0_94 = arith.constant 0 : index
    %156 = vector.load %arg10[%c1_92, %c0_93, %c0_94] : memref<2x1x128xf32, #tpu.memory_space<vmem>>, vector<1x1x128xf32>
    %157 = vector.shape_cast %156 : vector<1x1x128xf32> to vector<1x128xf32>
    %158 = vector.broadcast %157 : vector<1x128xf32> to vector<16x128xf32>
    %159 = arith.addf %155, %158 : vector<16x128xf32>
    %160 = arith.addf %159, %118 : vector<16x128xf32>
    %cst_95 = arith.constant dense<0.000000e+00> : vector<16xf32>
    %161 = vector.multi_reduction <add>, %160, %cst_95 [1] : vector<16x128xf32> to vector<16xf32>
    %162 = vector.shape_cast %161 : vector<16xf32> to vector<16x1xf32>
    %cst_96 = arith.constant 1.280000e+02 : f32
    %163 = vector.broadcast %cst_96 : f32 to vector<16x1xf32>
    %164 = arith.divf %162, %163 : vector<16x1xf32>
    %165 = vector.broadcast %164 : vector<16x1xf32> to vector<16x128xf32>
    %166 = arith.subf %160, %165 : vector<16x128xf32>
    %167 = arith.mulf %166, %166 : vector<16x128xf32>
    %cst_97 = arith.constant dense<0.000000e+00> : vector<16xf32>
    %168 = vector.multi_reduction <add>, %167, %cst_97 [1] : vector<16x128xf32> to vector<16xf32>
    %169 = vector.shape_cast %168 : vector<16xf32> to vector<16x1xf32>
    %cst_98 = arith.constant 1.280000e+02 : f32
    %170 = vector.broadcast %cst_98 : f32 to vector<16x1xf32>
    %171 = arith.divf %169, %170 : vector<16x1xf32>
    %172 = vector.broadcast %164 : vector<16x1xf32> to vector<16x128xf32>
    %173 = arith.subf %160, %172 : vector<16x128xf32>
    %cst_99 = arith.constant 9.99999974E-6 : f32
    %174 = vector.broadcast %cst_99 : f32 to vector<16x1xf32>
    %175 = arith.addf %171, %174 : vector<16x1xf32>
    %176 = math.rsqrt %175 : vector<16x1xf32>
    %177 = vector.broadcast %176 : vector<16x1xf32> to vector<16x128xf32>
    %178 = arith.mulf %173, %177 : vector<16x128xf32>
    %c1_100 = arith.constant 1 : index
    %c0_101 = arith.constant 0 : index
    %c0_102 = arith.constant 0 : index
    %179 = vector.load %arg11[%c1_100, %c0_101, %c0_102] : memref<2x1x128xf32, #tpu.memory_space<vmem>>, vector<1x1x128xf32>
    %180 = vector.shape_cast %179 : vector<1x1x128xf32> to vector<1x128xf32>
    %181 = vector.broadcast %180 : vector<1x128xf32> to vector<16x128xf32>
    %182 = arith.mulf %178, %181 : vector<16x128xf32>
    %c1_103 = arith.constant 1 : index
    %c0_104 = arith.constant 0 : index
    %c0_105 = arith.constant 0 : index
    %183 = vector.load %arg12[%c1_103, %c0_104, %c0_105] : memref<2x1x128xf32, #tpu.memory_space<vmem>>, vector<1x1x128xf32>
    %184 = vector.shape_cast %183 : vector<1x1x128xf32> to vector<1x128xf32>
    %185 = vector.broadcast %184 : vector<1x128xf32> to vector<16x128xf32>
    %186 = arith.addf %182, %185 : vector<16x128xf32>
    %187 = arith.truncf %186 : vector<16x128xf32> to vector<16x128xbf16>
    %c1_106 = arith.constant 1 : index
    %c0_107 = arith.constant 0 : index
    %c0_108 = arith.constant 0 : index
    %188 = vector.load %arg13[%c1_106, %c0_107, %c0_108] : memref<2x128x512xbf16, #tpu.memory_space<vmem>>, vector<1x128x512xbf16>
    %189 = vector.shape_cast %188 : vector<1x128x512xbf16> to vector<128x512xbf16>
    %cst_109 = arith.constant dense<0.000000e+00> : vector<16x512xf32>
    %190 = tpu.matmul %187, %189, %cst_109 {dimension_numbers = #tpu.dot_dimension_numbers<[1], [0], [0], [1], [0, 0, 1, 1], [], []>} : vector<16x128xbf16>, vector<128x512xbf16>, vector<16x512xf32> -> vector<16x512xf32>
    %c1_110 = arith.constant 1 : index
    %c0_111 = arith.constant 0 : index
    %c0_112 = arith.constant 0 : index
    %191 = vector.load %arg14[%c1_110, %c0_111, %c0_112] : memref<2x1x512xf32, #tpu.memory_space<vmem>>, vector<1x1x512xf32>
    %192 = vector.shape_cast %191 : vector<1x1x512xf32> to vector<1x512xf32>
    %193 = vector.broadcast %192 : vector<1x512xf32> to vector<16x512xf32>
    %194 = arith.addf %190, %193 : vector<16x512xf32>
    %cst_113 = arith.constant 0.000000e+00 : f32
    %195 = vector.broadcast %cst_113 : f32 to vector<16x512xf32>
    %196 = arith.maximumf %194, %195 : vector<16x512xf32>
    %197 = arith.truncf %196 : vector<16x512xf32> to vector<16x512xbf16>
    %c1_114 = arith.constant 1 : index
    %c0_115 = arith.constant 0 : index
    %c0_116 = arith.constant 0 : index
    %198 = vector.load %arg15[%c1_114, %c0_115, %c0_116] : memref<2x512x128xbf16, #tpu.memory_space<vmem>>, vector<1x512x128xbf16>
    %199 = vector.shape_cast %198 : vector<1x512x128xbf16> to vector<512x128xbf16>
    %cst_117 = arith.constant dense<0.000000e+00> : vector<16x128xf32>
    %200 = tpu.matmul %197, %199, %cst_117 {dimension_numbers = #tpu.dot_dimension_numbers<[1], [0], [0], [1], [0, 0, 1, 1], [], []>} : vector<16x512xbf16>, vector<512x128xbf16>, vector<16x128xf32> -> vector<16x128xf32>
    %c1_118 = arith.constant 1 : index
    %c0_119 = arith.constant 0 : index
    %c0_120 = arith.constant 0 : index
    %201 = vector.load %arg16[%c1_118, %c0_119, %c0_120] : memref<2x1x128xf32, #tpu.memory_space<vmem>>, vector<1x1x128xf32>
    %202 = vector.shape_cast %201 : vector<1x1x128xf32> to vector<1x128xf32>
    %203 = vector.broadcast %202 : vector<1x128xf32> to vector<16x128xf32>
    %204 = arith.addf %200, %203 : vector<16x128xf32>
    %205 = arith.addf %204, %186 : vector<16x128xf32>
    %cst_121 = arith.constant dense<0.000000e+00> : vector<16xf32>
    %206 = vector.multi_reduction <add>, %205, %cst_121 [1] : vector<16x128xf32> to vector<16xf32>
    %207 = vector.shape_cast %206 : vector<16xf32> to vector<16x1xf32>
    %cst_122 = arith.constant 1.280000e+02 : f32
    %208 = vector.broadcast %cst_122 : f32 to vector<16x1xf32>
    %209 = arith.divf %207, %208 : vector<16x1xf32>
    %210 = vector.broadcast %209 : vector<16x1xf32> to vector<16x128xf32>
    %211 = arith.subf %205, %210 : vector<16x128xf32>
    %212 = arith.mulf %211, %211 : vector<16x128xf32>
    %cst_123 = arith.constant dense<0.000000e+00> : vector<16xf32>
    %213 = vector.multi_reduction <add>, %212, %cst_123 [1] : vector<16x128xf32> to vector<16xf32>
    %214 = vector.shape_cast %213 : vector<16xf32> to vector<16x1xf32>
    %cst_124 = arith.constant 1.280000e+02 : f32
    %215 = vector.broadcast %cst_124 : f32 to vector<16x1xf32>
    %216 = arith.divf %214, %215 : vector<16x1xf32>
    %217 = vector.broadcast %209 : vector<16x1xf32> to vector<16x128xf32>
    %218 = arith.subf %205, %217 : vector<16x128xf32>
    %cst_125 = arith.constant 9.99999974E-6 : f32
    %219 = vector.broadcast %cst_125 : f32 to vector<16x1xf32>
    %220 = arith.addf %216, %219 : vector<16x1xf32>
    %221 = math.rsqrt %220 : vector<16x1xf32>
    %222 = vector.broadcast %221 : vector<16x1xf32> to vector<16x128xf32>
    %223 = arith.mulf %218, %222 : vector<16x128xf32>
    %c1_126 = arith.constant 1 : index
    %c0_127 = arith.constant 0 : index
    %c0_128 = arith.constant 0 : index
    %224 = vector.load %arg17[%c1_126, %c0_127, %c0_128] : memref<2x1x128xf32, #tpu.memory_space<vmem>>, vector<1x1x128xf32>
    %225 = vector.shape_cast %224 : vector<1x1x128xf32> to vector<1x128xf32>
    %226 = vector.broadcast %225 : vector<1x128xf32> to vector<16x128xf32>
    %227 = arith.mulf %223, %226 : vector<16x128xf32>
    %c1_129 = arith.constant 1 : index
    %c0_130 = arith.constant 0 : index
    %c0_131 = arith.constant 0 : index
    %228 = vector.load %arg18[%c1_129, %c0_130, %c0_131] : memref<2x1x128xf32, #tpu.memory_space<vmem>>, vector<1x1x128xf32>
    %229 = vector.shape_cast %228 : vector<1x1x128xf32> to vector<1x128xf32>
    %230 = vector.broadcast %229 : vector<1x128xf32> to vector<16x128xf32>
    %231 = arith.addf %227, %230 : vector<16x128xf32>
    %232 = vector.shape_cast %231 : vector<16x128xf32> to vector<2x8x128xf32>
    %c0_132 = arith.constant 0 : index
    %c0_133 = arith.constant 0 : index
    %c0_134 = arith.constant 0 : index
    %233 = vector.load %arg19[%c0_132, %c0_133, %c0_134] : memref<2x8x128xf32, #tpu.memory_space<vmem>>, vector<2x8x128xf32>
    tpu.vector_store %arg19[%c0_132, %c0_133, %c0_134], %232 {strides = array<i32>} : memref<2x8x128xf32, #tpu.memory_space<vmem>>, vector<2x8x128xf32>,
    return
  }
  func.func @transform_0(%arg0: i32) -> (i32, i32, i32) {
    %c0_i32 = arith.constant 0 : i32
    %c0_i32_0 = arith.constant 0 : i32
    %c0_i32_1 = arith.constant 0 : i32
    return %arg0, %c0_i32, %c0_i32_0 : i32, i32, i32
  }
  func.func @transform_1(%arg0: i32) -> (i32, i32) {
    %c0_i32 = arith.constant 0 : i32
    %c0_i32_0 = arith.constant 0 : i32
    %c0_i32_1 = arith.constant 0 : i32
    return %c0_i32, %c0_i32_0 : i32, i32
  }
  func.func @transform_2(%arg0: i32) -> (i32, i32) {
    %c0_i32 = arith.constant 0 : i32
    %c0_i32_0 = arith.constant 0 : i32
    %c0_i32_1 = arith.constant 0 : i32
    return %c0_i32, %c0_i32_0 : i32, i32
  }
  func.func @transform_3(%arg0: i32) -> (i32, i32) {
    %c0_i32 = arith.constant 0 : i32
    %c0_i32_0 = arith.constant 0 : i32
    %c0_i32_1 = arith.constant 0 : i32
    return %c0_i32, %c0_i32_0 : i32, i32
  }
  func.func @transform_4(%arg0: i32) -> (i32, i32) {
    %c0_i32 = arith.constant 0 : i32
    %c0_i32_0 = arith.constant 0 : i32
    %c0_i32_1 = arith.constant 0 : i32
    return %c0_i32, %c0_i32_0 : i32, i32
  }
  func.func @transform_5(%arg0: i32) -> (i32, i32, i32) {
    %c0_i32 = arith.constant 0 : i32
    %c0_i32_0 = arith.constant 0 : i32
    %c0_i32_1 = arith.constant 0 : i32
    %c0_i32_2 = arith.constant 0 : i32
    return %c0_i32, %c0_i32_0, %c0_i32_1 : i32, i32, i32
  }
  func.func @transform_6(%arg0: i32) -> (i32, i32, i32) {
    %c0_i32 = arith.constant 0 : i32
    %c0_i32_0 = arith.constant 0 : i32
    %c0_i32_1 = arith.constant 0 : i32
    %c0_i32_2 = arith.constant 0 : i32
    return %c0_i32, %c0_i32_0, %c0_i32_1 : i32, i32, i32
  }
  func.func @transform_7(%arg0: i32) -> (i32, i32, i32) {
    %c0_i32 = arith.constant 0 : i32
    %c0_i32_0 = arith.constant 0 : i32
    %c0_i32_1 = arith.constant 0 : i32
    %c0_i32_2 = arith.constant 0 : i32
    return %c0_i32, %c0_i32_0, %c0_i32_1 : i32, i32, i32
  }
  func.func @transform_8(%arg0: i32) -> (i32, i32, i32) {
    %c0_i32 = arith.constant 0 : i32
    %c0_i32_0 = arith.constant 0 : i32
    %c0_i32_1 = arith.constant 0 : i32
    %c0_i32_2 = arith.constant 0 : i32
    return %c0_i32, %c0_i32_0, %c0_i32_1 : i32, i32, i32
  }
  func.func @transform_9(%arg0: i32) -> (i32, i32, i32) {
    %c0_i32 = arith.constant 0 : i32
    %c0_i32_0 = arith.constant 0 : i32
    %c0_i32_1 = arith.constant 0 : i32
    %c0_i32_2 = arith.constant 0 : i32
    return %c0_i32, %c0_i32_0, %c0_i32_1 : i32, i32, i32
  }
  func.func @transform_10(%arg0: i32) -> (i32, i32, i32) {
    %c0_i32 = arith.constant 0 : i32
    %c0_i32_0 = arith.constant 0 : i32
    %c0_i32_1 = arith.constant 0 : i32
    %c0_i32_2 = arith.constant 0 : i32
    return %c0_i32, %c0_i32_0, %c0_i32_1 : i32, i32, i32
  }
  func.func @transform_11(%arg0: i32) -> (i32, i32, i32) {
    %c0_i32 = arith.constant 0 : i32
    %c0_i32_0 = arith.constant 0 : i32
    %c0_i32_1 = arith.constant 0 : i32
    %c0_i32_2 = arith.constant 0 : i32
    return %c0_i32, %c0_i32_0, %c0_i32_1 : i32, i32, i32
  }
  func.func @transform_12(%arg0: i32) -> (i32, i32, i32) {
    %c0_i32 = arith.constant 0 : i32
    %c0_i32_0 = arith.constant 0 : i32
    %c0_i32_1 = arith.constant 0 : i32
    %c0_i32_2 = arith.constant 0 : i32
    return %c0_i32, %c0_i32_0, %c0_i32_1 : i32, i32, i32
  }
  func.func @transform_13(%arg0: i32) -> (i32, i32, i32) {
    %c0_i32 = arith.constant 0 : i32
    %c0_i32_0 = arith.constant 0 : i32
    %c0_i32_1 = arith.constant 0 : i32
    %c0_i32_2 = arith.constant 0 : i32
    return %c0_i32, %c0_i32_0, %c0_i32_1 : i32, i32, i32
  }
  func.func @transform_14(%arg0: i32) -> (i32, i32, i32) {
    %c0_i32 = arith.constant 0 : i32
    %c0_i32_0 = arith.constant 0 : i32
    %c0_i32_1 = arith.constant 0 : i32
    %c0_i32_2 = arith.constant 0 : i32
    return %c0_i32, %c0_i32_0, %c0_i32_1 : i32, i32, i32
  }
  func.func @transform_15(%arg0: i32) -> (i32, i32, i32) {
    %c0_i32 = arith.constant 0 : i32
    %c0_i32_0 = arith.constant 0 : i32
    %c0_i32_1 = arith.constant 0 : i32
    %c0_i32_2 = arith.constant 0 : i32
    return %c0_i32, %c0_i32_0, %c0_i32_1 : i32, i32, i32
  }
  func.func @transform_16(%arg0: i32) -> (i32, i32, i32) {
    %c0_i32 = arith.constant 0 : i32
    %c0_i32_0 = arith.constant 0 : i32
    %c0_i32_1 = arith.constant 0 : i32
    %c0_i32_2 = arith.constant 0 : i32
    return %c0_i32, %c0_i32_0, %c0_i32_1 : i32, i32, i32
  }
  func.func @transform_17(%arg0: i32) -> (i32, i32, i32) {
    %c0_i32 = arith.constant 0 : i32
    %c0_i32_0 = arith.constant 0 : i32
    %c0_i32_1 = arith.constant 0 : i32
    %c0_i32_2 = arith.constant 0 : i32
    return %c0_i32, %c0_i32_0, %c0_i32_1 : i32, i32, i32
  }
  func.func @transform_18(%arg0: i32) -> (i32, i32, i32) {
    %c0_i32 = arith.constant 0 : i32
    %c0_i32_0 = arith.constant 0 : i32
    %c0_i32_1 = arith.constant 0 : i32
    return %arg0, %c0_i32, %c0_i32_0 : i32, i32, i32
  }
}

</mosaic_0001>

<llo_original>
// kernel: tpu_custom_call.1
$region0: #{tpu_custom_call.1}
  #allocation0 [shape = 'u32[]', space=smem, size = 0x4, offset = 0x4, fixed_abs, tag = 'smem constant byte address 0x4 - core index']
  #allocation1 [shape = 'u32[144,128]{1,0:T(1,128)}', space=vmem, size = 0x12000, scoped, tag = 'internal scratch']
  %s0 = inlined_call_operand.vmem [shape: f32[2,8,128], index: 0, kind: input, shape index: {}]
  %s1 = inlined_call_operand.vmem [shape: bf16[128,16], index: 1, kind: input, shape index: {}]
  %s2 = inlined_call_operand.vmem [shape: bf16[16,128], index: 2, kind: input, shape index: {}]
  %s3 = inlined_call_operand.vmem [shape: bf16[128,128], index: 3, kind: input, shape index: {}]
  %s4 = inlined_call_operand.vmem [shape: f32[128,16], index: 4, kind: input, shape index: {}]
  %s5 = inlined_call_operand.vmem [shape: bf16[2,128,128], index: 5, kind: input, shape index: {}]
  %s6 = inlined_call_operand.hbm [shape: bf16[2,128,128], index: 6, kind: input, shape index: {}]
  %s7 = inlined_call_operand.hbm [shape: bf16[2,128,128], index: 7, kind: input, shape index: {}]
  %s8 = inlined_call_operand.hbm [shape: bf16[2,128,128], index: 8, kind: input, shape index: {}]
  %s9 = inlined_call_operand.vmem [shape: f32[2,1,128], index: 9, kind: input, shape index: {}]
  %s10 = inlined_call_operand.vmem [shape: f32[2,1,128], index: 10, kind: input, shape index: {}]
  %s11 = inlined_call_operand.vmem [shape: f32[2,1,128], index: 11, kind: input, shape index: {}]
  %s12 = inlined_call_operand.hbm [shape: bf16[2,128,512], index: 12, kind: input, shape index: {}]
  %s13 = inlined_call_operand.vmem [shape: f32[2,1,512], index: 13, kind: input, shape index: {}]
  %s14 = inlined_call_operand.hbm [shape: bf16[2,512,128], index: 14, kind: input, shape index: {}]
  %s15 = inlined_call_operand.vmem [shape: f32[2,1,128], index: 15, kind: input, shape index: {}]
  %s16 = inlined_call_operand.vmem [shape: f32[2,1,128], index: 16, kind: input, shape index: {}]
  %s17 = inlined_call_operand.vmem [shape: f32[2,1,128], index: 17, kind: input, shape index: {}]
  %s18 = inlined_call_operand.hbm [shape: f32[2,8,128], index: 18, kind: output, shape index: {}]
  %s19 = sld [smem:[#allocation0]]
  $region102: #{tpu_custom_call.1} parent=0
    _
  %s21 = ssub.s32 1, %s19
  %s22 = scalar_select 0, %s21, %s19
  $region1: #{tpu_custom_call.1} parent=0
    #allocation2 [shape = 'u8[65536]{0}', space=vmem, size = 0x10000, scoped, tag = 'input window, operand 6, single buffered']
    #allocation3 [shape = 's32[1]{0}', space=sflag, size = 0x4, scoped, tag = 'scoped memory for tpu_custom_call.1']
    #allocation4 [shape = 's32[1]{0}', space=sflag, size = 0x4, scoped, tag = 'scoped memory for tpu_custom_call.1']
    #allocation5 [shape = 'u8[65536]{0}', space=vmem, size = 0x10000, scoped, tag = 'input window, operand 7, single buffered']
    #allocation6 [shape = 's32[1]{0}', space=sflag, size = 0x4, scoped, tag = 'scoped memory for tpu_custom_call.1']
    #allocation7 [shape = 'u8[65536]{0}', space=vmem, size = 0x10000, scoped, tag = 'input window, operand 8, single buffered']
    #allocation8 [shape = 'u8[262144]{0}', space=vmem, size = 0x40000, scoped, tag = 'input window, operand 12, single buffered']
    #allocation9 [shape = 's32[1]{0}', space=sflag, size = 0x4, scoped, tag = 'scoped memory for tpu_custom_call.1']
    #allocation10 [shape = 'u8[262144]{0}', space=vmem, size = 0x40000, scoped, tag = 'input window, operand 14, single buffered']
    #allocation11 [shape = 'u8[8192]{0}', space=vmem, size = 0x2000, scoped, tag = 'output window, operand 0, single buffered']
    %23 = vsyncpa [#allocation3], 0
    %24 = vsyncpa [#allocation6], 0
    %25 = vsyncpa [#allocation9], 0
    %26 = vsyncpa [#allocation4], 0
    // Predicated region
    $region2: #{tpu_custom_call.1} parent=1 // pred_check
      _
    $region3: #{tpu_custom_call.1} parent=1 // pred_check_branch
      %28 = sbr.rel (0) target = $region5
    $region4: #{tpu_custom_call.1} parent=1 // pred_region
      _
    $region5: #{tpu_custom_call.1} parent=1 // pred_fallthru
      _
    // Predicated region
    $region6: #{tpu_custom_call.1} parent=1 // pred_check
      _
    $region7: #{tpu_custom_call.1} parent=1 // pred_check_branch
      %30 = sbr.rel (0) target = $region9
    $region8: #{tpu_custom_call.1} parent=1 // pred_region
      _
    $region9: #{tpu_custom_call.1} parent=1 // pred_fallthru
      _
    // Predicated region
    $region10: #{tpu_custom_call.1} parent=1 // pred_check
      _
    $region11: #{tpu_custom_call.1} parent=1 // pred_check_branch
      %32 = sbr.rel (0) target = $region13
    $region12: #{tpu_custom_call.1} parent=1 // pred_region
      _
    $region13: #{tpu_custom_call.1} parent=1 // pred_fallthru
      _
    // Predicated region
    $region14: #{tpu_custom_call.1} parent=1 // pred_check
      _
    $region15: #{tpu_custom_call.1} parent=1 // pred_check_branch
      %34 = sbr.rel (0) target = $region17
    $region16: #{tpu_custom_call.1} parent=1 // pred_region
      _
    $region17: #{tpu_custom_call.1} parent=1 // pred_fallthru
      _
    // Predicated region
    $region18: #{tpu_custom_call.1} parent=1 // pred_check
      _
    $region19: #{tpu_custom_call.1} parent=1 // pred_check_branch
      %36 = sbr.rel (0) target = $region21
    $region20: #{tpu_custom_call.1} parent=1 // pred_region
      _
    $region21: #{tpu_custom_call.1} parent=1 // pred_fallthru
      _
    // Predicated region
    $region22: #{tpu_custom_call.1} parent=1 // pred_check
      _
    $region23: #{tpu_custom_call.1} parent=1 // pred_check_branch
      %38 = sbr.rel (0) target = $region25
    $region24: #{tpu_custom_call.1} parent=1 // pred_region
      _
    $region25: #{tpu_custom_call.1} parent=1 // pred_fallthru
      _
    // Predicated region
    $region26: #{tpu_custom_call.1} parent=1 // pred_check
      _
    $region27: #{tpu_custom_call.1} parent=1 // pred_check_branch
      %40 = sbr.rel (0) target = $region29
    $region28: #{tpu_custom_call.1} parent=1 // pred_region
      %s42 = ssub.s32 2048, 2048
      %43 = vsyncadd [#allocation3], %s42
      %s44 = sshll.u32 [#allocation2], 4
      %s45 = int_to_ptr.vmem [resolvable:$true] %s44
      %50 = dma.hbm_to_vmem [thread:$0]  %s6, 2048, %s45, [#allocation3], 64, 64, 4
    $region29: #{tpu_custom_call.1} parent=1 // pred_fallthru
      _
    // Predicated region
    $region30: #{tpu_custom_call.1} parent=1 // pred_check
      _
    $region31: #{tpu_custom_call.1} parent=1 // pred_check_branch
      %52 = sbr.rel (0) target = $region33
    $region32: #{tpu_custom_call.1} parent=1 // pred_region
      %s54 = ssub.s32 2048, 2048
      %55 = vsyncadd [#allocation6], %s54
      %s56 = sshll.u32 [#allocation5], 4
      %s57 = int_to_ptr.vmem [resolvable:$true] %s56
      %62 = dma.hbm_to_vmem [thread:$0]  %s7, 2048, %s57, [#allocation6], 64, 64, 4
    $region33: #{tpu_custom_call.1} parent=1 // pred_fallthru
      _
    // Predicated region
    $region34: #{tpu_custom_call.1} parent=1 // pred_check
      _
    $region35: #{tpu_custom_call.1} parent=1 // pred_check_branch
      %64 = sbr.rel (0) target = $region37
    $region36: #{tpu_custom_call.1} parent=1 // pred_region
      %s66 = ssub.s32 2048, 2048
      %67 = vsyncadd [#allocation6], %s66
      %s68 = sshll.u32 [#allocation7], 4
      %s69 = int_to_ptr.vmem [resolvable:$true] %s68
      %74 = dma.hbm_to_vmem [thread:$0]  %s8, 2048, %s69, [#allocation6], 64, 64, 4
    $region37: #{tpu_custom_call.1} parent=1 // pred_fallthru
      _
    // Predicated region
    $region38: #{tpu_custom_call.1} parent=1 // pred_check
      _
    $region39: #{tpu_custom_call.1} parent=1 // pred_check_branch
      %76 = sbr.rel (0) target = $region41
    $region40: #{tpu_custom_call.1} parent=1 // pred_region
      _
    $region41: #{tpu_custom_call.1} parent=1 // pred_fallthru
      _
    // Predicated region
    $region42: #{tpu_custom_call.1} parent=1 // pred_check
      _
    $region43: #{tpu_custom_call.1} parent=1 // pred_check_branch
      %78 = sbr.rel (0) target = $region45
    $region44: #{tpu_custom_call.1} parent=1 // pred_region
      _
    $region45: #{tpu_custom_call.1} parent=1 // pred_fallthru
      _
    // Predicated region
    $region46: #{tpu_custom_call.1} parent=1 // pred_check
      _
    $region47: #{tpu_custom_call.1} parent=1 // pred_check_branch
      %80 = sbr.rel (0) target = $region49
    $region48: #{tpu_custom_call.1} parent=1 // pred_region
      _
    $region49: #{tpu_custom_call.1} parent=1 // pred_fallthru
      _
    // Predicated region
    $region50: #{tpu_custom_call.1} parent=1 // pred_check
      _
    $region51: #{tpu_custom_call.1} parent=1 // pred_check_branch
      %82 = sbr.rel (0) target = $region53
    $region52: #{tpu_custom_call.1} parent=1 // pred_region
      %s84 = ssub.s32 8192, 8192
      %85 = vsyncadd [#allocation9], %s84
      %s86 = sshll.u32 [#allocation8], 4
      %s87 = int_to_ptr.vmem [resolvable:$true] %s86
      %92 = dma.hbm_to_vmem [thread:$0]  %s12, 8192, %s87, [#allocation9], 256, 256, 16
    $region53: #{tpu_custom_call.1} parent=1 // pred_fallthru
      _
    // Predicated region
    $region54: #{tpu_custom_call.1} parent=1 // pred_check
      _
    $region55: #{tpu_custom_call.1} parent=1 // pred_check_branch
      %94 = sbr.rel (0) target = $region57
    $region56: #{tpu_custom_call.1} parent=1 // pred_region
      _
    $region57: #{tpu_custom_call.1} parent=1 // pred_fallthru
      _
    // Predicated region
    $region58: #{tpu_custom_call.1} parent=1 // pred_check
      _
    $region59: #{tpu_custom_call.1} parent=1 // pred_check_branch
      %96 = sbr.rel (0) target = $region61
    $region60: #{tpu_custom_call.1} parent=1 // pred_region
      %s98 = ssub.s32 8192, 8192
      %99 = vsyncadd [#allocation9], %s98
      %s100 = sshll.u32 [#allocation10], 4
      %s101 = int_to_ptr.vmem [resolvable:$true] %s100
      %106 = dma.hbm_to_vmem [thread:$0]  %s14, 8192, %s101, [#allocation9], 64, 64, 4
    $region61: #{tpu_custom_call.1} parent=1 // pred_fallthru
      _
    // Predicated region
    $region62: #{tpu_custom_call.1} parent=1 // pred_check
      _
    $region63: #{tpu_custom_call.1} parent=1 // pred_check_branch
      %108 = sbr.rel (0) target = $region65
    $region64: #{tpu_custom_call.1} parent=1 // pred_region
      _
    $region65: #{tpu_custom_call.1} parent=1 // pred_fallthru
      _
    // Predicated region
    $region66: #{tpu_custom_call.1} parent=1 // pred_check
      _
    $region67: #{tpu_custom_call.1} parent=1 // pred_check_branch
      %110 = sbr.rel (0) target = $region69
    $region68: #{tpu_custom_call.1} parent=1 // pred_region
      _
    $region69: #{tpu_custom_call.1} parent=1 // pred_fallthru
      _
    // Predicated region
    $region70: #{tpu_custom_call.1} parent=1 // pred_check
      _
    $region71: #{tpu_custom_call.1} parent=1 // pred_check_branch
      %112 = sbr.rel (0) target = $region73
    $region72: #{tpu_custom_call.1} parent=1 // pred_region
      _
    $region73: #{tpu_custom_call.1} parent=1 // pred_fallthru
      _
    // Predicated region
    $region74: #{tpu_custom_call.1} parent=1 // pred_check
      _
    $region75: #{tpu_custom_call.1} parent=1 // pred_check_branch
      %114 = sbr.rel (0) target = $region77
    $region76: #{tpu_custom_call.1} parent=1 // pred_region
      %115 = dma.done [#allocation3], 2048
    $region77: #{tpu_custom_call.1} parent=1 // pred_fallthru
      _
    // Predicated region
    $region78: #{tpu_custom_call.1} parent=1 // pred_check
      _
    $region79: #{tpu_custom_call.1} parent=1 // pred_check_branch
      %117 = sbr.rel (0) target = $region81
    $region80: #{tpu_custom_call.1} parent=1 // pred_region
      %118 = dma.done [#allocation6], 2048
    $region81: #{tpu_custom_call.1} parent=1 // pred_fallthru
      _
    // Predicated region
    $region82: #{tpu_custom_call.1} parent=1 // pred_check
      _
    $region83: #{tpu_custom_call.1} parent=1 // pred_check_branch
      %120 = sbr.rel (0) target = $region85
    $region84: #{tpu_custom_call.1} parent=1 // pred_region
      %121 = dma.done [#allocation6], 2048
    $region85: #{tpu_custom_call.1} parent=1 // pred_fallthru
      _
    // Predicated region
    $region86: #{tpu_custom_call.1} parent=1 // pred_check
      _
    $region87: #{tpu_custom_call.1} parent=1 // pred_check_branch
      %123 = sbr.rel (0) target = $region89
    $region88: #{tpu_custom_call.1} parent=1 // pred_region
      %124 = dma.done [#allocation9], 8192
    $region89: #{tpu_custom_call.1} parent=1 // pred_fallthru
      _
    // Predicated region
    $region90: #{tpu_custom_call.1} parent=1 // pred_check
      _
    $region91: #{tpu_custom_call.1} parent=1 // pred_check_branch
      %126 = sbr.rel (0) target = $region93
    $region92: #{tpu_custom_call.1} parent=1 // pred_region
      %127 = dma.done [#allocation9], 8192
    $region93: #{tpu_custom_call.1} parent=1 // pred_fallthru
      _
    %v129 = vld [vmem:[%s1] sm:$0xf]
    %v130 = vld [vmem:[%s1 + $0x4] sm:$0xf]
    %v131 = vld [vmem:[%s1 + $0x8] sm:$0xf]
    %v132 = vld [vmem:[%s1 + $0xc] sm:$0xf]
    %v133 = vld [vmem:[%s1 + $0x10] sm:$0xf]
    %v134 = vld [vmem:[%s1 + $0x14] sm:$0xf]
    %v135 = vld [vmem:[%s1 + $0x18] sm:$0xf]
    %v136 = vld [vmem:[%s1 + $0x1c] sm:$0xf]
    %v137 = vld [vmem:[%s1 + $0x20] sm:$0xf]
    %v138 = vld [vmem:[%s1 + $0x24] sm:$0xf]
    %v139 = vld [vmem:[%s1 + $0x28] sm:$0xf]
    %v140 = vld [vmem:[%s1 + $0x2c] sm:$0xf]
    %v141 = vld [vmem:[%s1 + $0x30] sm:$0xf]
    %v142 = vld [vmem:[%s1 + $0x34] sm:$0xf]
    %v143 = vld [vmem:[%s1 + $0x38] sm:$0xf]
    %v144 = vld [vmem:[%s1 + $0x3c] sm:$0xf]
    %v145 = vld [vmem:[%s2] sm:$0xf]
    %v146 = vld [vmem:[%s2 + $0x4] sm:$0xf]
    %v147 = vld [vmem:[%s3] sm:$0xf]
    %v148 = vld [vmem:[%s3 + $0x4] sm:$0xf]
    %v149 = vld [vmem:[%s3 + $0x8] sm:$0xf]
    %v150 = vld [vmem:[%s3 + $0xc] sm:$0xf]
    %v151 = vld [vmem:[%s3 + $0x10] sm:$0xf]
    %v152 = vld [vmem:[%s3 + $0x14] sm:$0xf]
    %v153 = vld [vmem:[%s3 + $0x18] sm:$0xf]
    %v154 = vld [vmem:[%s3 + $0x1c] sm:$0xf]
    %v155 = vld [vmem:[%s3 + $0x20] sm:$0xf]
    %v156 = vld [vmem:[%s3 + $0x24] sm:$0xf]
    %v157 = vld [vmem:[%s3 + $0x28] sm:$0xf]
    %v158 = vld [vmem:[%s3 + $0x2c] sm:$0xf]
    %v159 = vld [vmem:[%s3 + $0x30] sm:$0xf]
    %v160 = vld [vmem:[%s3 + $0x34] sm:$0xf]
    %v161 = vld [vmem:[%s3 + $0x38] sm:$0xf]
    %v162 = vld [vmem:[%s3 + $0x3c] sm:$0xf]
    %v163 = vld [vmem:[%s4] sm:$0xff]
    %v164 = vld [vmem:[%s4 + $0x8] sm:$0xff]
    %v165 = vld [vmem:[%s4 + $0x10] sm:$0xff]
    %v166 = vld [vmem:[%s4 + $0x18] sm:$0xff]
    %v167 = vld [vmem:[%s4 + $0x20] sm:$0xff]
    %v168 = vld [vmem:[%s4 + $0x28] sm:$0xff]
    %v169 = vld [vmem:[%s4 + $0x30] sm:$0xff]
    %v170 = vld [vmem:[%s4 + $0x38] sm:$0xff]
    %v171 = vld [vmem:[%s4 + $0x40] sm:$0xff]
    %v172 = vld [vmem:[%s4 + $0x48] sm:$0xff]
    %v173 = vld [vmem:[%s4 + $0x50] sm:$0xff]
    %v174 = vld [vmem:[%s4 + $0x58] sm:$0xff]
    %v175 = vld [vmem:[%s4 + $0x60] sm:$0xff]
    %v176 = vld [vmem:[%s4 + $0x68] sm:$0xff]
    %v177 = vld [vmem:[%s4 + $0x70] sm:$0xff]
    %v178 = vld [vmem:[%s4 + $0x78] sm:$0xff]
    %v179 = vld [vmem:[%s0] sm:$0xff]
    %v180 = vld [vmem:[%s0 + $0x8] sm:$0xff]
    %v181 = vpack.c.bf16 %v180, %v179
    %v182 = vld [vmem:[%s5] sm:$0xf]
    %v183 = vld [vmem:[%s5 + $0x4] sm:$0xf]
    %v184 = vld [vmem:[%s5 + $0x8] sm:$0xf]
    %v185 = vld [vmem:[%s5 + $0xc] sm:$0xf]
    %v186 = vld [vmem:[%s5 + $0x10] sm:$0xf]
    %v187 = vld [vmem:[%s5 + $0x14] sm:$0xf]
    %v188 = vld [vmem:[%s5 + $0x18] sm:$0xf]
    %v189 = vld [vmem:[%s5 + $0x1c] sm:$0xf]
    %v190 = vld [vmem:[%s5 + $0x20] sm:$0xf]
    %v191 = vld [vmem:[%s5 + $0x24] sm:$0xf]
    %v192 = vld [vmem:[%s5 + $0x28] sm:$0xf]
    %v193 = vld [vmem:[%s5 + $0x2c] sm:$0xf]
    %v194 = vld [vmem:[%s5 + $0x30] sm:$0xf]
    %v195 = vld [vmem:[%s5 + $0x34] sm:$0xf]
    %v196 = vld [vmem:[%s5 + $0x38] sm:$0xf]
    %v197 = vld [vmem:[%s5 + $0x3c] sm:$0xf]
    %v214 = vunpack.c.l.b16 %v182
    %v215 = vunpack.c.l.b16 %v183
    %v216 = vunpack.c.l.b16 %v184
    %v217 = vunpack.c.l.b16 %v185
    %v218 = vunpack.c.l.b16 %v186
    %v219 = vunpack.c.l.b16 %v187
    %v220 = vunpack.c.l.b16 %v188
    %v221 = vunpack.c.l.b16 %v189
    %v222 = vunpack.c.l.b16 %v190
    %v223 = vunpack.c.l.b16 %v191
    %v224 = vunpack.c.l.b16 %v192
    %v225 = vunpack.c.l.b16 %v193
    %v226 = vunpack.c.l.b16 %v194
    %v227 = vunpack.c.l.b16 %v195
    %v228 = vunpack.c.l.b16 %v196
    %v229 = vunpack.c.l.b16 %v197
    %v230 = vpack.c.b16 %v215, %v214
    %v231 = vpack.c.b16 %v217, %v216
    %v232 = vpack.c.b16 %v219, %v218
    %v233 = vpack.c.b16 %v221, %v220
    %v234 = vpack.c.b16 %v223, %v222
    %v235 = vpack.c.b16 %v225, %v224
    %v236 = vpack.c.b16 %v227, %v226
    %v237 = vpack.c.b16 %v229, %v228
    %246 = vmatprep.subr.bf16.mxu0 0
    %247 = vmatpush1.bf16.msra.mxu0 %v230
    %248 = vmatprep.subr.bf16.mxu0 0
    %249 = vmatpush1.bf16.msra.mxu0 %v231
    %250 = vmatprep.subr.bf16.mxu0 0
    %251 = vmatpush1.bf16.msra.mxu0 %v232
    %252 = vmatprep.subr.bf16.mxu0 0
    %253 = vmatpush1.bf16.msra.mxu0 %v233
    %254 = vmatprep.subr.bf16.mxu0 0
    %255 = vmatpush1.bf16.msra.mxu0 %v234
    %256 = vmatprep.subr.bf16.mxu0 0
    %257 = vmatpush1.bf16.msra.mxu0 %v235
    %258 = vmatprep.subr.bf16.mxu0 0
    %259 = vmatpush1.bf16.msra.mxu0 %v236
    %260 = vmatprep.subr.bf16.mxu0 0
    %261 = vmatpush1.bf16.msra.mxu0 %v237
    %262 = vmatprep.subr.bf16.mxu0 0
    %263 = vmatpush1.bf16.msra.mxu0 0
    %264 = vmatprep.subr.bf16.mxu0 0
    %265 = vmatpush1.bf16.msra.mxu0 0
    %266 = vmatprep.subr.bf16.mxu0 0
    %267 = vmatpush1.bf16.msra.mxu0 0
    %268 = vmatprep.subr.bf16.mxu0 0
    %269 = vmatpush1.bf16.msra.mxu0 0
    %270 = vmatprep.subr.bf16.mxu0 0
    %271 = vmatpush1.bf16.msra.mxu0 0
    %272 = vmatprep.subr.bf16.mxu0 0
    %273 = vmatpush1.bf16.msra.mxu0 0
    %274 = vmatprep.subr.bf16.mxu0 0
    %275 = vmatpush1.bf16.msra.mxu0 0
    %276 = vmatprep.subr.bf16.mxu0 0
    %277 = vmatpush1.bf16.msra.mxu0 0
    %278 = vmatprep.mubr.bf16.mxu0 0
    %279 = vmatmul.mubr.bf16.gmra.mrb[0].mxu0 %v181
    %v280 = vpop.f32.mrb[0].mxu0
    %v281 = vadd.f32 0.0, %v280
    %v282 = vpop.f32.mrb[0].mxu0
    %v283 = vpop.f32.mrb[0].mxu0
    %v284 = vadd.f32 0.0, %v283
    %v285 = vpop.f32.mrb[0].mxu0
    %286 = vdwg.mxu0
    %v287 = vld [vmem:[#allocation2] sm:$0xf]
    %v288 = vld [vmem:[#allocation2 + $0x4] sm:$0xf]
    %v289 = vld [vmem:[#allocation2 + $0x8] sm:$0xf]
    %v290 = vld [vmem:[#allocation2 + $0xc] sm:$0xf]
    %v291 = vld [vmem:[#allocation2 + $0x10] sm:$0xf]
    %v292 = vld [vmem:[#allocation2 + $0x14] sm:$0xf]
    %v293 = vld [vmem:[#allocation2 + $0x18] sm:$0xf]
    %v294 = vld [vmem:[#allocation2 + $0x1c] sm:$0xf]
    %v295 = vld [vmem:[#allocation2 + $0x20] sm:$0xf]
    %v296 = vld [vmem:[#allocation2 + $0x24] sm:$0xf]
    %v297 = vld [vmem:[#allocation2 + $0x28] sm:$0xf]
    %v298 = vld [vmem:[#allocation2 + $0x2c] sm:$0xf]
    %v299 = vld [vmem:[#allocation2 + $0x30] sm:$0xf]
    %v300 = vld [vmem:[#allocation2 + $0x34] sm:$0xf]
    %v301 = vld [vmem:[#allocation2 + $0x38] sm:$0xf]
    %v302 = vld [vmem:[#allocation2 + $0x3c] sm:$0xf]
    %v319 = vunpack.c.l.b16 %v287
    %v320 = vunpack.c.l.b16 %v288
    %v321 = vunpack.c.l.b16 %v289
    %v322 = vunpack.c.l.b16 %v290
    %v323 = vunpack.c.l.b16 %v291
    %v324 = vunpack.c.l.b16 %v292
    %v325 = vunpack.c.l.b16 %v293
    %v326 = vunpack.c.l.b16 %v294
    %v327 = vunpack.c.l.b16 %v295
    %v328 = vunpack.c.l.b16 %v296
    %v329 = vunpack.c.l.b16 %v297
    %v330 = vunpack.c.l.b16 %v298
    %v331 = vunpack.c.l.b16 %v299
    %v332 = vunpack.c.l.b16 %v300
    %v333 = vunpack.c.l.b16 %v301
    %v334 = vunpack.c.l.b16 %v302
    %v335 = vpack.c.b16 %v320, %v319
    %v336 = vpack.c.b16 %v322, %v321
    %v337 = vpack.c.b16 %v324, %v323
    %v338 = vpack.c.b16 %v326, %v325
    %v339 = vpack.c.b16 %v328, %v327
    %v340 = vpack.c.b16 %v330, %v329
    %v341 = vpack.c.b16 %v332, %v331
    %v342 = vpack.c.b16 %v334, %v333
    %351 = vmatprep.subr.bf16.mxu0 0
    %352 = vmatpush1.bf16.msra.mxu0 %v335
    %353 = vmatprep.subr.bf16.mxu0 0
    %354 = vmatpush1.bf16.msra.mxu0 %v336
    %355 = vmatprep.subr.bf16.mxu0 0
    %356 = vmatpush1.bf16.msra.mxu0 %v337
    %357 = vmatprep.subr.bf16.mxu0 0
    %358 = vmatpush1.bf16.msra.mxu0 %v338
    %359 = vmatprep.subr.bf16.mxu0 0
    %360 = vmatpush1.bf16.msra.mxu0 %v339
    %361 = vmatprep.subr.bf16.mxu0 0
    %362 = vmatpush1.bf16.msra.mxu0 %v340
    %363 = vmatprep.subr.bf16.mxu0 0
    %364 = vmatpush1.bf16.msra.mxu0 %v341
    %365 = vmatprep.subr.bf16.mxu0 0
    %366 = vmatpush1.bf16.msra.mxu0 %v342
    %367 = vmatprep.subr.bf16.mxu0 0
    %368 = vmatpush1.bf16.msra.mxu0 0
    %369 = vmatprep.subr.bf16.mxu0 0
    %370 = vmatpush1.bf16.msra.mxu0 0
    %371 = vmatprep.subr.bf16.mxu0 0
    %372 = vmatpush1.bf16.msra.mxu0 0
    %373 = vmatprep.subr.bf16.mxu0 0
    %374 = vmatpush1.bf16.msra.mxu0 0
    %375 = vmatprep.subr.bf16.mxu0 0
    %376 = vmatpush1.bf16.msra.mxu0 0
    %377 = vmatprep.subr.bf16.mxu0 0
    %378 = vmatpush1.bf16.msra.mxu0 0
    %379 = vmatprep.subr.bf16.mxu0 0
    %380 = vmatpush1.bf16.msra.mxu0 0
    %381 = vmatprep.subr.bf16.mxu0 0
    %382 = vmatpush1.bf16.msra.mxu0 0
    %383 = vmatprep.mubr.bf16.mxu0 0
    %384 = vmatmul.mubr.bf16.gmra.mrb[0].mxu0 %v181
    %v385 = vpop.f32.mrb[0].mxu0
    %v386 = vadd.f32 0.0, %v385
    %v387 = vpop.f32.mrb[0].mxu0
    %v388 = vpop.f32.mrb[0].mxu0
    %v389 = vadd.f32 0.0, %v388
    %v390 = vpop.f32.mrb[0].mxu0
    %391 = vdwg.mxu0
    %v392 = vld [vmem:[#allocation5] sm:$0xf]
    %v393 = vld [vmem:[#allocation5 + $0x4] sm:$0xf]
    %v394 = vld [vmem:[#allocation5 + $0x8] sm:$0xf]
    %v395 = vld [vmem:[#allocation5 + $0xc] sm:$0xf]
    %v396 = vld [vmem:[#allocation5 + $0x10] sm:$0xf]
    %v397 = vld [vmem:[#allocation5 + $0x14] sm:$0xf]
    %v398 = vld [vmem:[#allocation5 + $0x18] sm:$0xf]
    %v399 = vld [vmem:[#allocation5 + $0x1c] sm:$0xf]
    %v400 = vld [vmem:[#allocation5 + $0x20] sm:$0xf]
    %v401 = vld [vmem:[#allocation5 + $0x24] sm:$0xf]
    %v402 = vld [vmem:[#allocation5 + $0x28] sm:$0xf]
    %v403 = vld [vmem:[#allocation5 + $0x2c] sm:$0xf]
    %v404 = vld [vmem:[#allocation5 + $0x30] sm:$0xf]
    %v405 = vld [vmem:[#allocation5 + $0x34] sm:$0xf]
    %v406 = vld [vmem:[#allocation5 + $0x38] sm:$0xf]
    %v407 = vld [vmem:[#allocation5 + $0x3c] sm:$0xf]
    %v424 = vunpack.c.l.b16 %v392
    %v425 = vunpack.c.l.b16 %v393
    %v426 = vunpack.c.l.b16 %v394
    %v427 = vunpack.c.l.b16 %v395
    %v428 = vunpack.c.l.b16 %v396
    %v429 = vunpack.c.l.b16 %v397
    %v430 = vunpack.c.l.b16 %v398
    %v431 = vunpack.c.l.b16 %v399
    %v432 = vunpack.c.l.b16 %v400
    %v433 = vunpack.c.l.b16 %v401
    %v434 = vunpack.c.l.b16 %v402
    %v435 = vunpack.c.l.b16 %v403
    %v436 = vunpack.c.l.b16 %v404
    %v437 = vunpack.c.l.b16 %v405
    %v438 = vunpack.c.l.b16 %v406
    %v439 = vunpack.c.l.b16 %v407
    %v440 = vpack.c.b16 %v425, %v424
    %v441 = vpack.c.b16 %v427, %v426
    %v442 = vpack.c.b16 %v429, %v428
    %v443 = vpack.c.b16 %v431, %v430
    %v444 = vpack.c.b16 %v433, %v432
    %v445 = vpack.c.b16 %v435, %v434
    %v446 = vpack.c.b16 %v437, %v436
    %v447 = vpack.c.b16 %v439, %v438
    %456 = vmatprep.subr.bf16.mxu0 0
    %457 = vmatpush1.bf16.msra.mxu0 %v440
    %458 = vmatprep.subr.bf16.mxu0 0
    %459 = vmatpush1.bf16.msra.mxu0 %v441
    %460 = vmatprep.subr.bf16.mxu0 0
    %461 = vmatpush1.bf16.msra.mxu0 %v442
    %462 = vmatprep.subr.bf16.mxu0 0
    %463 = vmatpush1.bf16.msra.mxu0 %v443
    %464 = vmatprep.subr.bf16.mxu0 0
    %465 = vmatpush1.bf16.msra.mxu0 %v444
    %466 = vmatprep.subr.bf16.mxu0 0
    %467 = vmatpush1.bf16.msra.mxu0 %v445
    %468 = vmatprep.subr.bf16.mxu0 0
    %469 = vmatpush1.bf16.msra.mxu0 %v446
    %470 = vmatprep.subr.bf16.mxu0 0
    %471 = vmatpush1.bf16.msra.mxu0 %v447
    %472 = vmatprep.subr.bf16.mxu0 0
    %473 = vmatpush1.bf16.msra.mxu0 0
    %474 = vmatprep.subr.bf16.mxu0 0
    %475 = vmatpush1.bf16.msra.mxu0 0
    %476 = vmatprep.subr.bf16.mxu0 0
    %477 = vmatpush1.bf16.msra.mxu0 0
    %478 = vmatprep.subr.bf16.mxu0 0
    %479 = vmatpush1.bf16.msra.mxu0 0
    %480 = vmatprep.subr.bf16.mxu0 0
    %481 = vmatpush1.bf16.msra.mxu0 0
    %482 = vmatprep.subr.bf16.mxu0 0
    %483 = vmatpush1.bf16.msra.mxu0 0
    %484 = vmatprep.subr.bf16.mxu0 0
    %485 = vmatpush1.bf16.msra.mxu0 0
    %486 = vmatprep.subr.bf16.mxu0 0
    %487 = vmatpush1.bf16.msra.mxu0 0
    %488 = vmatprep.mubr.bf16.mxu0 0
    %489 = vmatmul.mubr.bf16.gmra.mrb[0].mxu0 %v181
    %v490 = vpop.f32.mrb[0].mxu0
    %v491 = vadd.f32 0.0, %v490
    %v492 = vpop.f32.mrb[0].mxu0
    %v493 = vpop.f32.mrb[0].mxu0
    %v494 = vadd.f32 0.0, %v493
    %v495 = vpop.f32.mrb[0].mxu0
    %496 = vdwg.mxu0
    %v497 = vpack.c.bf16 %v284, %v281
    %v514 = vunpack.c.l.b16 %v129
    %v515 = vunpack.c.l.b16 %v130
    %v516 = vunpack.c.l.b16 %v131
    %v517 = vunpack.c.l.b16 %v132
    %v518 = vunpack.c.l.b16 %v133
    %v519 = vunpack.c.l.b16 %v134
    %v520 = vunpack.c.l.b16 %v135
    %v521 = vunpack.c.l.b16 %v136
    %v522 = vunpack.c.l.b16 %v137
    %v523 = vunpack.c.l.b16 %v138
    %v524 = vunpack.c.l.b16 %v139
    %v525 = vunpack.c.l.b16 %v140
    %v526 = vunpack.c.l.b16 %v141
    %v527 = vunpack.c.l.b16 %v142
    %v528 = vunpack.c.l.b16 %v143
    %v529 = vunpack.c.l.b16 %v144
    %v530 = vpack.c.b16 %v515, %v514
    %v531 = vpack.c.b16 %v517, %v516
    %v532 = vpack.c.b16 %v519, %v518
    %v533 = vpack.c.b16 %v521, %v520
    %v534 = vpack.c.b16 %v523, %v522
    %v535 = vpack.c.b16 %v525, %v524
    %v536 = vpack.c.b16 %v527, %v526
    %v537 = vpack.c.b16 %v529, %v528
    %vm538 = vcmask 130048
    %v540 = vsel %vm538, %v530, 0
    %v543 = vsel %vm538, %v531, 0
    %v546 = vsel %vm538, %v532, 0
    %v549 = vsel %vm538, %v533, 0
    %v552 = vsel %vm538, %v534, 0
    %v555 = vsel %vm538, %v535, 0
    %v558 = vsel %vm538, %v536, 0
    %v561 = vsel %vm538, %v537, 0
    %563 = vmatprep.subr.bf16.mxu0 0
    %564 = vmatpush1.bf16.msra.mxu0 %v497
    %565 = vmatprep.subr.bf16.mxu0 0
    %566 = vmatpush1.bf16.msra.mxu0 0
    %567 = vmatprep.subr.bf16.mxu0 0
    %568 = vmatpush1.bf16.msra.mxu0 0
    %569 = vmatprep.subr.bf16.mxu0 0
    %570 = vmatpush1.bf16.msra.mxu0 0
    %571 = vmatprep.subr.bf16.mxu0 0
    %572 = vmatpush1.bf16.msra.mxu0 0
    %573 = vmatprep.subr.bf16.mxu0 0
    %574 = vmatpush1.bf16.msra.mxu0 0
    %575 = vmatprep.subr.bf16.mxu0 0
    %576 = vmatpush1.bf16.msra.mxu0 0
    %577 = vmatprep.subr.bf16.mxu0 0
    %578 = vmatpush1.bf16.msra.mxu0 0
    %579 = vmatprep.subr.bf16.mxu0 0
    %580 = vmatpush1.bf16.msra.mxu0 0
    %581 = vmatprep.subr.bf16.mxu0 0
    %582 = vmatpush1.bf16.msra.mxu0 0
    %583 = vmatprep.subr.bf16.mxu0 0
    %584 = vmatpush1.bf16.msra.mxu0 0
    %585 = vmatprep.subr.bf16.mxu0 0
    %586 = vmatpush1.bf16.msra.mxu0 0
    %587 = vmatprep.subr.bf16.mxu0 0
    %588 = vmatpush1.bf16.msra.mxu0 0
    %589 = vmatprep.subr.bf16.mxu0 0
    %590 = vmatpush1.bf16.msra.mxu0 0
    %591 = vmatprep.subr.bf16.mxu0 0
    %592 = vmatpush1.bf16.msra.mxu0 0
    %593 = vmatprep.subr.bf16.mxu0 0
    %594 = vmatpush1.bf16.msra.mxu0 0
    %595 = vmatprep.mubr.bf16.mxu0 0
    %596 = vmatmul.mubr.bf16.gmra.mrb[0].mxu0 %v540
    %v597 = vpop.f32.mrb[0].mxu0
    %v598 = vadd.f32 0.0, %v597
    %v599 = vpop.f32.mrb[0].mxu0
    %v600 = vpop.f32.mrb[0].mxu0
    %v601 = vadd.f32 0.0, %v600
    %v602 = vpop.f32.mrb[0].mxu0
    %603 = vmatprep.mubr.bf16.mxu0 0
    %604 = vmatmul.mubr.bf16.gmra.mrb[0].mxu0 %v543
    %v605 = vpop.f32.mrb[0].mxu0
    %v606 = vadd.f32 0.0, %v605
    %v607 = vpop.f32.mrb[0].mxu0
    %v608 = vpop.f32.mrb[0].mxu0
    %v609 = vadd.f32 0.0, %v608
    %v610 = vpop.f32.mrb[0].mxu0
    %611 = vmatprep.mubr.bf16.mxu0 0
    %612 = vmatmul.mubr.bf16.gmra.mrb[0].mxu0 %v546
    %v613 = vpop.f32.mrb[0].mxu0
    %v614 = vadd.f32 0.0, %v613
    %v615 = vpop.f32.mrb[0].mxu0
    %v616 = vpop.f32.mrb[0].mxu0
    %v617 = vadd.f32 0.0, %v616
    %v618 = vpop.f32.mrb[0].mxu0
    %619 = vmatprep.mubr.bf16.mxu0 0
    %620 = vmatmul.mubr.bf16.gmra.mrb[0].mxu0 %v549
    %v621 = vpop.f32.mrb[0].mxu0
    %v622 = vadd.f32 0.0, %v621
    %v623 = vpop.f32.mrb[0].mxu0
    %v624 = vpop.f32.mrb[0].mxu0
    %v625 = vadd.f32 0.0, %v624
    %v626 = vpop.f32.mrb[0].mxu0
    %627 = vmatprep.mubr.bf16.mxu0 0
    %628 = vmatmul.mubr.bf16.gmra.mrb[0].mxu0 %v552
    %v629 = vpop.f32.mrb[0].mxu0
    %v630 = vadd.f32 0.0, %v629
    %v631 = vpop.f32.mrb[0].mxu0
    %v632 = vpop.f32.mrb[0].mxu0
    %v633 = vadd.f32 0.0, %v632
    %v634 = vpop.f32.mrb[0].mxu0
    %635 = vmatprep.mubr.bf16.mxu0 0
    %636 = vmatmul.mubr.bf16.gmra.mrb[0].mxu0 %v555
    %v637 = vpop.f32.mrb[0].mxu0
    %v638 = vadd.f32 0.0, %v637
    %v639 = vpop.f32.mrb[0].mxu0
    %v640 = vpop.f32.mrb[0].mxu0
    %v641 = vadd.f32 0.0, %v640
    %v642 = vpop.f32.mrb[0].mxu0
    %643 = vmatprep.mubr.bf16.mxu0 0
    %644 = vmatmul.mubr.bf16.gmra.mrb[0].mxu0 %v558
    %v645 = vpop.f32.mrb[0].mxu0
    %v646 = vadd.f32 0.0, %v645
    %v647 = vpop.f32.mrb[0].mxu0
    %v648 = vpop.f32.mrb[0].mxu0
    %v649 = vadd.f32 0.0, %v648
    %v650 = vpop.f32.mrb[0].mxu0
    %651 = vmatprep.mubr.bf16.mxu0 0
    %652 = vmatmul.mubr.bf16.gmra.mrb[0].mxu0 %v561
    %v653 = vpop.f32.mrb[0].mxu0
    %v654 = vadd.f32 0.0, %v653
    %v655 = vpop.f32.mrb[0].mxu0
    %v656 = vpop.f32.mrb[0].mxu0
    %v657 = vadd.f32 0.0, %v656
    %v658 = vpop.f32.mrb[0].mxu0
    %659 = vdwg.mxu0
    %v660 = vpack.c.bf16 %v601, %v598
    %v661 = vpack.c.bf16 %v609, %v606
    %v662 = vpack.c.bf16 %v617, %v614
    %v663 = vpack.c.bf16 %v625, %v622
    %v664 = vpack.c.bf16 %v633, %v630
    %v665 = vpack.c.bf16 %v641, %v638
    %v666 = vpack.c.bf16 %v649, %v646
    %v667 = vpack.c.bf16 %v657, %v654
    %v684 = vunpack.c.l.b16 %v147
    %v685 = vunpack.c.l.b16 %v148
    %v686 = vunpack.c.l.b16 %v149
    %v687 = vunpack.c.l.b16 %v150
    %v688 = vunpack.c.l.b16 %v151
    %v689 = vunpack.c.l.b16 %v152
    %v690 = vunpack.c.l.b16 %v153
    %v691 = vunpack.c.l.b16 %v154
    %v692 = vunpack.c.l.b16 %v155
    %v693 = vunpack.c.l.b16 %v156
    %v694 = vunpack.c.l.b16 %v157
    %v695 = vunpack.c.l.b16 %v158
    %v696 = vunpack.c.l.b16 %v159
    %v697 = vunpack.c.l.b16 %v160
    %v698 = vunpack.c.l.b16 %v161
    %v699 = vunpack.c.l.b16 %v162
    %v700 = vpack.c.b16 %v685, %v684
    %v701 = vpack.c.b16 %v687, %v686
    %v702 = vpack.c.b16 %v689, %v688
    %v703 = vpack.c.b16 %v691, %v690
    %v704 = vpack.c.b16 %v693, %v692
    %v705 = vpack.c.b16 %v695, %v694
    %v706 = vpack.c.b16 %v697, %v696
    %v707 = vpack.c.b16 %v699, %v698
    %v716 = vmul.bf16 %v660, %v700
    %v717 = vmul.bf16 %v661, %v701
    %v718 = vmul.bf16 %v662, %v702
    %v719 = vmul.bf16 %v663, %v703
    %v720 = vmul.bf16 %v664, %v704
    %v721 = vmul.bf16 %v665, %v705
    %v722 = vmul.bf16 %v666, %v706
    %v723 = vmul.bf16 %v667, %v707
    %v724 = vpack.c.bf16 %v389, %v386
    %725 = vmatprep.subr.bf16.mxu0 0
    %726 = vmatpush1.bf16.xpose.msra.mxu0 %v724
    %727 = vmatprep.subr.bf16.mxu0 0
    %728 = vmatpush1.bf16.xpose.msra.mxu0 0
    %729 = vmatprep.subr.bf16.mxu0 0
    %730 = vmatpush1.bf16.xpose.msra.mxu0 0
    %731 = vmatprep.subr.bf16.mxu0 0
    %732 = vmatpush1.bf16.xpose.msra.mxu0 0
    %733 = vmatprep.subr.bf16.mxu0 0
    %734 = vmatpush1.bf16.xpose.msra.mxu0 0
    %735 = vmatprep.subr.bf16.mxu0 0
    %736 = vmatpush1.bf16.xpose.msra.mxu0 0
    %737 = vmatprep.subr.bf16.mxu0 0
    %738 = vmatpush1.bf16.xpose.msra.mxu0 0
    %739 = vmatprep.subr.bf16.mxu0 0
    %740 = vmatpush1.bf16.xpose.msra.mxu0 0
    %741 = vmatprep.subr.bf16.mxu0 0
    %742 = vmatpush1.bf16.xpose.msra.mxu0 0
    %743 = vmatprep.subr.bf16.mxu0 0
    %744 = vmatpush1.bf16.xpose.msra.mxu0 0
    %745 = vmatprep.subr.bf16.mxu0 0
    %746 = vmatpush1.bf16.xpose.msra.mxu0 0
    %747 = vmatprep.subr.bf16.mxu0 0
    %748 = vmatpush1.bf16.xpose.msra.mxu0 0
    %749 = vmatprep.subr.bf16.mxu0 0
    %750 = vmatpush1.bf16.xpose.msra.mxu0 0
    %751 = vmatprep.subr.bf16.mxu0 0
    %752 = vmatpush1.bf16.xpose.msra.mxu0 0
    %753 = vmatprep.subr.bf16.mxu0 0
    %754 = vmatpush1.bf16.xpose.msra.mxu0 0
    %755 = vmatprep.subr.bf16.mxu0 0
    %756 = vmatpush1.bf16.xpose.msra.mxu0 0
    %757 = vmatprep.mubr.bf16.mxu0 0
    %758 = vmatmul.mubr.bf16.gmra.mrb[0].mxu0 %v716
    %v759 = vpop.f32.mrb[0].mxu0
    %v760 = vadd.f32 %v163, %v759
    %v761 = vpop.f32.mrb[0].mxu0
    %v762 = vpop.f32.mrb[0].mxu0
    %v763 = vadd.f32 %v164, %v762
    %v764 = vpop.f32.mrb[0].mxu0
    %765 = vmatprep.mubr.bf16.mxu0 0
    %766 = vmatmul.mubr.bf16.gmra.mrb[0].mxu0 %v717
    %v767 = vpop.f32.mrb[0].mxu0
    %v768 = vadd.f32 %v165, %v767
    %v769 = vpop.f32.mrb[0].mxu0
    %v770 = vpop.f32.mrb[0].mxu0
    %v771 = vadd.f32 %v166, %v770
    %v772 = vpop.f32.mrb[0].mxu0
    %773 = vmatprep.mubr.bf16.mxu0 0
    %774 = vmatmul.mubr.bf16.gmra.mrb[0].mxu0 %v718
    %v775 = vpop.f32.mrb[0].mxu0
    %v776 = vadd.f32 %v167, %v775
    %v777 = vpop.f32.mrb[0].mxu0
    %v778 = vpop.f32.mrb[0].mxu0
    %v779 = vadd.f32 %v168, %v778
    %v780 = vpop.f32.mrb[0].mxu0
    %781 = vmatprep.mubr.bf16.mxu0 0
    %782 = vmatmul.mubr.bf16.gmra.mrb[0].mxu0 %v719
    %v783 = vpop.f32.mrb[0].mxu0
    %v784 = vadd.f32 %v169, %v783
    %v785 = vpop.f32.mrb[0].mxu0
    %v786 = vpop.f32.mrb[0].mxu0
    %v787 = vadd.f32 %v170, %v786
    %v788 = vpop.f32.mrb[0].mxu0
    %789 = vmatprep.mubr.bf16.mxu0 0
    %790 = vmatmul.mubr.bf16.gmra.mrb[0].mxu0 %v720
    %v791 = vpop.f32.mrb[0].mxu0
    %v792 = vadd.f32 %v171, %v791
    %v793 = vpop.f32.mrb[0].mxu0
    %v794 = vpop.f32.mrb[0].mxu0
    %v795 = vadd.f32 %v172, %v794
    %v796 = vpop.f32.mrb[0].mxu0
    %797 = vmatprep.mubr.bf16.mxu0 0
    %798 = vmatmul.mubr.bf16.gmra.mrb[0].mxu0 %v721
    %v799 = vpop.f32.mrb[0].mxu0
    %v800 = vadd.f32 %v173, %v799
    %v801 = vpop.f32.mrb[0].mxu0
    %v802 = vpop.f32.mrb[0].mxu0
    %v803 = vadd.f32 %v174, %v802
    %v804 = vpop.f32.mrb[0].mxu0
    %805 = vmatprep.mubr.bf16.mxu0 0
    %806 = vmatmul.mubr.bf16.gmra.mrb[0].mxu0 %v722
    %v807 = vpop.f32.mrb[0].mxu0
    %v808 = vadd.f32 %v175, %v807
    %v809 = vpop.f32.mrb[0].mxu0
    %v810 = vpop.f32.mrb[0].mxu0
    %v811 = vadd.f32 %v176, %v810
    %v812 = vpop.f32.mrb[0].mxu0
    %813 = vmatprep.mubr.bf16.mxu0 0
    %814 = vmatmul.mubr.bf16.gmra.mrb[0].mxu0 %v723
    %v815 = vpop.f32.mrb[0].mxu0
    %v816 = vadd.f32 %v177, %v815
    %v817 = vpop.f32.mrb[0].mxu0
    %v818 = vpop.f32.mrb[0].mxu0
    %v819 = vadd.f32 %v178, %v818
    %v820 = vpop.f32.mrb[0].mxu0
    %821 = vdwg.mxu0
    %v822 = vsel %vm538, %v760, -inf
    %823 = vmax.xlane.f32.xlu0 %v822
    %v824 = vpop.xlane.xlu0 %823
    %v825 = vsel %vm538, %v763, -inf
    %826 = vmax.xlane.f32.xlu0 %v825
    %v827 = vpop.xlane.xlu0 %826
    %v828 = vsel %vm538, %v768, -inf
    %829 = vmax.xlane.f32.xlu0 %v828
    %v830 = vpop.xlane.xlu0 %829
    %v831 = vsel %vm538, %v771, -inf
    %832 = vmax.xlane.f32.xlu0 %v831
    %v833 = vpop.xlane.xlu0 %832
    %v834 = vsel %vm538, %v776, -inf
    %835 = vmax.xlane.f32.xlu0 %v834
    %v836 = vpop.xlane.xlu0 %835
    %v837 = vsel %vm538, %v779, -inf
    %838 = vmax.xlane.f32.xlu0 %v837
    %v839 = vpop.xlane.xlu0 %838
    %v840 = vsel %vm538, %v784, -inf
    %841 = vmax.xlane.f32.xlu0 %v840
    %v842 = vpop.xlane.xlu0 %841
    %v843 = vsel %vm538, %v787, -inf
    %844 = vmax.xlane.f32.xlu0 %v843
    %v845 = vpop.xlane.xlu0 %844
    %v846 = vsel %vm538, %v792, -inf
    %847 = vmax.xlane.f32.xlu0 %v846
    %v848 = vpop.xlane.xlu0 %847
    %v849 = vsel %vm538, %v795, -inf
    %850 = vmax.xlane.f32.xlu0 %v849
    %v851 = vpop.xlane.xlu0 %850
    %v852 = vsel %vm538, %v800, -inf
    %853 = vmax.xlane.f32.xlu0 %v852
    %v854 = vpop.xlane.xlu0 %853
    %v855 = vsel %vm538, %v803, -inf
    %856 = vmax.xlane.f32.xlu0 %v855
    %v857 = vpop.xlane.xlu0 %856
    %v858 = vsel %vm538, %v808, -inf
    %859 = vmax.xlane.f32.xlu0 %v858
    %v860 = vpop.xlane.xlu0 %859
    %v861 = vsel %vm538, %v811, -inf
    %862 = vmax.xlane.f32.xlu0 %v861
    %v863 = vpop.xlane.xlu0 %862
    %v864 = vsel %vm538, %v816, -inf
    %865 = vmax.xlane.f32.xlu0 %v864
    %v866 = vpop.xlane.xlu0 %865
    %v867 = vsel %vm538, %v819, -inf
    %868 = vmax.xlane.f32.xlu0 %v867
    %v869 = vpop.xlane.xlu0 %868
    %v870 = vsub.f32 %v760, %v824
    %v871 = vsub.f32 %v763, %v827
    %v872 = vsub.f32 %v768, %v830
    %v873 = vsub.f32 %v771, %v833
    %v874 = vsub.f32 %v776, %v836
    %v875 = vsub.f32 %v779, %v839
    %v876 = vsub.f32 %v784, %v842
    %v877 = vsub.f32 %v787, %v845
    %v878 = vsub.f32 %v792, %v848
    %v879 = vsub.f32 %v795, %v851
    %v880 = vsub.f32 %v800, %v854
    %v881 = vsub.f32 %v803, %v857
    %v882 = vsub.f32 %v808, %v860
    %v883 = vsub.f32 %v811, %v863
    %v884 = vsub.f32 %v816, %v866
    %v885 = vsub.f32 %v819, %v869
    %v886 = vmul.f32 %v870, 1.442695
    %v887 = vpow.pop %v886
    %v888 = vmul.f32 %v871, 1.442695
    %v889 = vpow.pop %v888
    %v890 = vmul.f32 %v872, 1.442695
    %v891 = vpow.pop %v890
    %v892 = vmul.f32 %v873, 1.442695
    %v893 = vpow.pop %v892
    %v894 = vmul.f32 %v874, 1.442695
    %v895 = vpow.pop %v894
    %v896 = vmul.f32 %v875, 1.442695
    %v897 = vpow.pop %v896
    %v898 = vmul.f32 %v876, 1.442695
    %v899 = vpow.pop %v898
    %v900 = vmul.f32 %v877, 1.442695
    %v901 = vpow.pop %v900
    %v902 = vmul.f32 %v878, 1.442695
    %v903 = vpow.pop %v902
    %v904 = vmul.f32 %v879, 1.442695
    %v905 = vpow.pop %v904
    %v906 = vmul.f32 %v880, 1.442695
    %v907 = vpow.pop %v906
    %v908 = vmul.f32 %v881, 1.442695
    %v909 = vpow.pop %v908
    %v910 = vmul.f32 %v882, 1.442695
    %v911 = vpow.pop %v910
    %v912 = vmul.f32 %v883, 1.442695
    %v913 = vpow.pop %v912
    %v914 = vmul.f32 %v884, 1.442695
    %v915 = vpow.pop %v914
    %v916 = vmul.f32 %v885, 1.442695
    %v917 = vpow.pop %v916
    %v918 = vsel %vm538, %v887, 0.0
    %919 = vadd.xlane.f32.xlu0 %v918
    %v920 = vpop.xlane.xlu0 %919
    %v921 = vsel %vm538, %v889, 0.0
    %922 = vadd.xlane.f32.xlu0 %v921
    %v923 = vpop.xlane.xlu0 %922
    %v924 = vsel %vm538, %v891, 0.0
    %925 = vadd.xlane.f32.xlu0 %v924
    %v926 = vpop.xlane.xlu0 %925
    %v927 = vsel %vm538, %v893, 0.0
    %928 = vadd.xlane.f32.xlu0 %v927
    %v929 = vpop.xlane.xlu0 %928
    %v930 = vsel %vm538, %v895, 0.0
    %931 = vadd.xlane.f32.xlu0 %v930
    %v932 = vpop.xlane.xlu0 %931
    %v933 = vsel %vm538, %v897, 0.0
    %934 = vadd.xlane.f32.xlu0 %v933
    %v935 = vpop.xlane.xlu0 %934
    %v936 = vsel %vm538, %v899, 0.0
    %937 = vadd.xlane.f32.xlu0 %v936
    %v938 = vpop.xlane.xlu0 %937
    %v939 = vsel %vm538, %v901, 0.0
    %940 = vadd.xlane.f32.xlu0 %v939
    %v941 = vpop.xlane.xlu0 %940
    %v942 = vsel %vm538, %v903, 0.0
    %943 = vadd.xlane.f32.xlu0 %v942
    %v944 = vpop.xlane.xlu0 %943
    %v945 = vsel %vm538, %v905, 0.0
    %946 = vadd.xlane.f32.xlu0 %v945
    %v947 = vpop.xlane.xlu0 %946
    %v948 = vsel %vm538, %v907, 0.0
    %949 = vadd.xlane.f32.xlu0 %v948
    %v950 = vpop.xlane.xlu0 %949
    %v951 = vsel %vm538, %v909, 0.0
    %952 = vadd.xlane.f32.xlu0 %v951
    %v953 = vpop.xlane.xlu0 %952
    %v954 = vsel %vm538, %v911, 0.0
    %955 = vadd.xlane.f32.xlu0 %v954
    %v956 = vpop.xlane.xlu0 %955
    %v957 = vsel %vm538, %v913, 0.0
    %958 = vadd.xlane.f32.xlu0 %v957
    %v959 = vpop.xlane.xlu0 %958
    %v960 = vsel %vm538, %v915, 0.0
    %961 = vadd.xlane.f32.xlu0 %v960
    %v962 = vpop.xlane.xlu0 %961
    %v963 = vsel %vm538, %v917, 0.0
    %964 = vadd.xlane.f32.xlu0 %v963
    %v965 = vpop.xlane.xlu0 %964
    %v966 = vrcp.pop %v920
    %v967 = vrcp.pop %v923
    %v968 = vrcp.pop %v926
    %v969 = vrcp.pop %v929
    %v970 = vrcp.pop %v932
    %v971 = vrcp.pop %v935
    %v972 = vrcp.pop %v938
    %v973 = vrcp.pop %v941
    %v974 = vrcp.pop %v944
    %v975 = vrcp.pop %v947
    %v976 = vrcp.pop %v950
    %v977 = vrcp.pop %v953
    %v978 = vrcp.pop %v956
    %v979 = vrcp.pop %v959
    %v980 = vrcp.pop %v962
    %v981 = vrcp.pop %v965
    %v982 = vmul.f32 %v887, %v966
    %v983 = vmul.f32 %v889, %v967
    %v984 = vmul.f32 %v891, %v968
    %v985 = vmul.f32 %v893, %v969
    %v986 = vmul.f32 %v895, %v970
    %v987 = vmul.f32 %v897, %v971
    %v988 = vmul.f32 %v899, %v972
    %v989 = vmul.f32 %v901, %v973
    %v990 = vmul.f32 %v903, %v974
    %v991 = vmul.f32 %v905, %v975
    %v992 = vmul.f32 %v907, %v976
    %v993 = vmul.f32 %v909, %v977
    %v994 = vmul.f32 %v911, %v978
    %v995 = vmul.f32 %v913, %v979
    %v996 = vmul.f32 %v915, %v980
    %v997 = vmul.f32 %v917, %v981
    %v998 = vpack.c.bf16 %v983, %v982
    %v999 = vpack.c.bf16 %v985, %v984
    %v1000 = vpack.c.bf16 %v987, %v986
    %v1001 = vpack.c.bf16 %v989, %v988
    %v1002 = vpack.c.bf16 %v991, %v990
    %v1003 = vpack.c.bf16 %v993, %v992
    %v1004 = vpack.c.bf16 %v995, %v994
    %v1005 = vpack.c.bf16 %v997, %v996
    %v1006 = vpack.c.bf16 %v494, %v491
    %v1008 = vsel %vm538, %v998, 0
    %v1011 = vsel %vm538, %v999, 0
    %v1014 = vsel %vm538, %v1000, 0
    %v1017 = vsel %vm538, %v1001, 0
    %v1020 = vsel %vm538, %v1002, 0
    %v1023 = vsel %vm538, %v1003, 0
    %v1026 = vsel %vm538, %v1004, 0
    %v1029 = vsel %vm538, %v1005, 0
    %1031 = vmatprep.subr.bf16.mxu0 0
    %1032 = vmatpush1.bf16.msra.mxu0 %v1006
    %1033 = vmatprep.subr.bf16.mxu0 0
    %1034 = vmatpush1.bf16.msra.mxu0 0
    %1035 = vmatprep.subr.bf16.mxu0 0
    %1036 = vmatpush1.bf16.msra.mxu0 0
    %1037 = vmatprep.subr.bf16.mxu0 0
    %1038 = vmatpush1.bf16.msra.mxu0 0
    %1039 = vmatprep.subr.bf16.mxu0 0
    %1040 = vmatpush1.bf16.msra.mxu0 0
    %1041 = vmatprep.subr.bf16.mxu0 0
    %1042 = vmatpush1.bf16.msra.mxu0 0
    %1043 = vmatprep.subr.bf16.mxu0 0
    %1044 = vmatpush1.bf16.msra.mxu0 0
    %1045 = vmatprep.subr.bf16.mxu0 0
    %1046 = vmatpush1.bf16.msra.mxu0 0
    %1047 = vmatprep.subr.bf16.mxu0 0
    %1048 = vmatpush1.bf16.msra.mxu0 0
    %1049 = vmatprep.subr.bf16.mxu0 0
    %1050 = vmatpush1.bf16.msra.mxu0 0
    %1051 = vmatprep.subr.bf16.mxu0 0
    %1052 = vmatpush1.bf16.msra.mxu0 0
    %1053 = vmatprep.subr.bf16.mxu0 0
    %1054 = vmatpush1.bf16.msra.mxu0 0
    %1055 = vmatprep.subr.bf16.mxu0 0
    %1056 = vmatpush1.bf16.msra.mxu0 0
    %1057 = vmatprep.subr.bf16.mxu0 0
    %1058 = vmatpush1.bf16.msra.mxu0 0
    %1059 = vmatprep.subr.bf16.mxu0 0
    %1060 = vmatpush1.bf16.msra.mxu0 0
    %1061 = vmatprep.subr.bf16.mxu0 0
    %1062 = vmatpush1.bf16.msra.mxu0 0
    %1063 = vmatprep.mubr.bf16.mxu0 0
    %1064 = vmatmul.mubr.bf16.gmra.mrb[0].mxu0 %v1008
    %v1065 = vpop.f32.mrb[0].mxu0
    %v1066 = vadd.f32 0.0, %v1065
    %v1067 = vpop.f32.mrb[0].mxu0
    %v1068 = vpop.f32.mrb[0].mxu0
    %v1069 = vadd.f32 0.0, %v1068
    %v1070 = vpop.f32.mrb[0].mxu0
    %1071 = vmatprep.mubr.bf16.mxu0 0
    %1072 = vmatmul.mubr.bf16.gmra.mrb[0].mxu0 %v1011
    %v1073 = vpop.f32.mrb[0].mxu0
    %v1074 = vadd.f32 0.0, %v1073
    %v1075 = vpop.f32.mrb[0].mxu0
    %v1076 = vpop.f32.mrb[0].mxu0
    %v1077 = vadd.f32 0.0, %v1076
    %v1078 = vpop.f32.mrb[0].mxu0
    %1079 = vmatprep.mubr.bf16.mxu0 0
    %1080 = vmatmul.mubr.bf16.gmra.mrb[0].mxu0 %v1014
    %v1081 = vpop.f32.mrb[0].mxu0
    %v1082 = vadd.f32 0.0, %v1081
    %v1083 = vpop.f32.mrb[0].mxu0
    %v1084 = vpop.f32.mrb[0].mxu0
    %v1085 = vadd.f32 0.0, %v1084
    %v1086 = vpop.f32.mrb[0].mxu0
    %1087 = vmatprep.mubr.bf16.mxu0 0
    %1088 = vmatmul.mubr.bf16.gmra.mrb[0].mxu0 %v1017
    %v1089 = vpop.f32.mrb[0].mxu0
    %v1090 = vadd.f32 0.0, %v1089
    %v1091 = vpop.f32.mrb[0].mxu0
    %v1092 = vpop.f32.mrb[0].mxu0
    %v1093 = vadd.f32 0.0, %v1092
    %v1094 = vpop.f32.mrb[0].mxu0
    %1095 = vmatprep.mubr.bf16.mxu0 0
    %1096 = vmatmul.mubr.bf16.gmra.mrb[0].mxu0 %v1020
    %v1097 = vpop.f32.mrb[0].mxu0
    %v1098 = vadd.f32 0.0, %v1097
    %v1099 = vpop.f32.mrb[0].mxu0
    %v1100 = vpop.f32.mrb[0].mxu0
    %v1101 = vadd.f32 0.0, %v1100
    %v1102 = vpop.f32.mrb[0].mxu0
    %1103 = vmatprep.mubr.bf16.mxu0 0
    %1104 = vmatmul.mubr.bf16.gmra.mrb[0].mxu0 %v1023
    %v1105 = vpop.f32.mrb[0].mxu0
    %v1106 = vadd.f32 0.0, %v1105
    %v1107 = vpop.f32.mrb[0].mxu0
    %v1108 = vpop.f32.mrb[0].mxu0
    %v1109 = vadd.f32 0.0, %v1108
    %v1110 = vpop.f32.mrb[0].mxu0
    %1111 = vmatprep.mubr.bf16.mxu0 0
    %1112 = vmatmul.mubr.bf16.gmra.mrb[0].mxu0 %v1026
    %v1113 = vpop.f32.mrb[0].mxu0
    %v1114 = vadd.f32 0.0, %v1113
    %v1115 = vpop.f32.mrb[0].mxu0
    %v1116 = vpop.f32.mrb[0].mxu0
    %v1117 = vadd.f32 0.0, %v1116
    %v1118 = vpop.f32.mrb[0].mxu0
    %1119 = vmatprep.mubr.bf16.mxu0 0
    %1120 = vmatmul.mubr.bf16.gmra.mrb[0].mxu0 %v1029
    %v1121 = vpop.f32.mrb[0].mxu0
    %v1122 = vadd.f32 0.0, %v1121
    %v1123 = vpop.f32.mrb[0].mxu0
    %v1124 = vpop.f32.mrb[0].mxu0
    %v1125 = vadd.f32 0.0, %v1124
    %v1126 = vpop.f32.mrb[0].mxu0
    %1127 = vdwg.mxu0
    %v1128 = vpack.c.bf16 %v1069, %v1066
    %v1129 = vpack.c.bf16 %v1077, %v1074
    %v1130 = vpack.c.bf16 %v1085, %v1082
    %v1131 = vpack.c.bf16 %v1093, %v1090
    %v1132 = vpack.c.bf16 %v1101, %v1098
    %v1133 = vpack.c.bf16 %v1109, %v1106
    %v1134 = vpack.c.bf16 %v1117, %v1114
    %v1135 = vpack.c.bf16 %v1125, %v1122
    %v1136 = vmul.bf16 %v1128, %v700
    %v1137 = vmul.bf16 %v1129, %v701
    %v1138 = vmul.bf16 %v1130, %v702
    %v1139 = vmul.bf16 %v1131, %v703
    %v1140 = vmul.bf16 %v1132, %v704
    %v1141 = vmul.bf16 %v1133, %v705
    %v1142 = vmul.bf16 %v1134, %v706
    %v1143 = vmul.bf16 %v1135, %v707
    %v1146 = vunpack.c.l.b16 %v145
    %v1147 = vunpack.c.l.b16 %v146
    %v1148 = vpack.c.b16 %v1147, %v1146
    %1150 = vmatprep.subr.bf16.mxu0 0
    %1151 = vmatpush1.bf16.msra.mxu0 %v1136
    %1152 = vmatprep.subr.bf16.mxu0 0
    %1153 = vmatpush1.bf16.msra.mxu0 %v1137
    %1154 = vmatprep.subr.bf16.mxu0 0
    %1155 = vmatpush1.bf16.msra.mxu0 %v1138
    %1156 = vmatprep.subr.bf16.mxu0 0
    %1157 = vmatpush1.bf16.msra.mxu0 %v1139
    %1158 = vmatprep.subr.bf16.mxu0 0
    %1159 = vmatpush1.bf16.msra.mxu0 %v1140
    %1160 = vmatprep.subr.bf16.mxu0 0
    %1161 = vmatpush1.bf16.msra.mxu0 %v1141
    %1162 = vmatprep.subr.bf16.mxu0 0
    %1163 = vmatpush1.bf16.msra.mxu0 %v1142
    %1164 = vmatprep.subr.bf16.mxu0 0
    %1165 = vmatpush1.bf16.msra.mxu0 %v1143
    %1166 = vmatprep.subr.bf16.mxu0 0
    %1167 = vmatpush1.bf16.msra.mxu0 0
    %1168 = vmatprep.subr.bf16.mxu0 0
    %1169 = vmatpush1.bf16.msra.mxu0 0
    %1170 = vmatprep.subr.bf16.mxu0 0
    %1171 = vmatpush1.bf16.msra.mxu0 0
    %1172 = vmatprep.subr.bf16.mxu0 0
    %1173 = vmatpush1.bf16.msra.mxu0 0
    %1174 = vmatprep.subr.bf16.mxu0 0
    %1175 = vmatpush1.bf16.msra.mxu0 0
    %1176 = vmatprep.subr.bf16.mxu0 0
    %1177 = vmatpush1.bf16.msra.mxu0 0
    %1178 = vmatprep.subr.bf16.mxu0 0
    %1179 = vmatpush1.bf16.msra.mxu0 0
    %1180 = vmatprep.subr.bf16.mxu0 0
    %1181 = vmatpush1.bf16.msra.mxu0 0
    %1182 = vmatprep.mubr.bf16.mxu0 0
    %1183 = vmatmul.mubr.bf16.gmra.mrb[0].mxu0 %v1148
    %v1184 = vpop.f32.mrb[0].mxu0
    %v1185 = vadd.f32 0.0, %v1184
    %v1186 = vpop.f32.mrb[0].mxu0
    %v1187 = vpop.f32.mrb[0].mxu0
    %v1188 = vadd.f32 0.0, %v1187
    %v1189 = vpop.f32.mrb[0].mxu0
    %1190 = vdwg.mxu0
    %v1191 = vpack.c.bf16 %v1188, %v1185
    %v1192 = vld [vmem:[#allocation7] sm:$0xf]
    %v1193 = vld [vmem:[#allocation7 + $0x4] sm:$0xf]
    %v1194 = vld [vmem:[#allocation7 + $0x8] sm:$0xf]
    %v1195 = vld [vmem:[#allocation7 + $0xc] sm:$0xf]
    %v1196 = vld [vmem:[#allocation7 + $0x10] sm:$0xf]
    %v1197 = vld [vmem:[#allocation7 + $0x14] sm:$0xf]
    %v1198 = vld [vmem:[#allocation7 + $0x18] sm:$0xf]
    %v1199 = vld [vmem:[#allocation7 + $0x1c] sm:$0xf]
    %v1200 = vld [vmem:[#allocation7 + $0x20] sm:$0xf]
    %v1201 = vld [vmem:[#allocation7 + $0x24] sm:$0xf]
    %v1202 = vld [vmem:[#allocation7 + $0x28] sm:$0xf]
    %v1203 = vld [vmem:[#allocation7 + $0x2c] sm:$0xf]
    %v1204 = vld [vmem:[#allocation7 + $0x30] sm:$0xf]
    %v1205 = vld [vmem:[#allocation7 + $0x34] sm:$0xf]
    %v1206 = vld [vmem:[#allocation7 + $0x38] sm:$0xf]
    %v1207 = vld [vmem:[#allocation7 + $0x3c] sm:$0xf]
    %v1208 = vld [vmem:[%s9] sm:$0x1]
    %v1210 = vlaneseq
    %v1211 = vshrl.u32 %v1210, 7
    %v1212 = vsub.s32 0, %v1211
    %v1213 = vrot.slane %v1208, %v1212
    %v1231 = vunpack.c.l.b16 %v1192
    %v1232 = vunpack.c.l.b16 %v1193
    %v1233 = vunpack.c.l.b16 %v1194
    %v1234 = vunpack.c.l.b16 %v1195
    %v1235 = vunpack.c.l.b16 %v1196
    %v1236 = vunpack.c.l.b16 %v1197
    %v1237 = vunpack.c.l.b16 %v1198
    %v1238 = vunpack.c.l.b16 %v1199
    %v1239 = vunpack.c.l.b16 %v1200
    %v1240 = vunpack.c.l.b16 %v1201
    %v1241 = vunpack.c.l.b16 %v1202
    %v1242 = vunpack.c.l.b16 %v1203
    %v1243 = vunpack.c.l.b16 %v1204
    %v1244 = vunpack.c.l.b16 %v1205
    %v1245 = vunpack.c.l.b16 %v1206
    %v1246 = vunpack.c.l.b16 %v1207
    %v1247 = vpack.c.b16 %v1232, %v1231
    %v1248 = vpack.c.b16 %v1234, %v1233
    %v1249 = vpack.c.b16 %v1236, %v1235
    %v1250 = vpack.c.b16 %v1238, %v1237
    %v1251 = vpack.c.b16 %v1240, %v1239
    %v1252 = vpack.c.b16 %v1242, %v1241
    %v1253 = vpack.c.b16 %v1244, %v1243
    %v1254 = vpack.c.b16 %v1246, %v1245
    %1263 = vmatprep.subr.bf16.mxu0 0
    %1264 = vmatpush1.bf16.msra.mxu0 %v1247
    %1265 = vmatprep.subr.bf16.mxu0 0
    %1266 = vmatpush1.bf16.msra.mxu0 %v1248
    %1267 = vmatprep.subr.bf16.mxu0 0
    %1268 = vmatpush1.bf16.msra.mxu0 %v1249
    %1269 = vmatprep.subr.bf16.mxu0 0
    %1270 = vmatpush1.bf16.msra.mxu0 %v1250
    %1271 = vmatprep.subr.bf16.mxu0 0
    %1272 = vmatpush1.bf16.msra.mxu0 %v1251
    %1273 = vmatprep.subr.bf16.mxu0 0
    %1274 = vmatpush1.bf16.msra.mxu0 %v1252
    %1275 = vmatprep.subr.bf16.mxu0 0
    %1276 = vmatpush1.bf16.msra.mxu0 %v1253
    %1277 = vmatprep.subr.bf16.mxu0 0
    %1278 = vmatpush1.bf16.msra.mxu0 %v1254
    %1279 = vmatprep.subr.bf16.mxu0 0
    %1280 = vmatpush1.bf16.msra.mxu0 0
    %1281 = vmatprep.subr.bf16.mxu0 0
    %1282 = vmatpush1.bf16.msra.mxu0 0
    %1283 = vmatprep.subr.bf16.mxu0 0
    %1284 = vmatpush1.bf16.msra.mxu0 0
    %1285 = vmatprep.subr.bf16.mxu0 0
    %1286 = vmatpush1.bf16.msra.mxu0 0
    %1287 = vmatprep.subr.bf16.mxu0 0
    %1288 = vmatpush1.bf16.msra.mxu0 0
    %1289 = vmatprep.subr.bf16.mxu0 0
    %1290 = vmatpush1.bf16.msra.mxu0 0
    %1291 = vmatprep.subr.bf16.mxu0 0
    %1292 = vmatpush1.bf16.msra.mxu0 0
    %1293 = vmatprep.subr.bf16.mxu0 0
    %1294 = vmatpush1.bf16.msra.mxu0 0
    %1295 = vmatprep.mubr.bf16.mxu0 0
    %1296 = vmatmul.mubr.bf16.gmra.mrb[0].mxu0 %v1191
    %v1297 = vpop.f32.mrb[0].mxu0
    %v1298 = vadd.f32 %v1213, %v1297
    %v1299 = vpop.f32.mrb[0].mxu0
    %v1300 = vpop.f32.mrb[0].mxu0
    %v1301 = vadd.f32 %v1213, %v1300
    %v1302 = vpop.f32.mrb[0].mxu0
    %1303 = vdwg.mxu0
    %v1304 = vadd.f32 %v1298, %v179
    %v1305 = vadd.f32 %v1301, %v180
    %1306 = vadd.xlane.f32.xlu0 %v1304
    %v1307 = vpop.xlane.xlu0 %1306
    %1308 = vadd.xlane.f32.xlu0 %v1305
    %v1309 = vpop.xlane.xlu0 %1308
    %v1310 = vrcp.pop 128.0
    %v1311 = vmul.f32 %v1307, %v1310
    %v1312 = vmul.f32 %v1309, %v1310
    %v1313 = vsub.f32 %v1304, %v1311
    %v1314 = vsub.f32 %v1305, %v1312
    %v1315 = vmul.f32 %v1313, %v1313
    %v1316 = vmul.f32 %v1314, %v1314
    %1317 = vadd.xlane.f32.xlu0 %v1315
    %v1318 = vpop.xlane.xlu0 %1317
    %1319 = vadd.xlane.f32.xlu0 %v1316
    %v1320 = vpop.xlane.xlu0 %1319
    %v1321 = vmul.f32 %v1318, %v1310
    %v1322 = vmul.f32 %v1320, %v1310
    %v1323 = vadd.f32 %v1321, 1e-05
    %v1324 = vadd.f32 %v1322, 1e-05
    %v1325 = vrsqrt.pop %v1323
    %v1326 = vrsqrt.pop %v1324
    %v1327 = vmul.f32 %v1313, %v1325
    %v1328 = vmul.f32 %v1314, %v1326
    %v1329 = vld [vmem:[%s10] sm:$0x1]
    %v1331 = vlaneseq
    %v1332 = vshrl.u32 %v1331, 7
    %v1333 = vsub.s32 0, %v1332
    %v1334 = vrot.slane %v1329, %v1333
    %v1336 = vmul.f32 %v1327, %v1334
    %v1337 = vmul.f32 %v1328, %v1334
    %v1338 = vld [vmem:[%s11] sm:$0x1]
    %v1340 = vlaneseq
    %v1341 = vshrl.u32 %v1340, 7
    %v1342 = vsub.s32 0, %v1341
    %v1343 = vrot.slane %v1338, %v1342
    %v1345 = vadd.f32 %v1336, %v1343
    %v1346 = vadd.f32 %v1337, %v1343
    %v1347 = vpack.c.bf16 %v1346, %v1345
    %v1348 = vld [vmem:[#allocation8] sm:$0xff]
    %v1349 = vld [vmem:[#allocation8 + $0x8] sm:$0xff]
    %v1350 = vld [vmem:[#allocation8 + $0x10] sm:$0xff]
    %v1351 = vld [vmem:[#allocation8 + $0x18] sm:$0xff]
    %v1352 = vld [vmem:[#allocation8 + $0x20] sm:$0xff]
    %v1353 = vld [vmem:[#allocation8 + $0x28] sm:$0xff]
    %v1354 = vld [vmem:[#allocation8 + $0x30] sm:$0xff]
    %v1355 = vld [vmem:[#allocation8 + $0x38] sm:$0xff]
    %v1356 = vld [vmem:[#allocation8 + $0x40] sm:$0xff]
    %v1357 = vld [vmem:[#allocation8 + $0x48] sm:$0xff]
    %v1358 = vld [vmem:[#allocation8 + $0x50] sm:$0xff]
    %v1359 = vld [vmem:[#allocation8 + $0x58] sm:$0xff]
    %v1360 = vld [vmem:[#allocation8 + $0x60] sm:$0xff]
    %v1361 = vld [vmem:[#allocation8 + $0x68] sm:$0xff]
    %v1362 = vld [vmem:[#allocation8 + $0x70] sm:$0xff]
    %v1363 = vld [vmem:[#allocation8 + $0x78] sm:$0xff]
    %v1364 = vld [vmem:[#allocation8 + $0x80] sm:$0xff]
    %v1365 = vld [vmem:[#allocation8 + $0x88] sm:$0xff]
    %v1366 = vld [vmem:[#allocation8 + $0x90] sm:$0xff]
    %v1367 = vld [vmem:[#allocation8 + $0x98] sm:$0xff]
    %v1368 = vld [vmem:[#allocation8 + $0xa0] sm:$0xff]
    %v1369 = vld [vmem:[#allocation8 + $0xa8] sm:$0xff]
    %v1370 = vld [vmem:[#allocation8 + $0xb0] sm:$0xff]
    %v1371 = vld [vmem:[#allocation8 + $0xb8] sm:$0xff]
    %v1372 = vld [vmem:[#allocation8 + $0xc0] sm:$0xff]
    %v1373 = vld [vmem:[#allocation8 + $0xc8] sm:$0xff]
    %v1374 = vld [vmem:[#allocation8 + $0xd0] sm:$0xff]
    %v1375 = vld [vmem:[#allocation8 + $0xd8] sm:$0xff]
    %v1376 = vld [vmem:[#allocation8 + $0xe0] sm:$0xff]
    %v1377 = vld [vmem:[#allocation8 + $0xe8] sm:$0xff]
    %v1378 = vld [vmem:[#allocation8 + $0xf0] sm:$0xff]
    %v1379 = vld [vmem:[#allocation8 + $0xf8] sm:$0xff]
    %v1380 = vld [vmem:[%s13] sm:$0xf]
    %v1382 = vlaneseq
    %v1383 = vshrl.u32 %v1382, 7
    %v1384 = vsub.s32 0, %v1383
    %v1385 = vrot.slane %v1380, %v1384
    %v1386 = vlaneseq
    %v1387 = vshrl.u32 %v1386, 7
    %v1388 = vsub.s32 1, %v1387
    %v1389 = vrot.slane %v1380, %v1388
    %v1390 = vlaneseq
    %v1391 = vshrl.u32 %v1390, 7
    %v1392 = vsub.s32 2, %v1391
    %v1393 = vrot.slane %v1380, %v1392
    %v1394 = vlaneseq
    %v1395 = vshrl.u32 %v1394, 7
    %v1396 = vsub.s32 3, %v1395
    %v1397 = vrot.slane %v1380, %v1396
    %v1434 = vunpack.c.l.b16 %v1348
    %v1435 = vunpack.c.h.b16 %v1348
    %v1436 = vunpack.c.l.b16 %v1349
    %v1437 = vunpack.c.h.b16 %v1349
    %v1438 = vunpack.c.l.b16 %v1350
    %v1439 = vunpack.c.h.b16 %v1350
    %v1440 = vunpack.c.l.b16 %v1351
    %v1441 = vunpack.c.h.b16 %v1351
    %v1442 = vunpack.c.l.b16 %v1352
    %v1443 = vunpack.c.h.b16 %v1352
    %v1444 = vunpack.c.l.b16 %v1353
    %v1445 = vunpack.c.h.b16 %v1353
    %v1446 = vunpack.c.l.b16 %v1354
    %v1447 = vunpack.c.h.b16 %v1354
    %v1448 = vunpack.c.l.b16 %v1355
    %v1449 = vunpack.c.h.b16 %v1355
    %v1450 = vunpack.c.l.b16 %v1356
    %v1451 = vunpack.c.h.b16 %v1356
    %v1452 = vunpack.c.l.b16 %v1357
    %v1453 = vunpack.c.h.b16 %v1357
    %v1454 = vunpack.c.l.b16 %v1358
    %v1455 = vunpack.c.h.b16 %v1358
    %v1456 = vunpack.c.l.b16 %v1359
    %v1457 = vunpack.c.h.b16 %v1359
    %v1458 = vunpack.c.l.b16 %v1360
    %v1459 = vunpack.c.h.b16 %v1360
    %v1460 = vunpack.c.l.b16 %v1361
    %v1461 = vunpack.c.h.b16 %v1361
    %v1462 = vunpack.c.l.b16 %v1362
    %v1463 = vunpack.c.h.b16 %v1362
    %v1464 = vunpack.c.l.b16 %v1363
    %v1465 = vunpack.c.h.b16 %v1363
    %v1466 = vunpack.c.l.b16 %v1364
    %v1467 = vunpack.c.h.b16 %v1364
    %v1468 = vunpack.c.l.b16 %v1365
    %v1469 = vunpack.c.h.b16 %v1365
    %v1470 = vunpack.c.l.b16 %v1366
    %v1471 = vunpack.c.h.b16 %v1366
    %v1472 = vunpack.c.l.b16 %v1367
    %v1473 = vunpack.c.h.b16 %v1367
    %v1474 = vunpack.c.l.b16 %v1368
    %v1475 = vunpack.c.h.b16 %v1368
    %v1476 = vunpack.c.l.b16 %v1369
    %v1477 = vunpack.c.h.b16 %v1369
    %v1478 = vunpack.c.l.b16 %v1370
    %v1479 = vunpack.c.h.b16 %v1370
    %v1480 = vunpack.c.l.b16 %v1371
    %v1481 = vunpack.c.h.b16 %v1371
    %v1482 = vunpack.c.l.b16 %v1372
    %v1483 = vunpack.c.h.b16 %v1372
    %v1484 = vunpack.c.l.b16 %v1373
    %v1485 = vunpack.c.h.b16 %v1373
    %v1486 = vunpack.c.l.b16 %v1374
    %v1487 = vunpack.c.h.b16 %v1374
    %v1488 = vunpack.c.l.b16 %v1375
    %v1489 = vunpack.c.h.b16 %v1375
    %v1490 = vunpack.c.l.b16 %v1376
    %v1491 = vunpack.c.h.b16 %v1376
    %v1492 = vunpack.c.l.b16 %v1377
    %v1493 = vunpack.c.h.b16 %v1377
    %v1494 = vunpack.c.l.b16 %v1378
    %v1495 = vunpack.c.h.b16 %v1378
    %v1496 = vunpack.c.l.b16 %v1379
    %v1497 = vunpack.c.h.b16 %v1379
    %v1498 = vpack.c.b16 %v1438, %v1434
    %v1499 = vpack.c.b16 %v1439, %v1435
    %v1500 = vpack.c.b16 %v1440, %v1436
    %v1501 = vpack.c.b16 %v1441, %v1437
    %v1502 = vpack.c.b16 %v1446, %v1442
    %v1503 = vpack.c.b16 %v1447, %v1443
    %v1504 = vpack.c.b16 %v1448, %v1444
    %v1505 = vpack.c.b16 %v1449, %v1445
    %v1506 = vpack.c.b16 %v1454, %v1450
    %v1507 = vpack.c.b16 %v1455, %v1451
    %v1508 = vpack.c.b16 %v1456, %v1452
    %v1509 = vpack.c.b16 %v1457, %v1453
    %v1510 = vpack.c.b16 %v1462, %v1458
    %v1511 = vpack.c.b16 %v1463, %v1459
    %v1512 = vpack.c.b16 %v1464, %v1460
    %v1513 = vpack.c.b16 %v1465, %v1461
    %v1514 = vpack.c.b16 %v1470, %v1466
    %v1515 = vpack.c.b16 %v1471, %v1467
    %v1516 = vpack.c.b16 %v1472, %v1468
    %v1517 = vpack.c.b16 %v1473, %v1469
    %v1518 = vpack.c.b16 %v1478, %v1474
    %v1519 = vpack.c.b16 %v1479, %v1475
    %v1520 = vpack.c.b16 %v1480, %v1476
    %v1521 = vpack.c.b16 %v1481, %v1477
    %v1522 = vpack.c.b16 %v1486, %v1482
    %v1523 = vpack.c.b16 %v1487, %v1483
    %v1524 = vpack.c.b16 %v1488, %v1484
    %v1525 = vpack.c.b16 %v1489, %v1485
    %v1526 = vpack.c.b16 %v1494, %v1490
    %v1527 = vpack.c.b16 %v1495, %v1491
    %v1528 = vpack.c.b16 %v1496, %v1492
    %v1529 = vpack.c.b16 %v1497, %v1493
    %1562 = vmatprep.subr.bf16.mxu0 %v1499
    %1563 = vmatpush1.bf16.msra.mxu0 %v1498
    %1564 = vmatprep.subr.bf16.mxu0 %v1503
    %1565 = vmatpush1.bf16.msra.mxu0 %v1502
    %1566 = vmatprep.subr.bf16.mxu0 %v1507
    %1567 = vmatpush1.bf16.msra.mxu0 %v1506
    %1568 = vmatprep.subr.bf16.mxu0 %v1511
    %1569 = vmatpush1.bf16.msra.mxu0 %v1510
    %1570 = vmatprep.subr.bf16.mxu0 %v1515
    %1571 = vmatpush1.bf16.msra.mxu0 %v1514
    %1572 = vmatprep.subr.bf16.mxu0 %v1519
    %1573 = vmatpush1.bf16.msra.mxu0 %v1518
    %1574 = vmatprep.subr.bf16.mxu0 %v1523
    %1575 = vmatpush1.bf16.msra.mxu0 %v1522
    %1576 = vmatprep.subr.bf16.mxu0 %v1527
    %1577 = vmatpush1.bf16.msra.mxu0 %v1526
    %1578 = vmatprep.subr.bf16.mxu0 0
    %1579 = vmatpush1.bf16.msra.mxu0 0
    %1580 = vmatprep.subr.bf16.mxu0 0
    %1581 = vmatpush1.bf16.msra.mxu0 0
    %1582 = vmatprep.subr.bf16.mxu0 0
    %1583 = vmatpush1.bf16.msra.mxu0 0
    %1584 = vmatprep.subr.bf16.mxu0 0
    %1585 = vmatpush1.bf16.msra.mxu0 0
    %1586 = vmatprep.subr.bf16.mxu0 0
    %1587 = vmatpush1.bf16.msra.mxu0 0
    %1588 = vmatprep.subr.bf16.mxu0 0
    %1589 = vmatpush1.bf16.msra.mxu0 0
    %1590 = vmatprep.subr.bf16.mxu0 0
    %1591 = vmatpush1.bf16.msra.mxu0 0
    %1592 = vmatprep.subr.bf16.mxu0 0
    %1593 = vmatpush1.bf16.msra.mxu0 0
    %1594 = vmatprep.mubr.bf16.mxu0 0
    %1595 = vmatmul.mubr.bf16.gmra.mrb[0].mxu0 %v1347
    %v1596 = vpop.f32.mrb[0].mxu0
    %v1597 = vadd.f32 %v1385, %v1596
    %v1598 = vpop.f32.mrb[0].mxu0
    %v1599 = vadd.f32 %v1389, %v1598
    %v1600 = vpop.f32.mrb[0].mxu0
    %v1601 = vadd.f32 %v1385, %v1600
    %v1602 = vpop.f32.mrb[0].mxu0
    %v1603 = vadd.f32 %v1389, %v1602
    %1604 = vdwg.mxu0
    %1605 = vmatprep.subr.bf16.mxu0 %v1501
    %1606 = vmatpush1.bf16.msra.mxu0 %v1500
    %1607 = vmatprep.subr.bf16.mxu0 %v1505
    %1608 = vmatpush1.bf16.msra.mxu0 %v1504
    %1609 = vmatprep.subr.bf16.mxu0 %v1509
    %1610 = vmatpush1.bf16.msra.mxu0 %v1508
    %1611 = vmatprep.subr.bf16.mxu0 %v1513
    %1612 = vmatpush1.bf16.msra.mxu0 %v1512
    %1613 = vmatprep.subr.bf16.mxu0 %v1517
    %1614 = vmatpush1.bf16.msra.mxu0 %v1516
    %1615 = vmatprep.subr.bf16.mxu0 %v1521
    %1616 = vmatpush1.bf16.msra.mxu0 %v1520
    %1617 = vmatprep.subr.bf16.mxu0 %v1525
    %1618 = vmatpush1.bf16.msra.mxu0 %v1524
    %1619 = vmatprep.subr.bf16.mxu0 %v1529
    %1620 = vmatpush1.bf16.msra.mxu0 %v1528
    %1621 = vmatprep.subr.bf16.mxu0 0
    %1622 = vmatpush1.bf16.msra.mxu0 0
    %1623 = vmatprep.subr.bf16.mxu0 0
    %1624 = vmatpush1.bf16.msra.mxu0 0
    %1625 = vmatprep.subr.bf16.mxu0 0
    %1626 = vmatpush1.bf16.msra.mxu0 0
    %1627 = vmatprep.subr.bf16.mxu0 0
    %1628 = vmatpush1.bf16.msra.mxu0 0
    %1629 = vmatprep.subr.bf16.mxu0 0
    %1630 = vmatpush1.bf16.msra.mxu0 0
    %1631 = vmatprep.subr.bf16.mxu0 0
    %1632 = vmatpush1.bf16.msra.mxu0 0
    %1633 = vmatprep.subr.bf16.mxu0 0
    %1634 = vmatpush1.bf16.msra.mxu0 0
    %1635 = vmatprep.subr.bf16.mxu0 0
    %1636 = vmatpush1.bf16.msra.mxu0 0
    %1637 = vmatprep.mubr.bf16.mxu0 0
    %1638 = vmatmul.mubr.bf16.gmra.mrb[0].mxu0 %v1347
    %v1639 = vpop.f32.mrb[0].mxu0
    %v1640 = vadd.f32 %v1393, %v1639
    %v1641 = vpop.f32.mrb[0].mxu0
    %v1642 = vadd.f32 %v1397, %v1641
    %v1643 = vpop.f32.mrb[0].mxu0
    %v1644 = vadd.f32 %v1393, %v1643
    %v1645 = vpop.f32.mrb[0].mxu0
    %v1646 = vadd.f32 %v1397, %v1645
    %1647 = vdwg.mxu0
    %v1648 = vmax.f32 %v1597, 0.0
    %v1649 = vmax.f32 %v1599, 0.0
    %v1650 = vmax.f32 %v1640, 0.0
    %v1651 = vmax.f32 %v1642, 0.0
    %v1652 = vmax.f32 %v1601, 0.0
    %v1653 = vmax.f32 %v1603, 0.0
    %v1654 = vmax.f32 %v1644, 0.0
    %v1655 = vmax.f32 %v1646, 0.0
    %v1656 = vpack.c.bf16 %v1652, %v1648
    %v1657 = vpack.c.bf16 %v1653, %v1649
    %v1658 = vpack.c.bf16 %v1654, %v1650
    %v1659 = vpack.c.bf16 %v1655, %v1651
    %v1660 = vld [vmem:[#allocation10] sm:$0xf]
    %v1661 = vld [vmem:[#allocation10 + $0x4] sm:$0xf]
    %v1662 = vld [vmem:[#allocation10 + $0x8] sm:$0xf]
    %v1663 = vld [vmem:[#allocation10 + $0xc] sm:$0xf]
    %v1664 = vld [vmem:[#allocation10 + $0x10] sm:$0xf]
    %v1665 = vld [vmem:[#allocation10 + $0x14] sm:$0xf]
    %v1666 = vld [vmem:[#allocation10 + $0x18] sm:$0xf]
    %v1667 = vld [vmem:[#allocation10 + $0x1c] sm:$0xf]
    %v1668 = vld [vmem:[#allocation10 + $0x20] sm:$0xf]
    %v1669 = vld [vmem:[#allocation10 + $0x24] sm:$0xf]
    %v1670 = vld [vmem:[#allocation10 + $0x28] sm:$0xf]
    %v1671 = vld [vmem:[#allocation10 + $0x2c] sm:$0xf]
    %v1672 = vld [vmem:[#allocation10 + $0x30] sm:$0xf]
    %v1673 = vld [vmem:[#allocation10 + $0x34] sm:$0xf]
    %v1674 = vld [vmem:[#allocation10 + $0x38] sm:$0xf]
    %v1675 = vld [vmem:[#allocation10 + $0x3c] sm:$0xf]
    %v1676 = vld [vmem:[#allocation10 + $0x40] sm:$0xf]
    %v1677 = vld [vmem:[#allocation10 + $0x44] sm:$0xf]
    %v1678 = vld [vmem:[#allocation10 + $0x48] sm:$0xf]
    %v1679 = vld [vmem:[#allocation10 + $0x4c] sm:$0xf]
    %v1680 = vld [vmem:[#allocation10 + $0x50] sm:$0xf]
    %v1681 = vld [vmem:[#allocation10 + $0x54] sm:$0xf]
    %v1682 = vld [vmem:[#allocation10 + $0x58] sm:$0xf]
    %v1683 = vld [vmem:[#allocation10 + $0x5c] sm:$0xf]
    %v1684 = vld [vmem:[#allocation10 + $0x60] sm:$0xf]
    %v1685 = vld [vmem:[#allocation10 + $0x64] sm:$0xf]
    %v1686 = vld [vmem:[#allocation10 + $0x68] sm:$0xf]
    %v1687 = vld [vmem:[#allocation10 + $0x6c] sm:$0xf]
    %v1688 = vld [vmem:[#allocation10 + $0x70] sm:$0xf]
    %v1689 = vld [vmem:[#allocation10 + $0x74] sm:$0xf]
    %v1690 = vld [vmem:[#allocation10 + $0x78] sm:$0xf]
    %v1691 = vld [vmem:[#allocation10 + $0x7c] sm:$0xf]
    %v1692 = vld [vmem:[#allocation10 + $0x80] sm:$0xf]
    %v1693 = vld [vmem:[#allocation10 + $0x84] sm:$0xf]
    %v1694 = vld [vmem:[#allocation10 + $0x88] sm:$0xf]
    %v1695 = vld [vmem:[#allocation10 + $0x8c] sm:$0xf]
    %v1696 = vld [vmem:[#allocation10 + $0x90] sm:$0xf]
    %v1697 = vld [vmem:[#allocation10 + $0x94] sm:$0xf]
    %v1698 = vld [vmem:[#allocation10 + $0x98] sm:$0xf]
    %v1699 = vld [vmem:[#allocation10 + $0x9c] sm:$0xf]
    %v1700 = vld [vmem:[#allocation10 + $0xa0] sm:$0xf]
    %v1701 = vld [vmem:[#allocation10 + $0xa4] sm:$0xf]
    %v1702 = vld [vmem:[#allocation10 + $0xa8] sm:$0xf]
    %v1703 = vld [vmem:[#allocation10 + $0xac] sm:$0xf]
    %v1704 = vld [vmem:[#allocation10 + $0xb0] sm:$0xf]
    %v1705 = vld [vmem:[#allocation10 + $0xb4] sm:$0xf]
    %v1706 = vld [vmem:[#allocation10 + $0xb8] sm:$0xf]
    %v1707 = vld [vmem:[#allocation10 + $0xbc] sm:$0xf]
    %v1708 = vld [vmem:[#allocation10 + $0xc0] sm:$0xf]
    %v1709 = vld [vmem:[#allocation10 + $0xc4] sm:$0xf]
    %v1710 = vld [vmem:[#allocation10 + $0xc8] sm:$0xf]
    %v1711 = vld [vmem:[#allocation10 + $0xcc] sm:$0xf]
    %v1712 = vld [vmem:[#allocation10 + $0xd0] sm:$0xf]
    %v1713 = vld [vmem:[#allocation10 + $0xd4] sm:$0xf]
    %v1714 = vld [vmem:[#allocation10 + $0xd8] sm:$0xf]
    %v1715 = vld [vmem:[#allocation10 + $0xdc] sm:$0xf]
    %v1716 = vld [vmem:[#allocation10 + $0xe0] sm:$0xf]
    %v1717 = vld [vmem:[#allocation10 + $0xe4] sm:$0xf]
    %v1718 = vld [vmem:[#allocation10 + $0xe8] sm:$0xf]
    %v1719 = vld [vmem:[#allocation10 + $0xec] sm:$0xf]
    %v1720 = vld [vmem:[#allocation10 + $0xf0] sm:$0xf]
    %v1721 = vld [vmem:[#allocation10 + $0xf4] sm:$0xf]
    %v1722 = vld [vmem:[#allocation10 + $0xf8] sm:$0xf]
    %v1723 = vld [vmem:[#allocation10 + $0xfc] sm:$0xf]
    %v1724 = vld [vmem:[%s15] sm:$0x1]
    %v1726 = vlaneseq
    %v1727 = vshrl.u32 %v1726, 7
    %v1728 = vsub.s32 0, %v1727
    %v1729 = vrot.slane %v1724, %v1728
    %v1795 = vunpack.c.l.b16 %v1660
    %v1796 = vunpack.c.l.b16 %v1661
    %v1797 = vunpack.c.l.b16 %v1662
    %v1798 = vunpack.c.l.b16 %v1663
    %v1799 = vunpack.c.l.b16 %v1664
    %v1800 = vunpack.c.l.b16 %v1665
    %v1801 = vunpack.c.l.b16 %v1666
    %v1802 = vunpack.c.l.b16 %v1667
    %v1803 = vunpack.c.l.b16 %v1668
    %v1804 = vunpack.c.l.b16 %v1669
    %v1805 = vunpack.c.l.b16 %v1670
    %v1806 = vunpack.c.l.b16 %v1671
    %v1807 = vunpack.c.l.b16 %v1672
    %v1808 = vunpack.c.l.b16 %v1673
    %v1809 = vunpack.c.l.b16 %v1674
    %v1810 = vunpack.c.l.b16 %v1675
    %v1811 = vunpack.c.l.b16 %v1676
    %v1812 = vunpack.c.l.b16 %v1677
    %v1813 = vunpack.c.l.b16 %v1678
    %v1814 = vunpack.c.l.b16 %v1679
    %v1815 = vunpack.c.l.b16 %v1680
    %v1816 = vunpack.c.l.b16 %v1681
    %v1817 = vunpack.c.l.b16 %v1682
    %v1818 = vunpack.c.l.b16 %v1683
    %v1819 = vunpack.c.l.b16 %v1684
    %v1820 = vunpack.c.l.b16 %v1685
    %v1821 = vunpack.c.l.b16 %v1686
    %v1822 = vunpack.c.l.b16 %v1687
    %v1823 = vunpack.c.l.b16 %v1688
    %v1824 = vunpack.c.l.b16 %v1689
    %v1825 = vunpack.c.l.b16 %v1690
    %v1826 = vunpack.c.l.b16 %v1691
    %v1827 = vunpack.c.l.b16 %v1692
    %v1828 = vunpack.c.l.b16 %v1693
    %v1829 = vunpack.c.l.b16 %v1694
    %v1830 = vunpack.c.l.b16 %v1695
    %v1831 = vunpack.c.l.b16 %v1696
    %v1832 = vunpack.c.l.b16 %v1697
    %v1833 = vunpack.c.l.b16 %v1698
    %v1834 = vunpack.c.l.b16 %v1699
    %v1835 = vunpack.c.l.b16 %v1700
    %v1836 = vunpack.c.l.b16 %v1701
    %v1837 = vunpack.c.l.b16 %v1702
    %v1838 = vunpack.c.l.b16 %v1703
    %v1839 = vunpack.c.l.b16 %v1704
    %v1840 = vunpack.c.l.b16 %v1705
    %v1841 = vunpack.c.l.b16 %v1706
    %v1842 = vunpack.c.l.b16 %v1707
    %v1843 = vunpack.c.l.b16 %v1708
    %v1844 = vunpack.c.l.b16 %v1709
    %v1845 = vunpack.c.l.b16 %v1710
    %v1846 = vunpack.c.l.b16 %v1711
    %v1847 = vunpack.c.l.b16 %v1712
    %v1848 = vunpack.c.l.b16 %v1713
    %v1849 = vunpack.c.l.b16 %v1714
    %v1850 = vunpack.c.l.b16 %v1715
    %v1851 = vunpack.c.l.b16 %v1716
    %v1852 = vunpack.c.l.b16 %v1717
    %v1853 = vunpack.c.l.b16 %v1718
    %v1854 = vunpack.c.l.b16 %v1719
    %v1855 = vunpack.c.l.b16 %v1720
    %v1856 = vunpack.c.l.b16 %v1721
    %v1857 = vunpack.c.l.b16 %v1722
    %v1858 = vunpack.c.l.b16 %v1723
    %v1859 = vpack.c.b16 %v1796, %v1795
    %v1860 = vpack.c.b16 %v1798, %v1797
    %v1861 = vpack.c.b16 %v1800, %v1799
    %v1862 = vpack.c.b16 %v1802, %v1801
    %v1863 = vpack.c.b16 %v1804, %v1803
    %v1864 = vpack.c.b16 %v1806, %v1805
    %v1865 = vpack.c.b16 %v1808, %v1807
    %v1866 = vpack.c.b16 %v1810, %v1809
    %v1867 = vpack.c.b16 %v1812, %v1811
    %v1868 = vpack.c.b16 %v1814, %v1813
    %v1869 = vpack.c.b16 %v1816, %v1815
    %v1870 = vpack.c.b16 %v1818, %v1817
    %v1871 = vpack.c.b16 %v1820, %v1819
    %v1872 = vpack.c.b16 %v1822, %v1821
    %v1873 = vpack.c.b16 %v1824, %v1823
    %v1874 = vpack.c.b16 %v1826, %v1825
    %v1875 = vpack.c.b16 %v1828, %v1827
    %v1876 = vpack.c.b16 %v1830, %v1829
    %v1877 = vpack.c.b16 %v1832, %v1831
    %v1878 = vpack.c.b16 %v1834, %v1833
    %v1879 = vpack.c.b16 %v1836, %v1835
    %v1880 = vpack.c.b16 %v1838, %v1837
    %v1881 = vpack.c.b16 %v1840, %v1839
    %v1882 = vpack.c.b16 %v1842, %v1841
    %v1883 = vpack.c.b16 %v1844, %v1843
    %v1884 = vpack.c.b16 %v1846, %v1845
    %v1885 = vpack.c.b16 %v1848, %v1847
    %v1886 = vpack.c.b16 %v1850, %v1849
    %v1887 = vpack.c.b16 %v1852, %v1851
    %v1888 = vpack.c.b16 %v1854, %v1853
    %v1889 = vpack.c.b16 %v1856, %v1855
    %v1890 = vpack.c.b16 %v1858, %v1857
    %1923 = vmatprep.subr.bf16.mxu0 0
    %1924 = vmatpush1.bf16.msra.mxu0 %v1859
    %1925 = vmatprep.subr.bf16.mxu0 0
    %1926 = vmatpush1.bf16.msra.mxu0 %v1860
    %1927 = vmatprep.subr.bf16.mxu0 0
    %1928 = vmatpush1.bf16.msra.mxu0 %v1861
    %1929 = vmatprep.subr.bf16.mxu0 0
    %1930 = vmatpush1.bf16.msra.mxu0 %v1862
    %1931 = vmatprep.subr.bf16.mxu0 0
    %1932 = vmatpush1.bf16.msra.mxu0 %v1863
    %1933 = vmatprep.subr.bf16.mxu0 0
    %1934 = vmatpush1.bf16.msra.mxu0 %v1864
    %1935 = vmatprep.subr.bf16.mxu0 0
    %1936 = vmatpush1.bf16.msra.mxu0 %v1865
    %1937 = vmatprep.subr.bf16.mxu0 0
    %1938 = vmatpush1.bf16.msra.mxu0 %v1866
    %1939 = vmatprep.subr.bf16.mxu0 0
    %1940 = vmatpush1.bf16.msra.mxu0 %v1867
    %1941 = vmatprep.subr.bf16.mxu0 0
    %1942 = vmatpush1.bf16.msra.mxu0 %v1868
    %1943 = vmatprep.subr.bf16.mxu0 0
    %1944 = vmatpush1.bf16.msra.mxu0 %v1869
    %1945 = vmatprep.subr.bf16.mxu0 0
    %1946 = vmatpush1.bf16.msra.mxu0 %v1870
    %1947 = vmatprep.subr.bf16.mxu0 0
    %1948 = vmatpush1.bf16.msra.mxu0 %v1871
    %1949 = vmatprep.subr.bf16.mxu0 0
    %1950 = vmatpush1.bf16.msra.mxu0 %v1872
    %1951 = vmatprep.subr.bf16.mxu0 0
    %1952 = vmatpush1.bf16.msra.mxu0 %v1873
    %1953 = vmatprep.subr.bf16.mxu0 0
    %1954 = vmatpush1.bf16.msra.mxu0 %v1874
    %1955 = vmatprep.mubr.bf16.mxu0 %v1657
    %1956 = vmatmul.mubr.bf16.gmra.mrb[0].mxu0 %v1656
    %v1957 = vpop.f32.mrb[0].mxu0
    %v1958 = vadd.f32 %v1729, %v1957
    %v1959 = vpop.f32.mrb[0].mxu0
    %v1960 = vpop.f32.mrb[0].mxu0
    %v1961 = vadd.f32 %v1729, %v1960
    %v1962 = vpop.f32.mrb[0].mxu0
    %1963 = vdwg.mxu0
    %1964 = vmatprep.subr.bf16.mxu0 0
    %1965 = vmatpush1.bf16.msra.mxu0 %v1875
    %1966 = vmatprep.subr.bf16.mxu0 0
    %1967 = vmatpush1.bf16.msra.mxu0 %v1876
    %1968 = vmatprep.subr.bf16.mxu0 0
    %1969 = vmatpush1.bf16.msra.mxu0 %v1877
    %1970 = vmatprep.subr.bf16.mxu0 0
    %1971 = vmatpush1.bf16.msra.mxu0 %v1878
    %1972 = vmatprep.subr.bf16.mxu0 0
    %1973 = vmatpush1.bf16.msra.mxu0 %v1879
    %1974 = vmatprep.subr.bf16.mxu0 0
    %1975 = vmatpush1.bf16.msra.mxu0 %v1880
    %1976 = vmatprep.subr.bf16.mxu0 0
    %1977 = vmatpush1.bf16.msra.mxu0 %v1881
    %1978 = vmatprep.subr.bf16.mxu0 0
    %1979 = vmatpush1.bf16.msra.mxu0 %v1882
    %1980 = vmatprep.subr.bf16.mxu0 0
    %1981 = vmatpush1.bf16.msra.mxu0 %v1883
    %1982 = vmatprep.subr.bf16.mxu0 0
    %1983 = vmatpush1.bf16.msra.mxu0 %v1884
    %1984 = vmatprep.subr.bf16.mxu0 0
    %1985 = vmatpush1.bf16.msra.mxu0 %v1885
    %1986 = vmatprep.subr.bf16.mxu0 0
    %1987 = vmatpush1.bf16.msra.mxu0 %v1886
    %1988 = vmatprep.subr.bf16.mxu0 0
    %1989 = vmatpush1.bf16.msra.mxu0 %v1887
    %1990 = vmatprep.subr.bf16.mxu0 0
    %1991 = vmatpush1.bf16.msra.mxu0 %v1888
    %1992 = vmatprep.subr.bf16.mxu0 0
    %1993 = vmatpush1.bf16.msra.mxu0 %v1889
    %1994 = vmatprep.subr.bf16.mxu0 0
    %1995 = vmatpush1.bf16.msra.mxu0 %v1890
    %1996 = vmatprep.mubr.bf16.mxu0 %v1659
    %1997 = vmatmul.mubr.bf16.gmra.mrb[0].mxu0 %v1658
    %v1998 = vpop.f32.mrb[0].mxu0
    %v1999 = vadd.f32 %v1958, %v1998
    %v2000 = vpop.f32.mrb[0].mxu0
    %v2001 = vpop.f32.mrb[0].mxu0
    %v2002 = vadd.f32 %v1961, %v2001
    %v2003 = vpop.f32.mrb[0].mxu0
    %2004 = vdwg.mxu0
    %v2005 = vadd.f32 %v1999, %v1345
    %v2006 = vadd.f32 %v2002, %v1346
    %2007 = vadd.xlane.f32.xlu0 %v2005
    %v2008 = vpop.xlane.xlu0 %2007
    %2009 = vadd.xlane.f32.xlu0 %v2006
    %v2010 = vpop.xlane.xlu0 %2009
    %v2011 = vmul.f32 %v2008, %v1310
    %v2012 = vmul.f32 %v2010, %v1310
    %v2013 = vsub.f32 %v2005, %v2011
    %v2014 = vsub.f32 %v2006, %v2012
    %v2015 = vmul.f32 %v2013, %v2013
    %v2016 = vmul.f32 %v2014, %v2014
    %2017 = vadd.xlane.f32.xlu0 %v2015
    %v2018 = vpop.xlane.xlu0 %2017
    %2019 = vadd.xlane.f32.xlu0 %v2016
    %v2020 = vpop.xlane.xlu0 %2019
    %v2021 = vmul.f32 %v2018, %v1310
    %v2022 = vmul.f32 %v2020, %v1310
    %v2023 = vadd.f32 %v2021, 1e-05
    %v2024 = vadd.f32 %v2022, 1e-05
    %v2025 = vrsqrt.pop %v2023
    %v2026 = vrsqrt.pop %v2024
    %v2027 = vmul.f32 %v2013, %v2025
    %v2028 = vmul.f32 %v2014, %v2026
    %v2029 = vld [vmem:[%s16] sm:$0x1]
    %v2031 = vlaneseq
    %v2032 = vshrl.u32 %v2031, 7
    %v2033 = vsub.s32 0, %v2032
    %v2034 = vrot.slane %v2029, %v2033
    %v2036 = vmul.f32 %v2027, %v2034
    %v2037 = vmul.f32 %v2028, %v2034
    %v2038 = vld [vmem:[%s17] sm:$0x1]
    %v2040 = vlaneseq
    %v2041 = vshrl.u32 %v2040, 7
    %v2042 = vsub.s32 0, %v2041
    %v2043 = vrot.slane %v2038, %v2042
    %v2045 = vadd.f32 %v2036, %v2043
    %v2046 = vadd.f32 %v2037, %v2043
    %v2047 = vpack.c.bf16 %v2046, %v2045
    %s2048 = scalar_lea.vmem %s5, 64
    %v2049 = vld [vmem:[%s2048] sm:$0xf]
    %v2050 = vld [vmem:[%s2048 + $0x4] sm:$0xf]
    %v2051 = vld [vmem:[%s2048 + $0x8] sm:$0xf]
    %v2052 = vld [vmem:[%s2048 + $0xc] sm:$0xf]
    %v2053 = vld [vmem:[%s2048 + $0x10] sm:$0xf]
    %v2054 = vld [vmem:[%s2048 + $0x14] sm:$0xf]
    %v2055 = vld [vmem:[%s2048 + $0x18] sm:$0xf]
    %v2056 = vld [vmem:[%s2048 + $0x1c] sm:$0xf]
    %v2057 = vld [vmem:[%s2048 + $0x20] sm:$0xf]
    %v2058 = vld [vmem:[%s2048 + $0x24] sm:$0xf]
    %v2059 = vld [vmem:[%s2048 + $0x28] sm:$0xf]
    %v2060 = vld [vmem:[%s2048 + $0x2c] sm:$0xf]
    %v2061 = vld [vmem:[%s2048 + $0x30] sm:$0xf]
    %v2062 = vld [vmem:[%s2048 + $0x34] sm:$0xf]
    %v2063 = vld [vmem:[%s2048 + $0x38] sm:$0xf]
    %v2064 = vld [vmem:[%s2048 + $0x3c] sm:$0xf]
    %v2081 = vunpack.c.l.b16 %v2049
    %v2082 = vunpack.c.l.b16 %v2050
    %v2083 = vunpack.c.l.b16 %v2051
    %v2084 = vunpack.c.l.b16 %v2052
    %v2085 = vunpack.c.l.b16 %v2053
    %v2086 = vunpack.c.l.b16 %v2054
    %v2087 = vunpack.c.l.b16 %v2055
    %v2088 = vunpack.c.l.b16 %v2056
    %v2089 = vunpack.c.l.b16 %v2057
    %v2090 = vunpack.c.l.b16 %v2058
    %v2091 = vunpack.c.l.b16 %v2059
    %v2092 = vunpack.c.l.b16 %v2060
    %v2093 = vunpack.c.l.b16 %v2061
    %v2094 = vunpack.c.l.b16 %v2062
    %v2095 = vunpack.c.l.b16 %v2063
    %v2096 = vunpack.c.l.b16 %v2064
    %v2097 = vpack.c.b16 %v2082, %v2081
    %v2098 = vpack.c.b16 %v2084, %v2083
    %v2099 = vpack.c.b16 %v2086, %v2085
    %v2100 = vpack.c.b16 %v2088, %v2087
    %v2101 = vpack.c.b16 %v2090, %v2089
    %v2102 = vpack.c.b16 %v2092, %v2091
    %v2103 = vpack.c.b16 %v2094, %v2093
    %v2104 = vpack.c.b16 %v2096, %v2095
    %2113 = vmatprep.subr.bf16.mxu0 0
    %2114 = vmatpush1.bf16.msra.mxu0 %v2097
    %2115 = vmatprep.subr.bf16.mxu0 0
    %2116 = vmatpush1.bf16.msra.mxu0 %v2098
    %2117 = vmatprep.subr.bf16.mxu0 0
    %2118 = vmatpush1.bf16.msra.mxu0 %v2099
    %2119 = vmatprep.subr.bf16.mxu0 0
    %2120 = vmatpush1.bf16.msra.mxu0 %v2100
    %2121 = vmatprep.subr.bf16.mxu0 0
    %2122 = vmatpush1.bf16.msra.mxu0 %v2101
    %2123 = vmatprep.subr.bf16.mxu0 0
    %2124 = vmatpush1.bf16.msra.mxu0 %v2102
    %2125 = vmatprep.subr.bf16.mxu0 0
    %2126 = vmatpush1.bf16.msra.mxu0 %v2103
    %2127 = vmatprep.subr.bf16.mxu0 0
    %2128 = vmatpush1.bf16.msra.mxu0 %v2104
    %2129 = vmatprep.subr.bf16.mxu0 0
    %2130 = vmatpush1.bf16.msra.mxu0 0
    %2131 = vmatprep.subr.bf16.mxu0 0
    %2132 = vmatpush1.bf16.msra.mxu0 0
    %2133 = vmatprep.subr.bf16.mxu0 0
    %2134 = vmatpush1.bf16.msra.mxu0 0
    %2135 = vmatprep.subr.bf16.mxu0 0
    %2136 = vmatpush1.bf16.msra.mxu0 0
    %2137 = vmatprep.subr.bf16.mxu0 0
    %2138 = vmatpush1.bf16.msra.mxu0 0
    %2139 = vmatprep.subr.bf16.mxu0 0
    %2140 = vmatpush1.bf16.msra.mxu0 0
    %2141 = vmatprep.subr.bf16.mxu0 0
    %2142 = vmatpush1.bf16.msra.mxu0 0
    %2143 = vmatprep.subr.bf16.mxu0 0
    %2144 = vmatpush1.bf16.msra.mxu0 0
    %2145 = vmatprep.mubr.bf16.mxu0 0
    %2146 = vmatmul.mubr.bf16.gmra.mrb[0].mxu0 %v2047
    %v2147 = vpop.f32.mrb[0].mxu0
    %v2148 = vadd.f32 0.0, %v2147
    %v2149 = vpop.f32.mrb[0].mxu0
    %v2150 = vpop.f32.mrb[0].mxu0
    %v2151 = vadd.f32 0.0, %v2150
    %v2152 = vpop.f32.mrb[0].mxu0
    %2153 = vdwg.mxu0
    %s2154 = scalar_lea.vmem [#allocation2], 64
    %v2155 = vld [vmem:[%s2154] sm:$0xf]
    %v2156 = vld [vmem:[%s2154 + $0x4] sm:$0xf]
    %v2157 = vld [vmem:[%s2154 + $0x8] sm:$0xf]
    %v2158 = vld [vmem:[%s2154 + $0xc] sm:$0xf]
    %v2159 = vld [vmem:[%s2154 + $0x10] sm:$0xf]
    %v2160 = vld [vmem:[%s2154 + $0x14] sm:$0xf]
    %v2161 = vld [vmem:[%s2154 + $0x18] sm:$0xf]
    %v2162 = vld [vmem:[%s2154 + $0x1c] sm:$0xf]
    %v2163 = vld [vmem:[%s2154 + $0x20] sm:$0xf]
    %v2164 = vld [vmem:[%s2154 + $0x24] sm:$0xf]
    %v2165 = vld [vmem:[%s2154 + $0x28] sm:$0xf]
    %v2166 = vld [vmem:[%s2154 + $0x2c] sm:$0xf]
    %v2167 = vld [vmem:[%s2154 + $0x30] sm:$0xf]
    %v2168 = vld [vmem:[%s2154 + $0x34] sm:$0xf]
    %v2169 = vld [vmem:[%s2154 + $0x38] sm:$0xf]
    %v2170 = vld [vmem:[%s2154 + $0x3c] sm:$0xf]
    %v2187 = vunpack.c.l.b16 %v2155
    %v2188 = vunpack.c.l.b16 %v2156
    %v2189 = vunpack.c.l.b16 %v2157
    %v2190 = vunpack.c.l.b16 %v2158
    %v2191 = vunpack.c.l.b16 %v2159
    %v2192 = vunpack.c.l.b16 %v2160
    %v2193 = vunpack.c.l.b16 %v2161
    %v2194 = vunpack.c.l.b16 %v2162
    %v2195 = vunpack.c.l.b16 %v2163
    %v2196 = vunpack.c.l.b16 %v2164
    %v2197 = vunpack.c.l.b16 %v2165
    %v2198 = vunpack.c.l.b16 %v2166
    %v2199 = vunpack.c.l.b16 %v2167
    %v2200 = vunpack.c.l.b16 %v2168
    %v2201 = vunpack.c.l.b16 %v2169
    %v2202 = vunpack.c.l.b16 %v2170
    %v2203 = vpack.c.b16 %v2188, %v2187
    %v2204 = vpack.c.b16 %v2190, %v2189
    %v2205 = vpack.c.b16 %v2192, %v2191
    %v2206 = vpack.c.b16 %v2194, %v2193
    %v2207 = vpack.c.b16 %v2196, %v2195
    %v2208 = vpack.c.b16 %v2198, %v2197
    %v2209 = vpack.c.b16 %v2200, %v2199
    %v2210 = vpack.c.b16 %v2202, %v2201
    %2219 = vmatprep.subr.bf16.mxu0 0
    %2220 = vmatpush1.bf16.msra.mxu0 %v2203
    %2221 = vmatprep.subr.bf16.mxu0 0
    %2222 = vmatpush1.bf16.msra.mxu0 %v2204
    %2223 = vmatprep.subr.bf16.mxu0 0
    %2224 = vmatpush1.bf16.msra.mxu0 %v2205
    %2225 = vmatprep.subr.bf16.mxu0 0
    %2226 = vmatpush1.bf16.msra.mxu0 %v2206
    %2227 = vmatprep.subr.bf16.mxu0 0
    %2228 = vmatpush1.bf16.msra.mxu0 %v2207
    %2229 = vmatprep.subr.bf16.mxu0 0
    %2230 = vmatpush1.bf16.msra.mxu0 %v2208
    %2231 = vmatprep.subr.bf16.mxu0 0
    %2232 = vmatpush1.bf16.msra.mxu0 %v2209
    %2233 = vmatprep.subr.bf16.mxu0 0
    %2234 = vmatpush1.bf16.msra.mxu0 %v2210
    %2235 = vmatprep.subr.bf16.mxu0 0
    %2236 = vmatpush1.bf16.msra.mxu0 0
    %2237 = vmatprep.subr.bf16.mxu0 0
    %2238 = vmatpush1.bf16.msra.mxu0 0
    %2239 = vmatprep.subr.bf16.mxu0 0
    %2240 = vmatpush1.bf16.msra.mxu0 0
    %2241 = vmatprep.subr.bf16.mxu0 0
    %2242 = vmatpush1.bf16.msra.mxu0 0
    %2243 = vmatprep.subr.bf16.mxu0 0
    %2244 = vmatpush1.bf16.msra.mxu0 0
    %2245 = vmatprep.subr.bf16.mxu0 0
    %2246 = vmatpush1.bf16.msra.mxu0 0
    %2247 = vmatprep.subr.bf16.mxu0 0
    %2248 = vmatpush1.bf16.msra.mxu0 0
    %2249 = vmatprep.subr.bf16.mxu0 0
    %2250 = vmatpush1.bf16.msra.mxu0 0
    %2251 = vmatprep.mubr.bf16.mxu0 0
    %2252 = vmatmul.mubr.bf16.gmra.mrb[0].mxu0 %v2047
    %v2253 = vpop.f32.mrb[0].mxu0
    %v2254 = vadd.f32 0.0, %v2253
    %v2255 = vpop.f32.mrb[0].mxu0
    %v2256 = vpop.f32.mrb[0].mxu0
    %v2257 = vadd.f32 0.0, %v2256
    %v2258 = vpop.f32.mrb[0].mxu0
    %2259 = vdwg.mxu0
    %s2260 = scalar_lea.vmem [#allocation5], 64
    %v2261 = vld [vmem:[%s2260] sm:$0xf]
    %v2262 = vld [vmem:[%s2260 + $0x4] sm:$0xf]
    %v2263 = vld [vmem:[%s2260 + $0x8] sm:$0xf]
    %v2264 = vld [vmem:[%s2260 + $0xc] sm:$0xf]
    %v2265 = vld [vmem:[%s2260 + $0x10] sm:$0xf]
    %v2266 = vld [vmem:[%s2260 + $0x14] sm:$0xf]
    %v2267 = vld [vmem:[%s2260 + $0x18] sm:$0xf]
    %v2268 = vld [vmem:[%s2260 + $0x1c] sm:$0xf]
    %v2269 = vld [vmem:[%s2260 + $0x20] sm:$0xf]
    %v2270 = vld [vmem:[%s2260 + $0x24] sm:$0xf]
    %v2271 = vld [vmem:[%s2260 + $0x28] sm:$0xf]
    %v2272 = vld [vmem:[%s2260 + $0x2c] sm:$0xf]
    %v2273 = vld [vmem:[%s2260 + $0x30] sm:$0xf]
    %v2274 = vld [vmem:[%s2260 + $0x34] sm:$0xf]
    %v2275 = vld [vmem:[%s2260 + $0x38] sm:$0xf]
    %v2276 = vld [vmem:[%s2260 + $0x3c] sm:$0xf]
    %v2293 = vunpack.c.l.b16 %v2261
    %v2294 = vunpack.c.l.b16 %v2262
    %v2295 = vunpack.c.l.b16 %v2263
    %v2296 = vunpack.c.l.b16 %v2264
    %v2297 = vunpack.c.l.b16 %v2265
    %v2298 = vunpack.c.l.b16 %v2266
    %v2299 = vunpack.c.l.b16 %v2267
    %v2300 = vunpack.c.l.b16 %v2268
    %v2301 = vunpack.c.l.b16 %v2269
    %v2302 = vunpack.c.l.b16 %v2270
    %v2303 = vunpack.c.l.b16 %v2271
    %v2304 = vunpack.c.l.b16 %v2272
    %v2305 = vunpack.c.l.b16 %v2273
    %v2306 = vunpack.c.l.b16 %v2274
    %v2307 = vunpack.c.l.b16 %v2275
    %v2308 = vunpack.c.l.b16 %v2276
    %v2309 = vpack.c.b16 %v2294, %v2293
    %v2310 = vpack.c.b16 %v2296, %v2295
    %v2311 = vpack.c.b16 %v2298, %v2297
    %v2312 = vpack.c.b16 %v2300, %v2299
    %v2313 = vpack.c.b16 %v2302, %v2301
    %v2314 = vpack.c.b16 %v2304, %v2303
    %v2315 = vpack.c.b16 %v2306, %v2305
    %v2316 = vpack.c.b16 %v2308, %v2307
    %2325 = vmatprep.subr.bf16.mxu0 0
    %2326 = vmatpush1.bf16.msra.mxu0 %v2309
    %2327 = vmatprep.subr.bf16.mxu0 0
    %2328 = vmatpush1.bf16.msra.mxu0 %v2310
    %2329 = vmatprep.subr.bf16.mxu0 0
    %2330 = vmatpush1.bf16.msra.mxu0 %v2311
    %2331 = vmatprep.subr.bf16.mxu0 0
    %2332 = vmatpush1.bf16.msra.mxu0 %v2312
    %2333 = vmatprep.subr.bf16.mxu0 0
    %2334 = vmatpush1.bf16.msra.mxu0 %v2313
    %2335 = vmatprep.subr.bf16.mxu0 0
    %2336 = vmatpush1.bf16.msra.mxu0 %v2314
    %2337 = vmatprep.subr.bf16.mxu0 0
    %2338 = vmatpush1.bf16.msra.mxu0 %v2315
    %2339 = vmatprep.subr.bf16.mxu0 0
    %2340 = vmatpush1.bf16.msra.mxu0 %v2316
    %2341 = vmatprep.subr.bf16.mxu0 0
    %2342 = vmatpush1.bf16.msra.mxu0 0
    %2343 = vmatprep.subr.bf16.mxu0 0
    %2344 = vmatpush1.bf16.msra.mxu0 0
    %2345 = vmatprep.subr.bf16.mxu0 0
    %2346 = vmatpush1.bf16.msra.mxu0 0
    %2347 = vmatprep.subr.bf16.mxu0 0
    %2348 = vmatpush1.bf16.msra.mxu0 0
    %2349 = vmatprep.subr.bf16.mxu0 0
    %2350 = vmatpush1.bf16.msra.mxu0 0
    %2351 = vmatprep.subr.bf16.mxu0 0
    %2352 = vmatpush1.bf16.msra.mxu0 0
    %2353 = vmatprep.subr.bf16.mxu0 0
    %2354 = vmatpush1.bf16.msra.mxu0 0
    %2355 = vmatprep.subr.bf16.mxu0 0
    %2356 = vmatpush1.bf16.msra.mxu0 0
    %2357 = vmatprep.mubr.bf16.mxu0 0
    %2358 = vmatmul.mubr.bf16.gmra.mrb[0].mxu0 %v2047
    %v2359 = vpop.f32.mrb[0].mxu0
    %v2360 = vadd.f32 0.0, %v2359
    %v2361 = vpop.f32.mrb[0].mxu0
    %v2362 = vpop.f32.mrb[0].mxu0
    %v2363 = vadd.f32 0.0, %v2362
    %v2364 = vpop.f32.mrb[0].mxu0
    %2365 = vdwg.mxu0
    %v2366 = vpack.c.bf16 %v2151, %v2148
    %2367 = vmatprep.subr.bf16.mxu0 0
    %2368 = vmatpush1.bf16.msra.mxu0 %v2366
    %2369 = vmatprep.subr.bf16.mxu0 0
    %2370 = vmatpush1.bf16.msra.mxu0 0
    %2371 = vmatprep.subr.bf16.mxu0 0
    %2372 = vmatpush1.bf16.msra.mxu0 0
    %2373 = vmatprep.subr.bf16.mxu0 0
    %2374 = vmatpush1.bf16.msra.mxu0 0
    %2375 = vmatprep.subr.bf16.mxu0 0
    %2376 = vmatpush1.bf16.msra.mxu0 0
    %2377 = vmatprep.subr.bf16.mxu0 0
    %2378 = vmatpush1.bf16.msra.mxu0 0
    %2379 = vmatprep.subr.bf16.mxu0 0
    %2380 = vmatpush1.bf16.msra.mxu0 0
    %2381 = vmatprep.subr.bf16.mxu0 0
    %2382 = vmatpush1.bf16.msra.mxu0 0
    %2383 = vmatprep.subr.bf16.mxu0 0
    %2384 = vmatpush1.bf16.msra.mxu0 0
    %2385 = vmatprep.subr.bf16.mxu0 0
    %2386 = vmatpush1.bf16.msra.mxu0 0
    %2387 = vmatprep.subr.bf16.mxu0 0
    %2388 = vmatpush1.bf16.msra.mxu0 0
    %2389 = vmatprep.subr.bf16.mxu0 0
    %2390 = vmatpush1.bf16.msra.mxu0 0
    %2391 = vmatprep.subr.bf16.mxu0 0
    %2392 = vmatpush1.bf16.msra.mxu0 0
    %2393 = vmatprep.subr.bf16.mxu0 0
    %2394 = vmatpush1.bf16.msra.mxu0 0
    %2395 = vmatprep.subr.bf16.mxu0 0
    %2396 = vmatpush1.bf16.msra.mxu0 0
    %2397 = vmatprep.subr.bf16.mxu0 0
    %2398 = vmatpush1.bf16.msra.mxu0 0
    %2399 = vmatprep.mubr.bf16.mxu0 0
    %2400 = vmatmul.mubr.bf16.gmra.mrb[0].mxu0 %v540
    %v2401 = vpop.f32.mrb[0].mxu0
    %v2402 = vadd.f32 0.0, %v2401
    %v2403 = vpop.f32.mrb[0].mxu0
    %v2404 = vpop.f32.mrb[0].mxu0
    %v2405 = vadd.f32 0.0, %v2404
    %v2406 = vpop.f32.mrb[0].mxu0
    %2407 = vmatprep.mubr.bf16.mxu0 0
    %2408 = vmatmul.mubr.bf16.gmra.mrb[0].mxu0 %v543
    %v2409 = vpop.f32.mrb[0].mxu0
    %v2410 = vadd.f32 0.0, %v2409
    %v2411 = vpop.f32.mrb[0].mxu0
    %v2412 = vpop.f32.mrb[0].mxu0
    %v2413 = vadd.f32 0.0, %v2412
    %v2414 = vpop.f32.mrb[0].mxu0
    %2415 = vmatprep.mubr.bf16.mxu0 0
    %2416 = vmatmul.mubr.bf16.gmra.mrb[0].mxu0 %v546
    %v2417 = vpop.f32.mrb[0].mxu0
    %v2418 = vadd.f32 0.0, %v2417
    %v2419 = vpop.f32.mrb[0].mxu0
    %v2420 = vpop.f32.mrb[0].mxu0
    %v2421 = vadd.f32 0.0, %v2420
    %v2422 = vpop.f32.mrb[0].mxu0
    %2423 = vmatprep.mubr.bf16.mxu0 0
    %2424 = vmatmul.mubr.bf16.gmra.mrb[0].mxu0 %v549
    %v2425 = vpop.f32.mrb[0].mxu0
    %v2426 = vadd.f32 0.0, %v2425
    %v2427 = vpop.f32.mrb[0].mxu0
    %v2428 = vpop.f32.mrb[0].mxu0
    %v2429 = vadd.f32 0.0, %v2428
    %v2430 = vpop.f32.mrb[0].mxu0
    %2431 = vmatprep.mubr.bf16.mxu0 0
    %2432 = vmatmul.mubr.bf16.gmra.mrb[0].mxu0 %v552
    %v2433 = vpop.f32.mrb[0].mxu0
    %v2434 = vadd.f32 0.0, %v2433
    %v2435 = vpop.f32.mrb[0].mxu0
    %v2436 = vpop.f32.mrb[0].mxu0
    %v2437 = vadd.f32 0.0, %v2436
    %v2438 = vpop.f32.mrb[0].mxu0
    %2439 = vmatprep.mubr.bf16.mxu0 0
    %2440 = vmatmul.mubr.bf16.gmra.mrb[0].mxu0 %v555
    %v2441 = vpop.f32.mrb[0].mxu0
    %v2442 = vadd.f32 0.0, %v2441
    %v2443 = vpop.f32.mrb[0].mxu0
    %v2444 = vpop.f32.mrb[0].mxu0
    %v2445 = vadd.f32 0.0, %v2444
    %v2446 = vpop.f32.mrb[0].mxu0
    %2447 = vmatprep.mubr.bf16.mxu0 0
    %2448 = vmatmul.mubr.bf16.gmra.mrb[0].mxu0 %v558
    %v2449 = vpop.f32.mrb[0].mxu0
    %v2450 = vadd.f32 0.0, %v2449
    %v2451 = vpop.f32.mrb[0].mxu0
    %v2452 = vpop.f32.mrb[0].mxu0
    %v2453 = vadd.f32 0.0, %v2452
    %v2454 = vpop.f32.mrb[0].mxu0
    %2455 = vmatprep.mubr.bf16.mxu0 0
    %2456 = vmatmul.mubr.bf16.gmra.mrb[0].mxu0 %v561
    %v2457 = vpop.f32.mrb[0].mxu0
    %v2458 = vadd.f32 0.0, %v2457
    %v2459 = vpop.f32.mrb[0].mxu0
    %v2460 = vpop.f32.mrb[0].mxu0
    %v2461 = vadd.f32 0.0, %v2460
    %v2462 = vpop.f32.mrb[0].mxu0
    %2463 = vdwg.mxu0
    %v2464 = vpack.c.bf16 %v2405, %v2402
    %v2465 = vpack.c.bf16 %v2413, %v2410
    %v2466 = vpack.c.bf16 %v2421, %v2418
    %v2467 = vpack.c.bf16 %v2429, %v2426
    %v2468 = vpack.c.bf16 %v2437, %v2434
    %v2469 = vpack.c.bf16 %v2445, %v2442
    %v2470 = vpack.c.bf16 %v2453, %v2450
    %v2471 = vpack.c.bf16 %v2461, %v2458
    %v2472 = vmul.bf16 %v2464, %v700
    %v2473 = vmul.bf16 %v2465, %v701
    %v2474 = vmul.bf16 %v2466, %v702
    %v2475 = vmul.bf16 %v2467, %v703
    %v2476 = vmul.bf16 %v2468, %v704
    %v2477 = vmul.bf16 %v2469, %v705
    %v2478 = vmul.bf16 %v2470, %v706
    %v2479 = vmul.bf16 %v2471, %v707
    %v2480 = vpack.c.bf16 %v2257, %v2254
    %2481 = vmatprep.subr.bf16.mxu0 0
    %2482 = vmatpush1.bf16.xpose.msra.mxu0 %v2480
    %2483 = vmatprep.subr.bf16.mxu0 0
    %2484 = vmatpush1.bf16.xpose.msra.mxu0 0
    %2485 = vmatprep.subr.bf16.mxu0 0
    %2486 = vmatpush1.bf16.xpose.msra.mxu0 0
    %2487 = vmatprep.subr.bf16.mxu0 0
    %2488 = vmatpush1.bf16.xpose.msra.mxu0 0
    %2489 = vmatprep.subr.bf16.mxu0 0
    %2490 = vmatpush1.bf16.xpose.msra.mxu0 0
    %2491 = vmatprep.subr.bf16.mxu0 0
    %2492 = vmatpush1.bf16.xpose.msra.mxu0 0
    %2493 = vmatprep.subr.bf16.mxu0 0
    %2494 = vmatpush1.bf16.xpose.msra.mxu0 0
    %2495 = vmatprep.subr.bf16.mxu0 0
    %2496 = vmatpush1.bf16.xpose.msra.mxu0 0
    %2497 = vmatprep.subr.bf16.mxu0 0
    %2498 = vmatpush1.bf16.xpose.msra.mxu0 0
    %2499 = vmatprep.subr.bf16.mxu0 0
    %2500 = vmatpush1.bf16.xpose.msra.mxu0 0
    %2501 = vmatprep.subr.bf16.mxu0 0
    %2502 = vmatpush1.bf16.xpose.msra.mxu0 0
    %2503 = vmatprep.subr.bf16.mxu0 0
    %2504 = vmatpush1.bf16.xpose.msra.mxu0 0
    %2505 = vmatprep.subr.bf16.mxu0 0
    %2506 = vmatpush1.bf16.xpose.msra.mxu0 0
    %2507 = vmatprep.subr.bf16.mxu0 0
    %2508 = vmatpush1.bf16.xpose.msra.mxu0 0
    %2509 = vmatprep.subr.bf16.mxu0 0
    %2510 = vmatpush1.bf16.xpose.msra.mxu0 0
    %2511 = vmatprep.subr.bf16.mxu0 0
    %2512 = vmatpush1.bf16.xpose.msra.mxu0 0
    %2513 = vmatprep.mubr.bf16.mxu0 0
    %2514 = vmatmul.mubr.bf16.gmra.mrb[0].mxu0 %v2472
    %v2515 = vpop.f32.mrb[0].mxu0
    %v2516 = vadd.f32 %v163, %v2515
    %v2517 = vpop.f32.mrb[0].mxu0
    %v2518 = vpop.f32.mrb[0].mxu0
    %v2519 = vadd.f32 %v164, %v2518
    %v2520 = vpop.f32.mrb[0].mxu0
    %2521 = vmatprep.mubr.bf16.mxu0 0
    %2522 = vmatmul.mubr.bf16.gmra.mrb[0].mxu0 %v2473
    %v2523 = vpop.f32.mrb[0].mxu0
    %v2524 = vadd.f32 %v165, %v2523
    %v2525 = vpop.f32.mrb[0].mxu0
    %v2526 = vpop.f32.mrb[0].mxu0
    %v2527 = vadd.f32 %v166, %v2526
    %v2528 = vpop.f32.mrb[0].mxu0
    %2529 = vmatprep.mubr.bf16.mxu0 0
    %2530 = vmatmul.mubr.bf16.gmra.mrb[0].mxu0 %v2474
    %v2531 = vpop.f32.mrb[0].mxu0
    %v2532 = vadd.f32 %v167, %v2531
    %v2533 = vpop.f32.mrb[0].mxu0
    %v2534 = vpop.f32.mrb[0].mxu0
    %v2535 = vadd.f32 %v168, %v2534
    %v2536 = vpop.f32.mrb[0].mxu0
    %2537 = vmatprep.mubr.bf16.mxu0 0
    %2538 = vmatmul.mubr.bf16.gmra.mrb[0].mxu0 %v2475
    %v2539 = vpop.f32.mrb[0].mxu0
    %v2540 = vadd.f32 %v169, %v2539
    %v2541 = vpop.f32.mrb[0].mxu0
    %v2542 = vpop.f32.mrb[0].mxu0
    %v2543 = vadd.f32 %v170, %v2542
    %v2544 = vpop.f32.mrb[0].mxu0
    %2545 = vmatprep.mubr.bf16.mxu0 0
    %2546 = vmatmul.mubr.bf16.gmra.mrb[0].mxu0 %v2476
    %v2547 = vpop.f32.mrb[0].mxu0
    %v2548 = vadd.f32 %v171, %v2547
    %v2549 = vpop.f32.mrb[0].mxu0
    %v2550 = vpop.f32.mrb[0].mxu0
    %v2551 = vadd.f32 %v172, %v2550
    %v2552 = vpop.f32.mrb[0].mxu0
    %2553 = vmatprep.mubr.bf16.mxu0 0
    %2554 = vmatmul.mubr.bf16.gmra.mrb[0].mxu0 %v2477
    %v2555 = vpop.f32.mrb[0].mxu0
    %v2556 = vadd.f32 %v173, %v2555
    %v2557 = vpop.f32.mrb[0].mxu0
    %v2558 = vpop.f32.mrb[0].mxu0
    %v2559 = vadd.f32 %v174, %v2558
    %v2560 = vpop.f32.mrb[0].mxu0
    %2561 = vmatprep.mubr.bf16.mxu0 0
    %2562 = vmatmul.mubr.bf16.gmra.mrb[0].mxu0 %v2478
    %v2563 = vpop.f32.mrb[0].mxu0
    %v2564 = vadd.f32 %v175, %v2563
    %v2565 = vpop.f32.mrb[0].mxu0
    %v2566 = vpop.f32.mrb[0].mxu0
    %v2567 = vadd.f32 %v176, %v2566
    %v2568 = vpop.f32.mrb[0].mxu0
    %2569 = vmatprep.mubr.bf16.mxu0 0
    %2570 = vmatmul.mubr.bf16.gmra.mrb[0].mxu0 %v2479
    %v2571 = vpop.f32.mrb[0].mxu0
    %v2572 = vadd.f32 %v177, %v2571
    %v2573 = vpop.f32.mrb[0].mxu0
    %v2574 = vpop.f32.mrb[0].mxu0
    %v2575 = vadd.f32 %v178, %v2574
    %v2576 = vpop.f32.mrb[0].mxu0
    %2577 = vdwg.mxu0
    %v2578 = vsel %vm538, %v2516, -inf
    %2579 = vmax.xlane.f32.xlu0 %v2578
    %v2580 = vpop.xlane.xlu0 %2579
    %v2581 = vsel %vm538, %v2519, -inf
    %2582 = vmax.xlane.f32.xlu0 %v2581
    %v2583 = vpop.xlane.xlu0 %2582
    %v2584 = vsel %vm538, %v2524, -inf
    %2585 = vmax.xlane.f32.xlu0 %v2584
    %v2586 = vpop.xlane.xlu0 %2585
    %v2587 = vsel %vm538, %v2527, -inf
    %2588 = vmax.xlane.f32.xlu0 %v2587
    %v2589 = vpop.xlane.xlu0 %2588
    %v2590 = vsel %vm538, %v2532, -inf
    %2591 = vmax.xlane.f32.xlu0 %v2590
    %v2592 = vpop.xlane.xlu0 %2591
    %v2593 = vsel %vm538, %v2535, -inf
    %2594 = vmax.xlane.f32.xlu0 %v2593
    %v2595 = vpop.xlane.xlu0 %2594
    %v2596 = vsel %vm538, %v2540, -inf
    %2597 = vmax.xlane.f32.xlu0 %v2596
    %v2598 = vpop.xlane.xlu0 %2597
    %v2599 = vsel %vm538, %v2543, -inf
    %2600 = vmax.xlane.f32.xlu0 %v2599
    %v2601 = vpop.xlane.xlu0 %2600
    %v2602 = vsel %vm538, %v2548, -inf
    %2603 = vmax.xlane.f32.xlu0 %v2602
    %v2604 = vpop.xlane.xlu0 %2603
    %v2605 = vsel %vm538, %v2551, -inf
    %2606 = vmax.xlane.f32.xlu0 %v2605
    %v2607 = vpop.xlane.xlu0 %2606
    %v2608 = vsel %vm538, %v2556, -inf
    %2609 = vmax.xlane.f32.xlu0 %v2608
    %v2610 = vpop.xlane.xlu0 %2609
    %v2611 = vsel %vm538, %v2559, -inf
    %2612 = vmax.xlane.f32.xlu0 %v2611
    %v2613 = vpop.xlane.xlu0 %2612
    %v2614 = vsel %vm538, %v2564, -inf
    %2615 = vmax.xlane.f32.xlu0 %v2614
    %v2616 = vpop.xlane.xlu0 %2615
    %v2617 = vsel %vm538, %v2567, -inf
    %2618 = vmax.xlane.f32.xlu0 %v2617
    %v2619 = vpop.xlane.xlu0 %2618
    %v2620 = vsel %vm538, %v2572, -inf
    %2621 = vmax.xlane.f32.xlu0 %v2620
    %v2622 = vpop.xlane.xlu0 %2621
    %v2623 = vsel %vm538, %v2575, -inf
    %2624 = vmax.xlane.f32.xlu0 %v2623
    %v2625 = vpop.xlane.xlu0 %2624
    %v2626 = vsub.f32 %v2516, %v2580
    %v2627 = vsub.f32 %v2519, %v2583
    %v2628 = vsub.f32 %v2524, %v2586
    %v2629 = vsub.f32 %v2527, %v2589
    %v2630 = vsub.f32 %v2532, %v2592
    %v2631 = vsub.f32 %v2535, %v2595
    %v2632 = vsub.f32 %v2540, %v2598
    %v2633 = vsub.f32 %v2543, %v2601
    %v2634 = vsub.f32 %v2548, %v2604
    %v2635 = vsub.f32 %v2551, %v2607
    %v2636 = vsub.f32 %v2556, %v2610
    %v2637 = vsub.f32 %v2559, %v2613
    %v2638 = vsub.f32 %v2564, %v2616
    %v2639 = vsub.f32 %v2567, %v2619
    %v2640 = vsub.f32 %v2572, %v2622
    %v2641 = vsub.f32 %v2575, %v2625
    %v2642 = vmul.f32 %v2626, 1.442695
    %v2643 = vpow.pop %v2642
    %v2644 = vmul.f32 %v2627, 1.442695
    %v2645 = vpow.pop %v2644
    %v2646 = vmul.f32 %v2628, 1.442695
    %v2647 = vpow.pop %v2646
    %v2648 = vmul.f32 %v2629, 1.442695
    %v2649 = vpow.pop %v2648
    %v2650 = vmul.f32 %v2630, 1.442695
    %v2651 = vpow.pop %v2650
    %v2652 = vmul.f32 %v2631, 1.442695
    %v2653 = vpow.pop %v2652
    %v2654 = vmul.f32 %v2632, 1.442695
    %v2655 = vpow.pop %v2654
    %v2656 = vmul.f32 %v2633, 1.442695
    %v2657 = vpow.pop %v2656
    %v2658 = vmul.f32 %v2634, 1.442695
    %v2659 = vpow.pop %v2658
    %v2660 = vmul.f32 %v2635, 1.442695
    %v2661 = vpow.pop %v2660
    %v2662 = vmul.f32 %v2636, 1.442695
    %v2663 = vpow.pop %v2662
    %v2664 = vmul.f32 %v2637, 1.442695
    %v2665 = vpow.pop %v2664
    %v2666 = vmul.f32 %v2638, 1.442695
    %v2667 = vpow.pop %v2666
    %v2668 = vmul.f32 %v2639, 1.442695
    %v2669 = vpow.pop %v2668
    %v2670 = vmul.f32 %v2640, 1.442695
    %v2671 = vpow.pop %v2670
    %v2672 = vmul.f32 %v2641, 1.442695
    %v2673 = vpow.pop %v2672
    %v2674 = vsel %vm538, %v2643, 0.0
    %2675 = vadd.xlane.f32.xlu0 %v2674
    %v2676 = vpop.xlane.xlu0 %2675
    %v2677 = vsel %vm538, %v2645, 0.0
    %2678 = vadd.xlane.f32.xlu0 %v2677
    %v2679 = vpop.xlane.xlu0 %2678
    %v2680 = vsel %vm538, %v2647, 0.0
    %2681 = vadd.xlane.f32.xlu0 %v2680
    %v2682 = vpop.xlane.xlu0 %2681
    %v2683 = vsel %vm538, %v2649, 0.0
    %2684 = vadd.xlane.f32.xlu0 %v2683
    %v2685 = vpop.xlane.xlu0 %2684
    %v2686 = vsel %vm538, %v2651, 0.0
    %2687 = vadd.xlane.f32.xlu0 %v2686
    %v2688 = vpop.xlane.xlu0 %2687
    %v2689 = vsel %vm538, %v2653, 0.0
    %2690 = vadd.xlane.f32.xlu0 %v2689
    %v2691 = vpop.xlane.xlu0 %2690
    %v2692 = vsel %vm538, %v2655, 0.0
    %2693 = vadd.xlane.f32.xlu0 %v2692
    %v2694 = vpop.xlane.xlu0 %2693
    %v2695 = vsel %vm538, %v2657, 0.0
    %2696 = vadd.xlane.f32.xlu0 %v2695
    %v2697 = vpop.xlane.xlu0 %2696
    %v2698 = vsel %vm538, %v2659, 0.0
    %2699 = vadd.xlane.f32.xlu0 %v2698
    %v2700 = vpop.xlane.xlu0 %2699
    %v2701 = vsel %vm538, %v2661, 0.0
    %2702 = vadd.xlane.f32.xlu0 %v2701
    %v2703 = vpop.xlane.xlu0 %2702
    %v2704 = vsel %vm538, %v2663, 0.0
    %2705 = vadd.xlane.f32.xlu0 %v2704
    %v2706 = vpop.xlane.xlu0 %2705
    %v2707 = vsel %vm538, %v2665, 0.0
    %2708 = vadd.xlane.f32.xlu0 %v2707
    %v2709 = vpop.xlane.xlu0 %2708
    %v2710 = vsel %vm538, %v2667, 0.0
    %2711 = vadd.xlane.f32.xlu0 %v2710
    %v2712 = vpop.xlane.xlu0 %2711
    %v2713 = vsel %vm538, %v2669, 0.0
    %2714 = vadd.xlane.f32.xlu0 %v2713
    %v2715 = vpop.xlane.xlu0 %2714
    %v2716 = vsel %vm538, %v2671, 0.0
    %2717 = vadd.xlane.f32.xlu0 %v2716
    %v2718 = vpop.xlane.xlu0 %2717
    %v2719 = vsel %vm538, %v2673, 0.0
    %2720 = vadd.xlane.f32.xlu0 %v2719
    %v2721 = vpop.xlane.xlu0 %2720
    %v2722 = vrcp.pop %v2676
    %v2723 = vrcp.pop %v2679
    %v2724 = vrcp.pop %v2682
    %v2725 = vrcp.pop %v2685
    %v2726 = vrcp.pop %v2688
    %v2727 = vrcp.pop %v2691
    %v2728 = vrcp.pop %v2694
    %v2729 = vrcp.pop %v2697
    %v2730 = vrcp.pop %v2700
    %v2731 = vrcp.pop %v2703
    %v2732 = vrcp.pop %v2706
    %v2733 = vrcp.pop %v2709
    %v2734 = vrcp.pop %v2712
    %v2735 = vrcp.pop %v2715
    %v2736 = vrcp.pop %v2718
    %v2737 = vrcp.pop %v2721
    %v2738 = vmul.f32 %v2643, %v2722
    %v2739 = vmul.f32 %v2645, %v2723
    %v2740 = vmul.f32 %v2647, %v2724
    %v2741 = vmul.f32 %v2649, %v2725
    %v2742 = vmul.f32 %v2651, %v2726
    %v2743 = vmul.f32 %v2653, %v2727
    %v2744 = vmul.f32 %v2655, %v2728
    %v2745 = vmul.f32 %v2657, %v2729
    %v2746 = vmul.f32 %v2659, %v2730
    %v2747 = vmul.f32 %v2661, %v2731
    %v2748 = vmul.f32 %v2663, %v2732
    %v2749 = vmul.f32 %v2665, %v2733
    %v2750 = vmul.f32 %v2667, %v2734
    %v2751 = vmul.f32 %v2669, %v2735
    %v2752 = vmul.f32 %v2671, %v2736
    %v2753 = vmul.f32 %v2673, %v2737
    %v2754 = vpack.c.bf16 %v2739, %v2738
    %v2755 = vpack.c.bf16 %v2741, %v2740
    %v2756 = vpack.c.bf16 %v2743, %v2742
    %v2757 = vpack.c.bf16 %v2745, %v2744
    %v2758 = vpack.c.bf16 %v2747, %v2746
    %v2759 = vpack.c.bf16 %v2749, %v2748
    %v2760 = vpack.c.bf16 %v2751, %v2750
    %v2761 = vpack.c.bf16 %v2753, %v2752
    %v2762 = vpack.c.bf16 %v2363, %v2360
    %v2764 = vsel %vm538, %v2754, 0
    %v2767 = vsel %vm538, %v2755, 0
    %v2770 = vsel %vm538, %v2756, 0
    %v2773 = vsel %vm538, %v2757, 0
    %v2776 = vsel %vm538, %v2758, 0
    %v2779 = vsel %vm538, %v2759, 0
    %v2782 = vsel %vm538, %v2760, 0
    %v2785 = vsel %vm538, %v2761, 0
    %2787 = vmatprep.subr.bf16.mxu0 0
    %2788 = vmatpush1.bf16.msra.mxu0 %v2762
    %2789 = vmatprep.subr.bf16.mxu0 0
    %2790 = vmatpush1.bf16.msra.mxu0 0
    %2791 = vmatprep.subr.bf16.mxu0 0
    %2792 = vmatpush1.bf16.msra.mxu0 0
    %2793 = vmatprep.subr.bf16.mxu0 0
    %2794 = vmatpush1.bf16.msra.mxu0 0
    %2795 = vmatprep.subr.bf16.mxu0 0
    %2796 = vmatpush1.bf16.msra.mxu0 0
    %2797 = vmatprep.subr.bf16.mxu0 0
    %2798 = vmatpush1.bf16.msra.mxu0 0
    %2799 = vmatprep.subr.bf16.mxu0 0
    %2800 = vmatpush1.bf16.msra.mxu0 0
    %2801 = vmatprep.subr.bf16.mxu0 0
    %2802 = vmatpush1.bf16.msra.mxu0 0
    %2803 = vmatprep.subr.bf16.mxu0 0
    %2804 = vmatpush1.bf16.msra.mxu0 0
    %2805 = vmatprep.subr.bf16.mxu0 0
    %2806 = vmatpush1.bf16.msra.mxu0 0
    %2807 = vmatprep.subr.bf16.mxu0 0
    %2808 = vmatpush1.bf16.msra.mxu0 0
    %2809 = vmatprep.subr.bf16.mxu0 0
    %2810 = vmatpush1.bf16.msra.mxu0 0
    %2811 = vmatprep.subr.bf16.mxu0 0
    %2812 = vmatpush1.bf16.msra.mxu0 0
    %2813 = vmatprep.subr.bf16.mxu0 0
    %2814 = vmatpush1.bf16.msra.mxu0 0
    %2815 = vmatprep.subr.bf16.mxu0 0
    %2816 = vmatpush1.bf16.msra.mxu0 0
    %2817 = vmatprep.subr.bf16.mxu0 0
    %2818 = vmatpush1.bf16.msra.mxu0 0
    %2819 = vmatprep.mubr.bf16.mxu0 0
    %2820 = vmatmul.mubr.bf16.gmra.mrb[0].mxu0 %v2764
    %v2821 = vpop.f32.mrb[0].mxu0
    %v2822 = vadd.f32 0.0, %v2821
    %v2823 = vpop.f32.mrb[0].mxu0
    %v2824 = vpop.f32.mrb[0].mxu0
    %v2825 = vadd.f32 0.0, %v2824
    %v2826 = vpop.f32.mrb[0].mxu0
    %2827 = vmatprep.mubr.bf16.mxu0 0
    %2828 = vmatmul.mubr.bf16.gmra.mrb[0].mxu0 %v2767
    %v2829 = vpop.f32.mrb[0].mxu0
    %v2830 = vadd.f32 0.0, %v2829
    %v2831 = vpop.f32.mrb[0].mxu0
    %v2832 = vpop.f32.mrb[0].mxu0
    %v2833 = vadd.f32 0.0, %v2832
    %v2834 = vpop.f32.mrb[0].mxu0
    %2835 = vmatprep.mubr.bf16.mxu0 0
    %2836 = vmatmul.mubr.bf16.gmra.mrb[0].mxu0 %v2770
    %v2837 = vpop.f32.mrb[0].mxu0
    %v2838 = vadd.f32 0.0, %v2837
    %v2839 = vpop.f32.mrb[0].mxu0
    %v2840 = vpop.f32.mrb[0].mxu0
    %v2841 = vadd.f32 0.0, %v2840
    %v2842 = vpop.f32.mrb[0].mxu0
    %2843 = vmatprep.mubr.bf16.mxu0 0
    %2844 = vmatmul.mubr.bf16.gmra.mrb[0].mxu0 %v2773
    %v2845 = vpop.f32.mrb[0].mxu0
    %v2846 = vadd.f32 0.0, %v2845
    %v2847 = vpop.f32.mrb[0].mxu0
    %v2848 = vpop.f32.mrb[0].mxu0
    %v2849 = vadd.f32 0.0, %v2848
    %v2850 = vpop.f32.mrb[0].mxu0
    %2851 = vmatprep.mubr.bf16.mxu0 0
    %2852 = vmatmul.mubr.bf16.gmra.mrb[0].mxu0 %v2776
    %v2853 = vpop.f32.mrb[0].mxu0
    %v2854 = vadd.f32 0.0, %v2853
    %v2855 = vpop.f32.mrb[0].mxu0
    %v2856 = vpop.f32.mrb[0].mxu0
    %v2857 = vadd.f32 0.0, %v2856
    %v2858 = vpop.f32.mrb[0].mxu0
    %2859 = vmatprep.mubr.bf16.mxu0 0
    %2860 = vmatmul.mubr.bf16.gmra.mrb[0].mxu0 %v2779
    %v2861 = vpop.f32.mrb[0].mxu0
    %v2862 = vadd.f32 0.0, %v2861
    %v2863 = vpop.f32.mrb[0].mxu0
    %v2864 = vpop.f32.mrb[0].mxu0
    %v2865 = vadd.f32 0.0, %v2864
    %v2866 = vpop.f32.mrb[0].mxu0
    %2867 = vmatprep.mubr.bf16.mxu0 0
    %2868 = vmatmul.mubr.bf16.gmra.mrb[0].mxu0 %v2782
    %v2869 = vpop.f32.mrb[0].mxu0
    %v2870 = vadd.f32 0.0, %v2869
    %v2871 = vpop.f32.mrb[0].mxu0
    %v2872 = vpop.f32.mrb[0].mxu0
    %v2873 = vadd.f32 0.0, %v2872
    %v2874 = vpop.f32.mrb[0].mxu0
    %2875 = vmatprep.mubr.bf16.mxu0 0
    %2876 = vmatmul.mubr.bf16.gmra.mrb[0].mxu0 %v2785
    %v2877 = vpop.f32.mrb[0].mxu0
    %v2878 = vadd.f32 0.0, %v2877
    %v2879 = vpop.f32.mrb[0].mxu0
    %v2880 = vpop.f32.mrb[0].mxu0
    %v2881 = vadd.f32 0.0, %v2880
    %v2882 = vpop.f32.mrb[0].mxu0
    %2883 = vdwg.mxu0
    %v2884 = vpack.c.bf16 %v2825, %v2822
    %v2885 = vpack.c.bf16 %v2833, %v2830
    %v2886 = vpack.c.bf16 %v2841, %v2838
    %v2887 = vpack.c.bf16 %v2849, %v2846
    %v2888 = vpack.c.bf16 %v2857, %v2854
    %v2889 = vpack.c.bf16 %v2865, %v2862
    %v2890 = vpack.c.bf16 %v2873, %v2870
    %v2891 = vpack.c.bf16 %v2881, %v2878
    %v2892 = vmul.bf16 %v2884, %v700
    %v2893 = vmul.bf16 %v2885, %v701
    %v2894 = vmul.bf16 %v2886, %v702
    %v2895 = vmul.bf16 %v2887, %v703
    %v2896 = vmul.bf16 %v2888, %v704
    %v2897 = vmul.bf16 %v2889, %v705
    %v2898 = vmul.bf16 %v2890, %v706
    %v2899 = vmul.bf16 %v2891, %v707
    %2900 = vmatprep.subr.bf16.mxu0 0
    %2901 = vmatpush1.bf16.msra.mxu0 %v2892
    %2902 = vmatprep.subr.bf16.mxu0 0
    %2903 = vmatpush1.bf16.msra.mxu0 %v2893
    %2904 = vmatprep.subr.bf16.mxu0 0
    %2905 = vmatpush1.bf16.msra.mxu0 %v2894
    %2906 = vmatprep.subr.bf16.mxu0 0
    %2907 = vmatpush1.bf16.msra.mxu0 %v2895
    %2908 = vmatprep.subr.bf16.mxu0 0
    %2909 = vmatpush1.bf16.msra.mxu0 %v2896
    %2910 = vmatprep.subr.bf16.mxu0 0
    %2911 = vmatpush1.bf16.msra.mxu0 %v2897
    %2912 = vmatprep.subr.bf16.mxu0 0
    %2913 = vmatpush1.bf16.msra.mxu0 %v2898
    %2914 = vmatprep.subr.bf16.mxu0 0
    %2915 = vmatpush1.bf16.msra.mxu0 %v2899
    %2916 = vmatprep.subr.bf16.mxu0 0
    %2917 = vmatpush1.bf16.msra.mxu0 0
    %2918 = vmatprep.subr.bf16.mxu0 0
    %2919 = vmatpush1.bf16.msra.mxu0 0
    %2920 = vmatprep.subr.bf16.mxu0 0
    %2921 = vmatpush1.bf16.msra.mxu0 0
    %2922 = vmatprep.subr.bf16.mxu0 0
    %2923 = vmatpush1.bf16.msra.mxu0 0
    %2924 = vmatprep.subr.bf16.mxu0 0
    %2925 = vmatpush1.bf16.msra.mxu0 0
    %2926 = vmatprep.subr.bf16.mxu0 0
    %2927 = vmatpush1.bf16.msra.mxu0 0
    %2928 = vmatprep.subr.bf16.mxu0 0
    %2929 = vmatpush1.bf16.msra.mxu0 0
    %2930 = vmatprep.subr.bf16.mxu0 0
    %2931 = vmatpush1.bf16.msra.mxu0 0
    %2932 = vmatprep.mubr.bf16.mxu0 0
    %2933 = vmatmul.mubr.bf16.gmra.mrb[0].mxu0 %v1148
    %v2934 = vpop.f32.mrb[0].mxu0
    %v2935 = vadd.f32 0.0, %v2934
    %v2936 = vpop.f32.mrb[0].mxu0
    %v2937 = vpop.f32.mrb[0].mxu0
    %v2938 = vadd.f32 0.0, %v2937
    %v2939 = vpop.f32.mrb[0].mxu0
    %2940 = vdwg.mxu0
    %v2941 = vpack.c.bf16 %v2938, %v2935
    %s2942 = scalar_lea.vmem [#allocation7], 64
    %v2943 = vld [vmem:[%s2942] sm:$0xf]
    %v2944 = vld [vmem:[%s2942 + $0x4] sm:$0xf]
    %v2945 = vld [vmem:[%s2942 + $0x8] sm:$0xf]
    %v2946 = vld [vmem:[%s2942 + $0xc] sm:$0xf]
    %v2947 = vld [vmem:[%s2942 + $0x10] sm:$0xf]
    %v2948 = vld [vmem:[%s2942 + $0x14] sm:$0xf]
    %v2949 = vld [vmem:[%s2942 + $0x18] sm:$0xf]
    %v2950 = vld [vmem:[%s2942 + $0x1c] sm:$0xf]
    %v2951 = vld [vmem:[%s2942 + $0x20] sm:$0xf]
    %v2952 = vld [vmem:[%s2942 + $0x24] sm:$0xf]
    %v2953 = vld [vmem:[%s2942 + $0x28] sm:$0xf]
    %v2954 = vld [vmem:[%s2942 + $0x2c] sm:$0xf]
    %v2955 = vld [vmem:[%s2942 + $0x30] sm:$0xf]
    %v2956 = vld [vmem:[%s2942 + $0x34] sm:$0xf]
    %v2957 = vld [vmem:[%s2942 + $0x38] sm:$0xf]
    %v2958 = vld [vmem:[%s2942 + $0x3c] sm:$0xf]
    %s2959 = scalar_lea.vmem %s9, 1
    %v2960 = vld [vmem:[%s2959] sm:$0x1]
    %v2962 = vlaneseq
    %v2963 = vshrl.u32 %v2962, 7
    %v2964 = vsub.s32 0, %v2963
    %v2965 = vrot.slane %v2960, %v2964
    %v2983 = vunpack.c.l.b16 %v2943
    %v2984 = vunpack.c.l.b16 %v2944
    %v2985 = vunpack.c.l.b16 %v2945
    %v2986 = vunpack.c.l.b16 %v2946
    %v2987 = vunpack.c.l.b16 %v2947
    %v2988 = vunpack.c.l.b16 %v2948
    %v2989 = vunpack.c.l.b16 %v2949
    %v2990 = vunpack.c.l.b16 %v2950
    %v2991 = vunpack.c.l.b16 %v2951
    %v2992 = vunpack.c.l.b16 %v2952
    %v2993 = vunpack.c.l.b16 %v2953
    %v2994 = vunpack.c.l.b16 %v2954
    %v2995 = vunpack.c.l.b16 %v2955
    %v2996 = vunpack.c.l.b16 %v2956
    %v2997 = vunpack.c.l.b16 %v2957
    %v2998 = vunpack.c.l.b16 %v2958
    %v2999 = vpack.c.b16 %v2984, %v2983
    %v3000 = vpack.c.b16 %v2986, %v2985
    %v3001 = vpack.c.b16 %v2988, %v2987
    %v3002 = vpack.c.b16 %v2990, %v2989
    %v3003 = vpack.c.b16 %v2992, %v2991
    %v3004 = vpack.c.b16 %v2994, %v2993
    %v3005 = vpack.c.b16 %v2996, %v2995
    %v3006 = vpack.c.b16 %v2998, %v2997
    %3015 = vmatprep.subr.bf16.mxu0 0
    %3016 = vmatpush1.bf16.msra.mxu0 %v2999
    %3017 = vmatprep.subr.bf16.mxu0 0
    %3018 = vmatpush1.bf16.msra.mxu0 %v3000
    %3019 = vmatprep.subr.bf16.mxu0 0
    %3020 = vmatpush1.bf16.msra.mxu0 %v3001
    %3021 = vmatprep.subr.bf16.mxu0 0
    %3022 = vmatpush1.bf16.msra.mxu0 %v3002
    %3023 = vmatprep.subr.bf16.mxu0 0
    %3024 = vmatpush1.bf16.msra.mxu0 %v3003
    %3025 = vmatprep.subr.bf16.mxu0 0
    %3026 = vmatpush1.bf16.msra.mxu0 %v3004
    %3027 = vmatprep.subr.bf16.mxu0 0
    %3028 = vmatpush1.bf16.msra.mxu0 %v3005
    %3029 = vmatprep.subr.bf16.mxu0 0
    %3030 = vmatpush1.bf16.msra.mxu0 %v3006
    %3031 = vmatprep.subr.bf16.mxu0 0
    %3032 = vmatpush1.bf16.msra.mxu0 0
    %3033 = vmatprep.subr.bf16.mxu0 0
    %3034 = vmatpush1.bf16.msra.mxu0 0
    %3035 = vmatprep.subr.bf16.mxu0 0
    %3036 = vmatpush1.bf16.msra.mxu0 0
    %3037 = vmatprep.subr.bf16.mxu0 0
    %3038 = vmatpush1.bf16.msra.mxu0 0
    %3039 = vmatprep.subr.bf16.mxu0 0
    %3040 = vmatpush1.bf16.msra.mxu0 0
    %3041 = vmatprep.subr.bf16.mxu0 0
    %3042 = vmatpush1.bf16.msra.mxu0 0
    %3043 = vmatprep.subr.bf16.mxu0 0
    %3044 = vmatpush1.bf16.msra.mxu0 0
    %3045 = vmatprep.subr.bf16.mxu0 0
    %3046 = vmatpush1.bf16.msra.mxu0 0
    %3047 = vmatprep.mubr.bf16.mxu0 0
    %3048 = vmatmul.mubr.bf16.gmra.mrb[0].mxu0 %v2941
    %v3049 = vpop.f32.mrb[0].mxu0
    %v3050 = vadd.f32 %v2965, %v3049
    %v3051 = vpop.f32.mrb[0].mxu0
    %v3052 = vpop.f32.mrb[0].mxu0
    %v3053 = vadd.f32 %v2965, %v3052
    %v3054 = vpop.f32.mrb[0].mxu0
    %3055 = vdwg.mxu0
    %v3056 = vadd.f32 %v3050, %v2045
    %v3057 = vadd.f32 %v3053, %v2046
    %3058 = vadd.xlane.f32.xlu0 %v3056
    %v3059 = vpop.xlane.xlu0 %3058
    %3060 = vadd.xlane.f32.xlu0 %v3057
    %v3061 = vpop.xlane.xlu0 %3060
    %v3062 = vmul.f32 %v3059, %v1310
    %v3063 = vmul.f32 %v3061, %v1310
    %v3064 = vsub.f32 %v3056, %v3062
    %v3065 = vsub.f32 %v3057, %v3063
    %v3066 = vmul.f32 %v3064, %v3064
    %v3067 = vmul.f32 %v3065, %v3065
    %3068 = vadd.xlane.f32.xlu0 %v3066
    %v3069 = vpop.xlane.xlu0 %3068
    %3070 = vadd.xlane.f32.xlu0 %v3067
    %v3071 = vpop.xlane.xlu0 %3070
    %v3072 = vmul.f32 %v3069, %v1310
    %v3073 = vmul.f32 %v3071, %v1310
    %v3074 = vadd.f32 %v3072, 1e-05
    %v3075 = vadd.f32 %v3073, 1e-05
    %v3076 = vrsqrt.pop %v3074
    %v3077 = vrsqrt.pop %v3075
    %v3078 = vmul.f32 %v3064, %v3076
    %v3079 = vmul.f32 %v3065, %v3077
    %s3080 = scalar_lea.vmem %s10, 1
    %v3081 = vld [vmem:[%s3080] sm:$0x1]
    %v3083 = vlaneseq
    %v3084 = vshrl.u32 %v3083, 7
    %v3085 = vsub.s32 0, %v3084
    %v3086 = vrot.slane %v3081, %v3085
    %v3088 = vmul.f32 %v3078, %v3086
    %v3089 = vmul.f32 %v3079, %v3086
    %s3090 = scalar_lea.vmem %s11, 1
    %v3091 = vld [vmem:[%s3090] sm:$0x1]
    %v3093 = vlaneseq
    %v3094 = vshrl.u32 %v3093, 7
    %v3095 = vsub.s32 0, %v3094
    %v3096 = vrot.slane %v3091, %v3095
    %v3098 = vadd.f32 %v3088, %v3096
    %v3099 = vadd.f32 %v3089, %v3096
    %v3100 = vpack.c.bf16 %v3099, %v3098
    %s3101 = scalar_lea.vmem [#allocation8], 256
    %v3102 = vld [vmem:[%s3101] sm:$0xff]
    %v3103 = vld [vmem:[%s3101 + $0x8] sm:$0xff]
    %v3104 = vld [vmem:[%s3101 + $0x10] sm:$0xff]
    %v3105 = vld [vmem:[%s3101 + $0x18] sm:$0xff]
    %v3106 = vld [vmem:[%s3101 + $0x20] sm:$0xff]
    %v3107 = vld [vmem:[%s3101 + $0x28] sm:$0xff]
    %v3108 = vld [vmem:[%s3101 + $0x30] sm:$0xff]
    %v3109 = vld [vmem:[%s3101 + $0x38] sm:$0xff]
    %v3110 = vld [vmem:[%s3101 + $0x40] sm:$0xff]
    %v3111 = vld [vmem:[%s3101 + $0x48] sm:$0xff]
    %v3112 = vld [vmem:[%s3101 + $0x50] sm:$0xff]
    %v3113 = vld [vmem:[%s3101 + $0x58] sm:$0xff]
    %v3114 = vld [vmem:[%s3101 + $0x60] sm:$0xff]
    %v3115 = vld [vmem:[%s3101 + $0x68] sm:$0xff]
    %v3116 = vld [vmem:[%s3101 + $0x70] sm:$0xff]
    %v3117 = vld [vmem:[%s3101 + $0x78] sm:$0xff]
    %v3118 = vld [vmem:[%s3101 + $0x80] sm:$0xff]
    %v3119 = vld [vmem:[%s3101 + $0x88] sm:$0xff]
    %v3120 = vld [vmem:[%s3101 + $0x90] sm:$0xff]
    %v3121 = vld [vmem:[%s3101 + $0x98] sm:$0xff]
    %v3122 = vld [vmem:[%s3101 + $0xa0] sm:$0xff]
    %v3123 = vld [vmem:[%s3101 + $0xa8] sm:$0xff]
    %v3124 = vld [vmem:[%s3101 + $0xb0] sm:$0xff]
    %v3125 = vld [vmem:[%s3101 + $0xb8] sm:$0xff]
    %v3126 = vld [vmem:[%s3101 + $0xc0] sm:$0xff]
    %v3127 = vld [vmem:[%s3101 + $0xc8] sm:$0xff]
    %v3128 = vld [vmem:[%s3101 + $0xd0] sm:$0xff]
    %v3129 = vld [vmem:[%s3101 + $0xd8] sm:$0xff]
    %v3130 = vld [vmem:[%s3101 + $0xe0] sm:$0xff]
    %v3131 = vld [vmem:[%s3101 + $0xe8] sm:$0xff]
    %v3132 = vld [vmem:[%s3101 + $0xf0] sm:$0xff]
    %v3133 = vld [vmem:[%s3101 + $0xf8] sm:$0xff]
    %s3134 = scalar_lea.vmem %s13, 4
    %v3135 = vld [vmem:[%s3134] sm:$0xf]
    %v3137 = vlaneseq
    %v3138 = vshrl.u32 %v3137, 7
    %v3139 = vsub.s32 0, %v3138
    %v3140 = vrot.slane %v3135, %v3139
    %v3141 = vlaneseq
    %v3142 = vshrl.u32 %v3141, 7
    %v3143 = vsub.s32 1, %v3142
    %v3144 = vrot.slane %v3135, %v3143
    %v3145 = vlaneseq
    %v3146 = vshrl.u32 %v3145, 7
    %v3147 = vsub.s32 2, %v3146
    %v3148 = vrot.slane %v3135, %v3147
    %v3149 = vlaneseq
    %v3150 = vshrl.u32 %v3149, 7
    %v3151 = vsub.s32 3, %v3150
    %v3152 = vrot.slane %v3135, %v3151
    %v3189 = vunpack.c.l.b16 %v3102
    %v3190 = vunpack.c.h.b16 %v3102
    %v3191 = vunpack.c.l.b16 %v3103
    %v3192 = vunpack.c.h.b16 %v3103
    %v3193 = vunpack.c.l.b16 %v3104
    %v3194 = vunpack.c.h.b16 %v3104
    %v3195 = vunpack.c.l.b16 %v3105
    %v3196 = vunpack.c.h.b16 %v3105
    %v3197 = vunpack.c.l.b16 %v3106
    %v3198 = vunpack.c.h.b16 %v3106
    %v3199 = vunpack.c.l.b16 %v3107
    %v3200 = vunpack.c.h.b16 %v3107
    %v3201 = vunpack.c.l.b16 %v3108
    %v3202 = vunpack.c.h.b16 %v3108
    %v3203 = vunpack.c.l.b16 %v3109
    %v3204 = vunpack.c.h.b16 %v3109
    %v3205 = vunpack.c.l.b16 %v3110
    %v3206 = vunpack.c.h.b16 %v3110
    %v3207 = vunpack.c.l.b16 %v3111
    %v3208 = vunpack.c.h.b16 %v3111
    %v3209 = vunpack.c.l.b16 %v3112
    %v3210 = vunpack.c.h.b16 %v3112
    %v3211 = vunpack.c.l.b16 %v3113
    %v3212 = vunpack.c.h.b16 %v3113
    %v3213 = vunpack.c.l.b16 %v3114
    %v3214 = vunpack.c.h.b16 %v3114
    %v3215 = vunpack.c.l.b16 %v3115
    %v3216 = vunpack.c.h.b16 %v3115
    %v3217 = vunpack.c.l.b16 %v3116
    %v3218 = vunpack.c.h.b16 %v3116
    %v3219 = vunpack.c.l.b16 %v3117
    %v3220 = vunpack.c.h.b16 %v3117
    %v3221 = vunpack.c.l.b16 %v3118
    %v3222 = vunpack.c.h.b16 %v3118
    %v3223 = vunpack.c.l.b16 %v3119
    %v3224 = vunpack.c.h.b16 %v3119
    %v3225 = vunpack.c.l.b16 %v3120
    %v3226 = vunpack.c.h.b16 %v3120
    %v3227 = vunpack.c.l.b16 %v3121
    %v3228 = vunpack.c.h.b16 %v3121
    %v3229 = vunpack.c.l.b16 %v3122
    %v3230 = vunpack.c.h.b16 %v3122
    %v3231 = vunpack.c.l.b16 %v3123
    %v3232 = vunpack.c.h.b16 %v3123
    %v3233 = vunpack.c.l.b16 %v3124
    %v3234 = vunpack.c.h.b16 %v3124
    %v3235 = vunpack.c.l.b16 %v3125
    %v3236 = vunpack.c.h.b16 %v3125
    %v3237 = vunpack.c.l.b16 %v3126
    %v3238 = vunpack.c.h.b16 %v3126
    %v3239 = vunpack.c.l.b16 %v3127
    %v3240 = vunpack.c.h.b16 %v3127
    %v3241 = vunpack.c.l.b16 %v3128
    %v3242 = vunpack.c.h.b16 %v3128
    %v3243 = vunpack.c.l.b16 %v3129
    %v3244 = vunpack.c.h.b16 %v3129
    %v3245 = vunpack.c.l.b16 %v3130
    %v3246 = vunpack.c.h.b16 %v3130
    %v3247 = vunpack.c.l.b16 %v3131
    %v3248 = vunpack.c.h.b16 %v3131
    %v3249 = vunpack.c.l.b16 %v3132
    %v3250 = vunpack.c.h.b16 %v3132
    %v3251 = vunpack.c.l.b16 %v3133
    %v3252 = vunpack.c.h.b16 %v3133
    %v3253 = vpack.c.b16 %v3193, %v3189
    %v3254 = vpack.c.b16 %v3194, %v3190
    %v3255 = vpack.c.b16 %v3195, %v3191
    %v3256 = vpack.c.b16 %v3196, %v3192
    %v3257 = vpack.c.b16 %v3201, %v3197
    %v3258 = vpack.c.b16 %v3202, %v3198
    %v3259 = vpack.c.b16 %v3203, %v3199
    %v3260 = vpack.c.b16 %v3204, %v3200
    %v3261 = vpack.c.b16 %v3209, %v3205
    %v3262 = vpack.c.b16 %v3210, %v3206
    %v3263 = vpack.c.b16 %v3211, %v3207
    %v3264 = vpack.c.b16 %v3212, %v3208
    %v3265 = vpack.c.b16 %v3217, %v3213
    %v3266 = vpack.c.b16 %v3218, %v3214
    %v3267 = vpack.c.b16 %v3219, %v3215
    %v3268 = vpack.c.b16 %v3220, %v3216
    %v3269 = vpack.c.b16 %v3225, %v3221
    %v3270 = vpack.c.b16 %v3226, %v3222
    %v3271 = vpack.c.b16 %v3227, %v3223
    %v3272 = vpack.c.b16 %v3228, %v3224
    %v3273 = vpack.c.b16 %v3233, %v3229
    %v3274 = vpack.c.b16 %v3234, %v3230
    %v3275 = vpack.c.b16 %v3235, %v3231
    %v3276 = vpack.c.b16 %v3236, %v3232
    %v3277 = vpack.c.b16 %v3241, %v3237
    %v3278 = vpack.c.b16 %v3242, %v3238
    %v3279 = vpack.c.b16 %v3243, %v3239
    %v3280 = vpack.c.b16 %v3244, %v3240
    %v3281 = vpack.c.b16 %v3249, %v3245
    %v3282 = vpack.c.b16 %v3250, %v3246
    %v3283 = vpack.c.b16 %v3251, %v3247
    %v3284 = vpack.c.b16 %v3252, %v3248
    %3317 = vmatprep.subr.bf16.mxu0 %v3254
    %3318 = vmatpush1.bf16.msra.mxu0 %v3253
    %3319 = vmatprep.subr.bf16.mxu0 %v3258
    %3320 = vmatpush1.bf16.msra.mxu0 %v3257
    %3321 = vmatprep.subr.bf16.mxu0 %v3262
    %3322 = vmatpush1.bf16.msra.mxu0 %v3261
    %3323 = vmatprep.subr.bf16.mxu0 %v3266
    %3324 = vmatpush1.bf16.msra.mxu0 %v3265
    %3325 = vmatprep.subr.bf16.mxu0 %v3270
    %3326 = vmatpush1.bf16.msra.mxu0 %v3269
    %3327 = vmatprep.subr.bf16.mxu0 %v3274
    %3328 = vmatpush1.bf16.msra.mxu0 %v3273
    %3329 = vmatprep.subr.bf16.mxu0 %v3278
    %3330 = vmatpush1.bf16.msra.mxu0 %v3277
    %3331 = vmatprep.subr.bf16.mxu0 %v3282
    %3332 = vmatpush1.bf16.msra.mxu0 %v3281
    %3333 = vmatprep.subr.bf16.mxu0 0
    %3334 = vmatpush1.bf16.msra.mxu0 0
    %3335 = vmatprep.subr.bf16.mxu0 0
    %3336 = vmatpush1.bf16.msra.mxu0 0
    %3337 = vmatprep.subr.bf16.mxu0 0
    %3338 = vmatpush1.bf16.msra.mxu0 0
    %3339 = vmatprep.subr.bf16.mxu0 0
    %3340 = vmatpush1.bf16.msra.mxu0 0
    %3341 = vmatprep.subr.bf16.mxu0 0
    %3342 = vmatpush1.bf16.msra.mxu0 0
    %3343 = vmatprep.subr.bf16.mxu0 0
    %3344 = vmatpush1.bf16.msra.mxu0 0
    %3345 = vmatprep.subr.bf16.mxu0 0
    %3346 = vmatpush1.bf16.msra.mxu0 0
    %3347 = vmatprep.subr.bf16.mxu0 0
    %3348 = vmatpush1.bf16.msra.mxu0 0
    %3349 = vmatprep.mubr.bf16.mxu0 0
    %3350 = vmatmul.mubr.bf16.gmra.mrb[0].mxu0 %v3100
    %v3351 = vpop.f32.mrb[0].mxu0
    %v3352 = vadd.f32 %v3140, %v3351
    %v3353 = vpop.f32.mrb[0].mxu0
    %v3354 = vadd.f32 %v3144, %v3353
    %v3355 = vpop.f32.mrb[0].mxu0
    %v3356 = vadd.f32 %v3140, %v3355
    %v3357 = vpop.f32.mrb[0].mxu0
    %v3358 = vadd.f32 %v3144, %v3357
    %3359 = vdwg.mxu0
    %3360 = vmatprep.subr.bf16.mxu0 %v3256
    %3361 = vmatpush1.bf16.msra.mxu0 %v3255
    %3362 = vmatprep.subr.bf16.mxu0 %v3260
    %3363 = vmatpush1.bf16.msra.mxu0 %v3259
    %3364 = vmatprep.subr.bf16.mxu0 %v3264
    %3365 = vmatpush1.bf16.msra.mxu0 %v3263
    %3366 = vmatprep.subr.bf16.mxu0 %v3268
    %3367 = vmatpush1.bf16.msra.mxu0 %v3267
    %3368 = vmatprep.subr.bf16.mxu0 %v3272
    %3369 = vmatpush1.bf16.msra.mxu0 %v3271
    %3370 = vmatprep.subr.bf16.mxu0 %v3276
    %3371 = vmatpush1.bf16.msra.mxu0 %v3275
    %3372 = vmatprep.subr.bf16.mxu0 %v3280
    %3373 = vmatpush1.bf16.msra.mxu0 %v3279
    %3374 = vmatprep.subr.bf16.mxu0 %v3284
    %3375 = vmatpush1.bf16.msra.mxu0 %v3283
    %3376 = vmatprep.subr.bf16.mxu0 0
    %3377 = vmatpush1.bf16.msra.mxu0 0
    %3378 = vmatprep.subr.bf16.mxu0 0
    %3379 = vmatpush1.bf16.msra.mxu0 0
    %3380 = vmatprep.subr.bf16.mxu0 0
    %3381 = vmatpush1.bf16.msra.mxu0 0
    %3382 = vmatprep.subr.bf16.mxu0 0
    %3383 = vmatpush1.bf16.msra.mxu0 0
    %3384 = vmatprep.subr.bf16.mxu0 0
    %3385 = vmatpush1.bf16.msra.mxu0 0
    %3386 = vmatprep.subr.bf16.mxu0 0
    %3387 = vmatpush1.bf16.msra.mxu0 0
    %3388 = vmatprep.subr.bf16.mxu0 0
    %3389 = vmatpush1.bf16.msra.mxu0 0
    %3390 = vmatprep.subr.bf16.mxu0 0
    %3391 = vmatpush1.bf16.msra.mxu0 0
    %3392 = vmatprep.mubr.bf16.mxu0 0
    %3393 = vmatmul.mubr.bf16.gmra.mrb[0].mxu0 %v3100
    %v3394 = vpop.f32.mrb[0].mxu0
    %v3395 = vadd.f32 %v3148, %v3394
    %v3396 = vpop.f32.mrb[0].mxu0
    %v3397 = vadd.f32 %v3152, %v3396
    %v3398 = vpop.f32.mrb[0].mxu0
    %v3399 = vadd.f32 %v3148, %v3398
    %v3400 = vpop.f32.mrb[0].mxu0
    %v3401 = vadd.f32 %v3152, %v3400
    %3402 = vdwg.mxu0
    %v3403 = vmax.f32 %v3352, 0.0
    %v3404 = vmax.f32 %v3354, 0.0
    %v3405 = vmax.f32 %v3395, 0.0
    %v3406 = vmax.f32 %v3397, 0.0
    %v3407 = vmax.f32 %v3356, 0.0
    %v3408 = vmax.f32 %v3358, 0.0
    %v3409 = vmax.f32 %v3399, 0.0
    %v3410 = vmax.f32 %v3401, 0.0
    %v3411 = vpack.c.bf16 %v3407, %v3403
    %v3412 = vpack.c.bf16 %v3408, %v3404
    %v3413 = vpack.c.bf16 %v3409, %v3405
    %v3414 = vpack.c.bf16 %v3410, %v3406
    %s3415 = scalar_lea.vmem [#allocation10], 256
    %v3416 = vld [vmem:[%s3415] sm:$0xf]
    %v3417 = vld [vmem:[%s3415 + $0x4] sm:$0xf]
    %v3418 = vld [vmem:[%s3415 + $0x8] sm:$0xf]
    %v3419 = vld [vmem:[%s3415 + $0xc] sm:$0xf]
    %v3420 = vld [vmem:[%s3415 + $0x10] sm:$0xf]
    %v3421 = vld [vmem:[%s3415 + $0x14] sm:$0xf]
    %v3422 = vld [vmem:[%s3415 + $0x18] sm:$0xf]
    %v3423 = vld [vmem:[%s3415 + $0x1c] sm:$0xf]
    %v3424 = vld [vmem:[%s3415 + $0x20] sm:$0xf]
    %v3425 = vld [vmem:[%s3415 + $0x24] sm:$0xf]
    %v3426 = vld [vmem:[%s3415 + $0x28] sm:$0xf]
    %v3427 = vld [vmem:[%s3415 + $0x2c] sm:$0xf]
    %v3428 = vld [vmem:[%s3415 + $0x30] sm:$0xf]
    %v3429 = vld [vmem:[%s3415 + $0x34] sm:$0xf]
    %v3430 = vld [vmem:[%s3415 + $0x38] sm:$0xf]
    %v3431 = vld [vmem:[%s3415 + $0x3c] sm:$0xf]
    %v3432 = vld [vmem:[%s3415 + $0x40] sm:$0xf]
    %v3433 = vld [vmem:[%s3415 + $0x44] sm:$0xf]
    %v3434 = vld [vmem:[%s3415 + $0x48] sm:$0xf]
    %v3435 = vld [vmem:[%s3415 + $0x4c] sm:$0xf]
    %v3436 = vld [vmem:[%s3415 + $0x50] sm:$0xf]
    %v3437 = vld [vmem:[%s3415 + $0x54] sm:$0xf]
    %v3438 = vld [vmem:[%s3415 + $0x58] sm:$0xf]
    %v3439 = vld [vmem:[%s3415 + $0x5c] sm:$0xf]
    %v3440 = vld [vmem:[%s3415 + $0x60] sm:$0xf]
    %v3441 = vld [vmem:[%s3415 + $0x64] sm:$0xf]
    %v3442 = vld [vmem:[%s3415 + $0x68] sm:$0xf]
    %v3443 = vld [vmem:[%s3415 + $0x6c] sm:$0xf]
    %v3444 = vld [vmem:[%s3415 + $0x70] sm:$0xf]
    %v3445 = vld [vmem:[%s3415 + $0x74] sm:$0xf]
    %v3446 = vld [vmem:[%s3415 + $0x78] sm:$0xf]
    %v3447 = vld [vmem:[%s3415 + $0x7c] sm:$0xf]
    %v3448 = vld [vmem:[%s3415 + $0x80] sm:$0xf]
    %v3449 = vld [vmem:[%s3415 + $0x84] sm:$0xf]
    %v3450 = vld [vmem:[%s3415 + $0x88] sm:$0xf]
    %v3451 = vld [vmem:[%s3415 + $0x8c] sm:$0xf]
    %v3452 = vld [vmem:[%s3415 + $0x90] sm:$0xf]
    %v3453 = vld [vmem:[%s3415 + $0x94] sm:$0xf]
    %v3454 = vld [vmem:[%s3415 + $0x98] sm:$0xf]
    %v3455 = vld [vmem:[%s3415 + $0x9c] sm:$0xf]
    %v3456 = vld [vmem:[%s3415 + $0xa0] sm:$0xf]
    %v3457 = vld [vmem:[%s3415 + $0xa4] sm:$0xf]
    %v3458 = vld [vmem:[%s3415 + $0xa8] sm:$0xf]
    %v3459 = vld [vmem:[%s3415 + $0xac] sm:$0xf]
    %v3460 = vld [vmem:[%s3415 + $0xb0] sm:$0xf]
    %v3461 = vld [vmem:[%s3415 + $0xb4] sm:$0xf]
    %v3462 = vld [vmem:[%s3415 + $0xb8] sm:$0xf]
    %v3463 = vld [vmem:[%s3415 + $0xbc] sm:$0xf]
    %v3464 = vld [vmem:[%s3415 + $0xc0] sm:$0xf]
    %v3465 = vld [vmem:[%s3415 + $0xc4] sm:$0xf]
    %v3466 = vld [vmem:[%s3415 + $0xc8] sm:$0xf]
    %v3467 = vld [vmem:[%s3415 + $0xcc] sm:$0xf]
    %v3468 = vld [vmem:[%s3415 + $0xd0] sm:$0xf]
    %v3469 = vld [vmem:[%s3415 + $0xd4] sm:$0xf]
    %v3470 = vld [vmem:[%s3415 + $0xd8] sm:$0xf]
    %v3471 = vld [vmem:[%s3415 + $0xdc] sm:$0xf]
    %v3472 = vld [vmem:[%s3415 + $0xe0] sm:$0xf]
    %v3473 = vld [vmem:[%s3415 + $0xe4] sm:$0xf]
    %v3474 = vld [vmem:[%s3415 + $0xe8] sm:$0xf]
    %v3475 = vld [vmem:[%s3415 + $0xec] sm:$0xf]
    %v3476 = vld [vmem:[%s3415 + $0xf0] sm:$0xf]
    %v3477 = vld [vmem:[%s3415 + $0xf4] sm:$0xf]
    %v3478 = vld [vmem:[%s3415 + $0xf8] sm:$0xf]
    %v3479 = vld [vmem:[%s3415 + $0xfc] sm:$0xf]
    %s3480 = scalar_lea.vmem %s15, 1
    %v3481 = vld [vmem:[%s3480] sm:$0x1]
    %v3483 = vlaneseq
    %v3484 = vshrl.u32 %v3483, 7
    %v3485 = vsub.s32 0, %v3484
    %v3486 = vrot.slane %v3481, %v3485
    %v3552 = vunpack.c.l.b16 %v3416
    %v3553 = vunpack.c.l.b16 %v3417
    %v3554 = vunpack.c.l.b16 %v3418
    %v3555 = vunpack.c.l.b16 %v3419
    %v3556 = vunpack.c.l.b16 %v3420
    %v3557 = vunpack.c.l.b16 %v3421
    %v3558 = vunpack.c.l.b16 %v3422
    %v3559 = vunpack.c.l.b16 %v3423
    %v3560 = vunpack.c.l.b16 %v3424
    %v3561 = vunpack.c.l.b16 %v3425
    %v3562 = vunpack.c.l.b16 %v3426
    %v3563 = vunpack.c.l.b16 %v3427
    %v3564 = vunpack.c.l.b16 %v3428
    %v3565 = vunpack.c.l.b16 %v3429
    %v3566 = vunpack.c.l.b16 %v3430
    %v3567 = vunpack.c.l.b16 %v3431
    %v3568 = vunpack.c.l.b16 %v3432
    %v3569 = vunpack.c.l.b16 %v3433
    %v3570 = vunpack.c.l.b16 %v3434
    %v3571 = vunpack.c.l.b16 %v3435
    %v3572 = vunpack.c.l.b16 %v3436
    %v3573 = vunpack.c.l.b16 %v3437
    %v3574 = vunpack.c.l.b16 %v3438
    %v3575 = vunpack.c.l.b16 %v3439
    %v3576 = vunpack.c.l.b16 %v3440
    %v3577 = vunpack.c.l.b16 %v3441
    %v3578 = vunpack.c.l.b16 %v3442
    %v3579 = vunpack.c.l.b16 %v3443
    %v3580 = vunpack.c.l.b16 %v3444
    %v3581 = vunpack.c.l.b16 %v3445
    %v3582 = vunpack.c.l.b16 %v3446
    %v3583 = vunpack.c.l.b16 %v3447
    %v3584 = vunpack.c.l.b16 %v3448
    %v3585 = vunpack.c.l.b16 %v3449
    %v3586 = vunpack.c.l.b16 %v3450
    %v3587 = vunpack.c.l.b16 %v3451
    %v3588 = vunpack.c.l.b16 %v3452
    %v3589 = vunpack.c.l.b16 %v3453
    %v3590 = vunpack.c.l.b16 %v3454
    %v3591 = vunpack.c.l.b16 %v3455
    %v3592 = vunpack.c.l.b16 %v3456
    %v3593 = vunpack.c.l.b16 %v3457
    %v3594 = vunpack.c.l.b16 %v3458
    %v3595 = vunpack.c.l.b16 %v3459
    %v3596 = vunpack.c.l.b16 %v3460
    %v3597 = vunpack.c.l.b16 %v3461
    %v3598 = vunpack.c.l.b16 %v3462
    %v3599 = vunpack.c.l.b16 %v3463
    %v3600 = vunpack.c.l.b16 %v3464
    %v3601 = vunpack.c.l.b16 %v3465
    %v3602 = vunpack.c.l.b16 %v3466
    %v3603 = vunpack.c.l.b16 %v3467
    %v3604 = vunpack.c.l.b16 %v3468
    %v3605 = vunpack.c.l.b16 %v3469
    %v3606 = vunpack.c.l.b16 %v3470
    %v3607 = vunpack.c.l.b16 %v3471
    %v3608 = vunpack.c.l.b16 %v3472
    %v3609 = vunpack.c.l.b16 %v3473
    %v3610 = vunpack.c.l.b16 %v3474
    %v3611 = vunpack.c.l.b16 %v3475
    %v3612 = vunpack.c.l.b16 %v3476
    %v3613 = vunpack.c.l.b16 %v3477
    %v3614 = vunpack.c.l.b16 %v3478
    %v3615 = vunpack.c.l.b16 %v3479
    %v3616 = vpack.c.b16 %v3553, %v3552
    %v3617 = vpack.c.b16 %v3555, %v3554
    %v3618 = vpack.c.b16 %v3557, %v3556
    %v3619 = vpack.c.b16 %v3559, %v3558
    %v3620 = vpack.c.b16 %v3561, %v3560
    %v3621 = vpack.c.b16 %v3563, %v3562
    %v3622 = vpack.c.b16 %v3565, %v3564
    %v3623 = vpack.c.b16 %v3567, %v3566
    %v3624 = vpack.c.b16 %v3569, %v3568
    %v3625 = vpack.c.b16 %v3571, %v3570
    %v3626 = vpack.c.b16 %v3573, %v3572
    %v3627 = vpack.c.b16 %v3575, %v3574
    %v3628 = vpack.c.b16 %v3577, %v3576
    %v3629 = vpack.c.b16 %v3579, %v3578
    %v3630 = vpack.c.b16 %v3581, %v3580
    %v3631 = vpack.c.b16 %v3583, %v3582
    %v3632 = vpack.c.b16 %v3585, %v3584
    %v3633 = vpack.c.b16 %v3587, %v3586
    %v3634 = vpack.c.b16 %v3589, %v3588
    %v3635 = vpack.c.b16 %v3591, %v3590
    %v3636 = vpack.c.b16 %v3593, %v3592
    %v3637 = vpack.c.b16 %v3595, %v3594
    %v3638 = vpack.c.b16 %v3597, %v3596
    %v3639 = vpack.c.b16 %v3599, %v3598
    %v3640 = vpack.c.b16 %v3601, %v3600
    %v3641 = vpack.c.b16 %v3603, %v3602
    %v3642 = vpack.c.b16 %v3605, %v3604
    %v3643 = vpack.c.b16 %v3607, %v3606
    %v3644 = vpack.c.b16 %v3609, %v3608
    %v3645 = vpack.c.b16 %v3611, %v3610
    %v3646 = vpack.c.b16 %v3613, %v3612
    %v3647 = vpack.c.b16 %v3615, %v3614
    %3680 = vmatprep.subr.bf16.mxu0 0
    %3681 = vmatpush1.bf16.msra.mxu0 %v3616
    %3682 = vmatprep.subr.bf16.mxu0 0
    %3683 = vmatpush1.bf16.msra.mxu0 %v3617
    %3684 = vmatprep.subr.bf16.mxu0 0
    %3685 = vmatpush1.bf16.msra.mxu0 %v3618
    %3686 = vmatprep.subr.bf16.mxu0 0
    %3687 = vmatpush1.bf16.msra.mxu0 %v3619
    %3688 = vmatprep.subr.bf16.mxu0 0
    %3689 = vmatpush1.bf16.msra.mxu0 %v3620
    %3690 = vmatprep.subr.bf16.mxu0 0
    %3691 = vmatpush1.bf16.msra.mxu0 %v3621
    %3692 = vmatprep.subr.bf16.mxu0 0
    %3693 = vmatpush1.bf16.msra.mxu0 %v3622
    %3694 = vmatprep.subr.bf16.mxu0 0
    %3695 = vmatpush1.bf16.msra.mxu0 %v3623
    %3696 = vmatprep.subr.bf16.mxu0 0
    %3697 = vmatpush1.bf16.msra.mxu0 %v3624
    %3698 = vmatprep.subr.bf16.mxu0 0
    %3699 = vmatpush1.bf16.msra.mxu0 %v3625
    %3700 = vmatprep.subr.bf16.mxu0 0
    %3701 = vmatpush1.bf16.msra.mxu0 %v3626
    %3702 = vmatprep.subr.bf16.mxu0 0
    %3703 = vmatpush1.bf16.msra.mxu0 %v3627
    %3704 = vmatprep.subr.bf16.mxu0 0
    %3705 = vmatpush1.bf16.msra.mxu0 %v3628
    %3706 = vmatprep.subr.bf16.mxu0 0
    %3707 = vmatpush1.bf16.msra.mxu0 %v3629
    %3708 = vmatprep.subr.bf16.mxu0 0
    %3709 = vmatpush1.bf16.msra.mxu0 %v3630
    %3710 = vmatprep.subr.bf16.mxu0 0
    %3711 = vmatpush1.bf16.msra.mxu0 %v3631
    %3712 = vmatprep.mubr.bf16.mxu0 %v3412
    %3713 = vmatmul.mubr.bf16.gmra.mrb[0].mxu0 %v3411
    %v3714 = vpop.f32.mrb[0].mxu0
    %v3715 = vadd.f32 %v3486, %v3714
    %v3716 = vpop.f32.mrb[0].mxu0
    %v3717 = vpop.f32.mrb[0].mxu0
    %v3718 = vadd.f32 %v3486, %v3717
    %v3719 = vpop.f32.mrb[0].mxu0
    %3720 = vdwg.mxu0
    %3721 = vmatprep.subr.bf16.mxu0 0
    %3722 = vmatpush1.bf16.msra.mxu0 %v3632
    %3723 = vmatprep.subr.bf16.mxu0 0
    %3724 = vmatpush1.bf16.msra.mxu0 %v3633
    %3725 = vmatprep.subr.bf16.mxu0 0
    %3726 = vmatpush1.bf16.msra.mxu0 %v3634
    %3727 = vmatprep.subr.bf16.mxu0 0
    %3728 = vmatpush1.bf16.msra.mxu0 %v3635
    %3729 = vmatprep.subr.bf16.mxu0 0
    %3730 = vmatpush1.bf16.msra.mxu0 %v3636
    %3731 = vmatprep.subr.bf16.mxu0 0
    %3732 = vmatpush1.bf16.msra.mxu0 %v3637
    %3733 = vmatprep.subr.bf16.mxu0 0
    %3734 = vmatpush1.bf16.msra.mxu0 %v3638
    %3735 = vmatprep.subr.bf16.mxu0 0
    %3736 = vmatpush1.bf16.msra.mxu0 %v3639
    %3737 = vmatprep.subr.bf16.mxu0 0
    %3738 = vmatpush1.bf16.msra.mxu0 %v3640
    %3739 = vmatprep.subr.bf16.mxu0 0
    %3740 = vmatpush1.bf16.msra.mxu0 %v3641
    %3741 = vmatprep.subr.bf16.mxu0 0
    %3742 = vmatpush1.bf16.msra.mxu0 %v3642
    %3743 = vmatprep.subr.bf16.mxu0 0
    %3744 = vmatpush1.bf16.msra.mxu0 %v3643
    %3745 = vmatprep.subr.bf16.mxu0 0
    %3746 = vmatpush1.bf16.msra.mxu0 %v3644
    %3747 = vmatprep.subr.bf16.mxu0 0
    %3748 = vmatpush1.bf16.msra.mxu0 %v3645
    %3749 = vmatprep.subr.bf16.mxu0 0
    %3750 = vmatpush1.bf16.msra.mxu0 %v3646
    %3751 = vmatprep.subr.bf16.mxu0 0
    %3752 = vmatpush1.bf16.msra.mxu0 %v3647
    %3753 = vmatprep.mubr.bf16.mxu0 %v3414
    %3754 = vmatmul.mubr.bf16.gmra.mrb[0].mxu0 %v3413
    %v3755 = vpop.f32.mrb[0].mxu0
    %v3756 = vadd.f32 %v3715, %v3755
    %v3757 = vpop.f32.mrb[0].mxu0
    %v3758 = vpop.f32.mrb[0].mxu0
    %v3759 = vadd.f32 %v3718, %v3758
    %v3760 = vpop.f32.mrb[0].mxu0
    %3761 = vdwg.mxu0
    %v3762 = vadd.f32 %v3756, %v3098
    %v3763 = vadd.f32 %v3759, %v3099
    %3764 = vadd.xlane.f32.xlu0 %v3762
    %v3765 = vpop.xlane.xlu0 %3764
    %3766 = vadd.xlane.f32.xlu0 %v3763
    %v3767 = vpop.xlane.xlu0 %3766
    %v3768 = vmul.f32 %v3765, %v1310
    %v3769 = vmul.f32 %v3767, %v1310
    %v3770 = vsub.f32 %v3762, %v3768
    %v3771 = vsub.f32 %v3763, %v3769
    %v3772 = vmul.f32 %v3770, %v3770
    %v3773 = vmul.f32 %v3771, %v3771
    %3774 = vadd.xlane.f32.xlu0 %v3772
    %v3775 = vpop.xlane.xlu0 %3774
    %3776 = vadd.xlane.f32.xlu0 %v3773
    %v3777 = vpop.xlane.xlu0 %3776
    %v3778 = vmul.f32 %v3775, %v1310
    %v3779 = vmul.f32 %v3777, %v1310
    %v3780 = vadd.f32 %v3778, 1e-05
    %v3781 = vadd.f32 %v3779, 1e-05
    %v3782 = vrsqrt.pop %v3780
    %v3783 = vrsqrt.pop %v3781
    %v3784 = vmul.f32 %v3770, %v3782
    %v3785 = vmul.f32 %v3771, %v3783
    %s3786 = scalar_lea.vmem %s16, 1
    %v3787 = vld [vmem:[%s3786] sm:$0x1]
    %v3789 = vlaneseq
    %v3790 = vshrl.u32 %v3789, 7
    %v3791 = vsub.s32 0, %v3790
    %v3792 = vrot.slane %v3787, %v3791
    %v3794 = vmul.f32 %v3784, %v3792
    %v3795 = vmul.f32 %v3785, %v3792
    %s3796 = scalar_lea.vmem %s17, 1
    %v3797 = vld [vmem:[%s3796] sm:$0x1]
    %v3799 = vlaneseq
    %v3800 = vshrl.u32 %v3799, 7
    %v3801 = vsub.s32 0, %v3800
    %v3802 = vrot.slane %v3797, %v3801
    %v3804 = vadd.f32 %v3794, %v3802
    %v3805 = vadd.f32 %v3795, %v3802
    %3806 = vst [vmem:[#allocation11] sm:$0xff] %v3804
    %3807 = vst [vmem:[#allocation11 + $0x8] sm:$0xff] %v3805
    // Predicated region
    $region94: #{tpu_custom_call.1} parent=1 // pred_check
      _
    $region95: #{tpu_custom_call.1} parent=1 // pred_check_branch
      %3809 = sbr.rel (0) target = $region97
    $region96: #{tpu_custom_call.1} parent=1 // pred_region
      %s3811 = ssub.s32 256, 256
      %3812 = vsyncadd [#allocation4], %s3811
      %s3813 = sshll.u32 [#allocation11], 4
      %s3814 = int_to_ptr.vmem [resolvable:$true] %s3813
      %3819 = dma.vmem_to_hbm [thread:$0]  %s3814, 256, %s18, [#allocation4], 128, 128, 8
    $region97: #{tpu_custom_call.1} parent=1 // pred_fallthru
      _
    // Predicated region
    $region98: #{tpu_custom_call.1} parent=1 // pred_check
      _
    $region99: #{tpu_custom_call.1} parent=1 // pred_check_branch
      %3821 = sbr.rel (0) target = $region101
    $region100: #{tpu_custom_call.1} parent=1 // pred_region
      %3822 = dma.done [#allocation4], 256
    $region101: #{tpu_custom_call.1} parent=1 // pred_fallthru
      _
    %3823 = vsyncpa [#allocation3], 1
    %3824 = vsyncpa [#allocation6], 1
    %3825 = vsyncpa [#allocation9], 1
    %3826 = vsyncpa [#allocation4], 1

</llo_original>
